<compile_context>
chip_gen: v6e
topology: v6e:2x2x1
jax: 0.10.0
libtpu: 0.0.40
codegen_flags: <defaults>
</compile_context>

<pallas_src>
import math

import jax
import jax.numpy as jnp
from jax.experimental import pallas as pl
from jax.experimental.pallas import tpu as pltpu

LANE = 128


# ----------------------------- fused kernel ---------------------------------

def _fused_hyena_glt_kernel(
    x_ref,
    in_w_ref, in_b_ref,
    hy_ln_g_ref, hy_ln_b_ref,
    hy_in_w_ref, hy_in_b_ref,
    hy_cw_ref, hy_cb_ref,
    hy_out_w_ref, hy_out_b_ref,
    mlp_ln_g_ref, mlp_ln_b_ref,
    fc1_w_ref, fc1_b_ref,
    fc2_w_ref, fc2_b_ref,
    head_w_ref, head_b_ref,
    o_ref,
):
    Bb, L, Dp_in = x_ref.shape
    D = hy_in_w_ref.shape[0]          # d_model
    K = hy_cw_ref.shape[0]            # conv taps
    Dp_out = head_w_ref.shape[1]      # lane-padded head width (128)
    R = Bb * L                        # folded batch*seq rows -> MXU M dim

    def ln(x, g_ref, b_ref):
        # LayerNorm entirely in f32 (VPU/EUP; v5e has no bf16 VPU).
        mean = jnp.mean(x, axis=-1, keepdims=True)
        xc = x - mean
        var = jnp.mean(xc * xc, axis=-1, keepdims=True)
        return xc * jax.lax.rsqrt(var + 1e-5) * g_ref[...] + b_ref[...]

    def mm(x_f32, w_ref, b_ref):
        # bf16 x bf16 MXU matmul, f32 accumulation, bias add in f32.
        return jnp.dot(x_f32.astype(jnp.bfloat16), w_ref[...],
                       preferred_element_type=jnp.float32) + b_ref[...]

    # Fold (Bblk, L) into a single lane-dense (R, 128) activation slab.
    x = x_ref[...].reshape(R, Dp_in).astype(jnp.float32)

    # -- child 0: input_proj (Linear); d_in zero-padded to 128 lanes -> exact --
    h = mm(x, in_w_ref, in_b_ref)                                     # (R, D)

    # -- child 1: hyena_block: preLN -> in_proj -> gated depthwise causal conv
    #    mixer -> out_proj, residual --
    hn = ln(h, hy_ln_g_ref, hy_ln_b_ref)
    proj = mm(hn, hy_in_w_ref, hy_in_b_ref)                           # (R, 3D)
    # lane-aligned (128-multiple) in-VMEM slices: free, never hit HBM.
    a = proj[:, :D]
    g = proj[:, D:2 * D]
    v = proj[:, 2 * D:3 * D]

    # Depthwise causal conv along the sequence axis via XLU rolls:
    #   conv[t] = sum_j cw[K-1-j] * v[t-j]   (v[t-j] := 0 for t_within_seq < j)
    # Batch rows are folded, so the wrap mask uses position-within-sequence
    # ((row % L) >= j): it kills both the roll wrap-around AND any leakage
    # from the previous sequence inside the merged block.
    cw = hy_cw_ref[...]                                               # (K, D)
    rows = jax.lax.broadcasted_iota(jnp.int32, (R, 1), 0)             # (R, 1)
    pos = rows % L                                                    # pos in seq
    tap_masks = [pos >= j for j in range(1, K)]                       # hoisted
    conv = v * cw[K - 1:K, :]                                         # j = 0 tap
    for j in range(1, K):                                             # K small, static unroll
        vj = pltpu.roll(v, shift=j, axis=0)                           # vj[t] = v[t-j] (wrapped)
        vj = jnp.where(tap_masks[j - 1], vj, 0.0)
        conv = conv + vj * cw[K - 1 - j:K - j, :]
    conv = conv + hy_cb_ref[...]

    mixed = a * jax.nn.sigmoid(g) * conv
    h = mm(mixed, hy_out_w_ref, hy_out_b_ref) + h                     # residual

    # -- child 2: mlp_block: preLN -> Linear + tanh-GELU -> Linear, residual --
    hn = ln(h, mlp_ln_g_ref, mlp_ln_b_ref)
    y = mm(hn, fc1_w_ref, fc1_b_ref)                                  # (R, Dff)
    c = math.sqrt(2.0 / math.pi)
    y = 0.5 * y * (1.0 + jnp.tanh(c * (y + 0.044715 * y * y * y)))    # tanh-GELU (f32)
    h = mm(y, fc2_w_ref, fc2_b_ref) + h                               # residual

    # -- child 3: output_head (Linear), 128-lane padded -> unmasked vst --
    out = mm(h, head_w_ref, head_b_ref)                               # (R, 128)
    o_ref[...] = out.reshape(Bb, L, Dp_out).astype(o_ref.dtype)


# ----------------------------- pallas_call glue ------------------------------

def model_parallel_hyena_glt_forward(x, p, *, block_b=None):
    """Equivalent of ModelParallelHyenaGLT.forward: sequential child layers,
    fully fused into one Pallas kernel (batch*seq rows folded into the MXU M
    dim, grid over batch blocks, parallel across v7x TensorCores)."""
    B, L, Din = x.shape

    # Lane-pad the model's own in/out feature dim (zeros -> exact math).
    Dp = pl.cdiv(Din, LANE) * LANE
    in_w = p["input_proj_w"]
    head_w, head_b = p["head_w"], p["head_b"]
    if Dp != Din:
        x = jnp.pad(x, ((0, 0), (0, 0), (0, Dp - Din)))
        in_w = jnp.pad(in_w, ((0, Dp - Din), (0, 0)))
        head_w = jnp.pad(head_w, ((0, 0), (0, Dp - Din)))
        head_b = jnp.pad(head_b, ((0, 0), (0, Dp - Din)))

    # Fold batch rows into the MXU M dim: target 256 rows per block.
    if block_b is None:
        block_b = max(1, 256 // L)
    block_b = min(block_b, B)
    Bp = pl.cdiv(B, block_b) * block_b
    if Bp != B:
        x = jnp.pad(x, ((0, Bp - B), (0, 0), (0, 0)))

    weight_args = [
        in_w, p["input_proj_b"],
        p["hy_ln_g"], p["hy_ln_b"],
        p["hy_in_w"], p["hy_in_b"],
        p["hy_conv_w"], p["hy_conv_b"],
        p["hy_out_w"], p["hy_out_b"],
        p["mlp_ln_g"], p["mlp_ln_b"],
        p["mlp_fc1_w"], p["mlp_fc1_b"],
        p["mlp_fc2_w"], p["mlp_fc2_b"],
        head_w, head_b,
    ]

    def const_spec(a):
        # Full-array block, constant index_map: weight stays resident in VMEM
        # instead of being re-fetched per grid step.
        nd = a.ndim
        return pl.BlockSpec(a.shape, lambda b, _nd=nd: (0,) * _nd)

    in_specs = [pl.BlockSpec((block_b, L, Dp), lambda b: (b, 0, 0))]
    in_specs += [const_spec(a) for a in weight_args]

    out = pl.pallas_call(
        _fused_hyena_glt_kernel,
        out_shape=jax.ShapeDtypeStruct((Bp, L, Dp), jnp.float32),
        grid=(Bp // block_b,),
        in_specs=in_specs,
        out_specs=pl.BlockSpec((block_b, L, Dp), lambda b: (b, 0, 0)),
        compiler_params=pltpu.CompilerParams(
            dimension_semantics=("parallel",),
            vmem_limit_bytes=32 * 1024 * 1024),
    )(x, *weight_args)

    # Strip the batch / lane padding added above.
    return out[:B, :, :Din]


# ----------------------------- parameters ------------------------------------

def init_params(key, d_in=16, d_model=128, d_ff=256, k=3):
    """Weights for the synthetic HyenaGLT base model.

    Matmul weights are bf16 (native MXU input); biases / LayerNorm / conv
    parameters stay f32.  Feature dims are multiples of 128 so intermediates
    are lane-dense.  Conv weights use a larger scale so the causal-conv path
    is numerically visible in the reference check.
    """
    ks = jax.random.split(key, 8)
    s = 0.02

    def n(kk, shape, scale=s, dtype=jnp.bfloat16):
        return (jax.random.normal(kk, shape, jnp.float32) * scale).astype(dtype)

    return {
        # child 0: input_proj
        "input_proj_w": n(ks[0], (d_in, d_model)),
        "input_proj_b": jnp.zeros((1, d_model), jnp.float32),
        # child 1: hyena_block
        "hy_ln_g": jnp.ones((1, d_model), jnp.float32),
        "hy_ln_b": jnp.zeros((1, d_model), jnp.float32),
        "hy_in_w": n(ks[1], (d_model, 3 * d_model)),
        "hy_in_b": jnp.zeros((1, 3 * d_model), jnp.float32),
        "hy_conv_w": n(ks[2], (k, d_model), scale=0.5, dtype=jnp.float32),
        "hy_conv_b": jnp.zeros((1, d_model), jnp.float32),
        "hy_out_w": n(ks[3], (d_model, d_model)),
        "hy_out_b": jnp.zeros((1, d_model), jnp.float32),
        # child 2: mlp_block
        "mlp_ln_g": jnp.ones((1, d_model), jnp.float32),
        "mlp_ln_b": jnp.zeros((1, d_model), jnp.float32),
        "mlp_fc1_w": n(ks[4], (d_model, d_ff)),
        "mlp_fc1_b": jnp.zeros((1, d_ff), jnp.float32),
        "mlp_fc2_w": n(ks[5], (d_ff, d_model)),
        "mlp_fc2_b": jnp.zeros((1, d_model), jnp.float32),
        # child 3: output_head
        "head_w": n(ks[6], (d_model, d_in)),
        "head_b": jnp.zeros((1, d_in), jnp.float32),
    }


# ----------------------------- pure-JAX reference ----------------------------

def reference_forward(x, p):
    """Plain-XLA reference with the same bf16 matmul / f32 elementwise recipe.
    Used to validate the fused kernel (incl. the causal-conv roll direction)."""
    D = p["hy_in_w"].shape[0]
    K = p["hy_conv_w"].shape[0]
    L = x.shape[1]

    def mm(h, w, b):
        return jnp.dot(h.astype(jnp.bfloat16), w,
                       preferred_element_type=jnp.float32) + b

    def ln(h, g, b):
        m = jnp.mean(h, axis=-1, keepdims=True)
        c = h - m
        v = jnp.mean(c * c, axis=-1, keepdims=True)
        return c * jax.lax.rsqrt(v + 1e-5) * g + b

    h = mm(x.astype(jnp.float32), p["input_proj_w"], p["input_proj_b"])

    hn = ln(h, p["hy_ln_g"], p["hy_ln_b"])
    proj = mm(hn, p["hy_in_w"], p["hy_in_b"])
    a, g, v = proj[..., :D], proj[..., D:2 * D], proj[..., 2 * D:3 * D]
    cw = p["hy_conv_w"]
    conv = jnp.zeros_like(v)
    for j in range(K):
        vj = jnp.pad(v, ((0, 0), (j, 0), (0, 0)))[:, :L, :]   # v[:, t-j, :], 0 for t<j
        conv = conv + vj * cw[K - 1 - j]
    conv = conv + p["hy_conv_b"]
    mixed = a * jax.nn.sigmoid(g) * conv
    h = mm(mixed, p["hy_out_w"], p["hy_out_b"]) + h

    hn = ln(h, p["mlp_ln_g"], p["mlp_ln_b"])
    y = mm(hn, p["mlp_fc1_w"], p["mlp_fc1_b"])
    c = math.sqrt(2.0 / math.pi)
    y = 0.5 * y * (1.0 + jnp.tanh(c * (y + 0.044715 * y * y * y)))
    h = mm(y, p["mlp_fc2_w"], p["mlp_fc2_b"]) + h

    return mm(h, p["head_w"], p["head_b"])


# ----------------------------- main -------------------------------------------

if __name__ == "__main__":
    key = jax.random.PRNGKey(0)
    kx, kp = jax.random.split(key)

    # B*L per block = 256 rows (fills a 256-wide MXU pass); grid = 2 blocks so
    # both v7x TensorCores get work.
    B, L, D_IN = 32, 16, 16
    x = jax.random.normal(kx, (B, L, D_IN), jnp.float32)
    params = init_params(kp, d_in=D_IN, d_model=128, d_ff=256, k=3)

    fwd = jax.jit(model_parallel_hyena_glt_forward)
    out = jax.block_until_ready(fwd(x, params))

    assert out.shape == (B, L, D_IN), out.shape
    assert bool(jnp.all(jnp.isfinite(out)))

    # Correctness check against a plain-XLA reference (same bf16 matmul
    # quantization points, so agreement should be ~f32-tight).
    ref = jax.block_until_ready(jax.jit(reference_forward)(x, params))
    max_err = float(jnp.max(jnp.abs(out - ref)))
    assert max_err < 1e-3, f"kernel/reference mismatch: max abs err {max_err}"

    print("KERNEL_OK")
</pallas_src>

<mosaic_0001>
module attributes {stable_mosaic.version = 11 : i64} {
  func.func @_fused_hyena_glt_kernel(%arg0: i32, %arg1: memref<16x16x128xf32, #tpu.memory_space<vmem>>, %arg2: memref<128x128xbf16, #tpu.memory_space<vmem>>, %arg3: memref<1x128xf32, #tpu.memory_space<vmem>>, %arg4: memref<1x128xf32, #tpu.memory_space<vmem>>, %arg5: memref<1x128xf32, #tpu.memory_space<vmem>>, %arg6: memref<128x384xbf16, #tpu.memory_space<vmem>>, %arg7: memref<1x384xf32, #tpu.memory_space<vmem>>, %arg8: memref<3x128xf32, #tpu.memory_space<vmem>>, %arg9: memref<1x128xf32, #tpu.memory_space<vmem>>, %arg10: memref<128x128xbf16, #tpu.memory_space<vmem>>, %arg11: memref<1x128xf32, #tpu.memory_space<vmem>>, %arg12: memref<1x128xf32, #tpu.memory_space<vmem>>, %arg13: memref<1x128xf32, #tpu.memory_space<vmem>>, %arg14: memref<128x256xbf16, #tpu.memory_space<vmem>>, %arg15: memref<1x256xf32, #tpu.memory_space<vmem>>, %arg16: memref<256x128xbf16, #tpu.memory_space<vmem>>, %arg17: memref<1x128xf32, #tpu.memory_space<vmem>>, %arg18: memref<128x128xbf16, #tpu.memory_space<vmem>>, %arg19: memref<1x128xf32, #tpu.memory_space<vmem>>, %arg20: memref<16x16x128xf32, #tpu.memory_space<vmem>>) attributes {dimension_semantics = [#tpu.dimension_semantics<parallel>], iteration_bounds = array<i64: 2>, scalar_prefetch = 0 : i64, scratch_operands = 0 : i64, tpu.core_type = #tpu.core_type<tc>, window_params = [{transform_indices = @transform_0, window_bounds = array<i64: 16, 16, 128>}, {pipeline_mode = #tpu.pipeline_mode<synchronous>, transform_indices = @transform_1, window_bounds = array<i64: 128, 128>}, {pipeline_mode = #tpu.pipeline_mode<synchronous>, transform_indices = @transform_2, window_bounds = array<i64: 1, 128>}, {pipeline_mode = #tpu.pipeline_mode<synchronous>, transform_indices = @transform_3, window_bounds = array<i64: 1, 128>}, {pipeline_mode = #tpu.pipeline_mode<synchronous>, transform_indices = @transform_4, window_bounds = array<i64: 1, 128>}, {pipeline_mode = #tpu.pipeline_mode<synchronous>, transform_indices = @transform_5, window_bounds = array<i64: 128, 384>}, {pipeline_mode = #tpu.pipeline_mode<synchronous>, transform_indices = @transform_6, window_bounds = array<i64: 1, 384>}, {pipeline_mode = #tpu.pipeline_mode<synchronous>, transform_indices = @transform_7, window_bounds = array<i64: 3, 128>}, {pipeline_mode = #tpu.pipeline_mode<synchronous>, transform_indices = @transform_8, window_bounds = array<i64: 1, 128>}, {pipeline_mode = #tpu.pipeline_mode<synchronous>, transform_indices = @transform_9, window_bounds = array<i64: 128, 128>}, {pipeline_mode = #tpu.pipeline_mode<synchronous>, transform_indices = @transform_10, window_bounds = array<i64: 1, 128>}, {pipeline_mode = #tpu.pipeline_mode<synchronous>, transform_indices = @transform_11, window_bounds = array<i64: 1, 128>}, {pipeline_mode = #tpu.pipeline_mode<synchronous>, transform_indices = @transform_12, window_bounds = array<i64: 1, 128>}, {pipeline_mode = #tpu.pipeline_mode<synchronous>, transform_indices = @transform_13, window_bounds = array<i64: 128, 256>}, {pipeline_mode = #tpu.pipeline_mode<synchronous>, transform_indices = @transform_14, window_bounds = array<i64: 1, 256>}, {pipeline_mode = #tpu.pipeline_mode<synchronous>, transform_indices = @transform_15, window_bounds = array<i64: 256, 128>}, {pipeline_mode = #tpu.pipeline_mode<synchronous>, transform_indices = @transform_16, window_bounds = array<i64: 1, 128>}, {pipeline_mode = #tpu.pipeline_mode<synchronous>, transform_indices = @transform_17, window_bounds = array<i64: 128, 128>}, {pipeline_mode = #tpu.pipeline_mode<synchronous>, transform_indices = @transform_18, window_bounds = array<i64: 1, 128>}, {transform_indices = @transform_19, window_bounds = array<i64: 16, 16, 128>}]} {
    %c0 = arith.constant 0 : index
    %c0_0 = arith.constant 0 : index
    %c0_1 = arith.constant 0 : index
    %0 = vector.load %arg1[%c0, %c0_0, %c0_1] : memref<16x16x128xf32, #tpu.memory_space<vmem>>, vector<16x16x128xf32>
    %1 = vector.shape_cast %0 : vector<16x16x128xf32> to vector<256x128xf32>
    %2 = arith.truncf %1 : vector<256x128xf32> to vector<256x128xbf16>
    %c0_2 = arith.constant 0 : index
    %c0_3 = arith.constant 0 : index
    %3 = vector.load %arg2[%c0_2, %c0_3] : memref<128x128xbf16, #tpu.memory_space<vmem>>, vector<128x128xbf16>
    %cst = arith.constant dense<0.000000e+00> : vector<256x128xf32>
    %4 = tpu.matmul %2, %3, %cst {dimension_numbers = #tpu.dot_dimension_numbers<[1], [0], [0], [1], [0, 0, 1, 1], [], []>} : vector<256x128xbf16>, vector<128x128xbf16>, vector<256x128xf32> -> vector<256x128xf32>
    %c0_4 = arith.constant 0 : index
    %c0_5 = arith.constant 0 : index
    %5 = vector.load %arg3[%c0_4, %c0_5] : memref<1x128xf32, #tpu.memory_space<vmem>>, vector<1x128xf32>
    %6 = vector.broadcast %5 : vector<1x128xf32> to vector<256x128xf32>
    %7 = arith.addf %4, %6 : vector<256x128xf32>
    %cst_6 = arith.constant dense<0.000000e+00> : vector<256xf32>
    %8 = vector.multi_reduction <add>, %7, %cst_6 [1] : vector<256x128xf32> to vector<256xf32>
    %9 = vector.shape_cast %8 : vector<256xf32> to vector<256x1xf32>
    %cst_7 = arith.constant 1.280000e+02 : f32
    %10 = vector.broadcast %cst_7 : f32 to vector<256x1xf32>
    %11 = arith.divf %9, %10 : vector<256x1xf32>
    %12 = vector.broadcast %11 : vector<256x1xf32> to vector<256x128xf32>
    %13 = arith.subf %7, %12 : vector<256x128xf32>
    %14 = arith.mulf %13, %13 : vector<256x128xf32>
    %cst_8 = arith.constant dense<0.000000e+00> : vector<256xf32>
    %15 = vector.multi_reduction <add>, %14, %cst_8 [1] : vector<256x128xf32> to vector<256xf32>
    %16 = vector.shape_cast %15 : vector<256xf32> to vector<256x1xf32>
    %cst_9 = arith.constant 1.280000e+02 : f32
    %17 = vector.broadcast %cst_9 : f32 to vector<256x1xf32>
    %18 = arith.divf %16, %17 : vector<256x1xf32>
    %cst_10 = arith.constant 9.99999974E-6 : f32
    %19 = vector.broadcast %cst_10 : f32 to vector<256x1xf32>
    %20 = arith.addf %18, %19 : vector<256x1xf32>
    %21 = math.rsqrt %20 : vector<256x1xf32>
    %22 = vector.broadcast %21 : vector<256x1xf32> to vector<256x128xf32>
    %23 = arith.mulf %13, %22 : vector<256x128xf32>
    %c0_11 = arith.constant 0 : index
    %c0_12 = arith.constant 0 : index
    %24 = vector.load %arg4[%c0_11, %c0_12] : memref<1x128xf32, #tpu.memory_space<vmem>>, vector<1x128xf32>
    %25 = vector.broadcast %24 : vector<1x128xf32> to vector<256x128xf32>
    %26 = arith.mulf %23, %25 : vector<256x128xf32>
    %c0_13 = arith.constant 0 : index
    %c0_14 = arith.constant 0 : index
    %27 = vector.load %arg5[%c0_13, %c0_14] : memref<1x128xf32, #tpu.memory_space<vmem>>, vector<1x128xf32>
    %28 = vector.broadcast %27 : vector<1x128xf32> to vector<256x128xf32>
    %29 = arith.addf %26, %28 : vector<256x128xf32>
    %30 = arith.truncf %29 : vector<256x128xf32> to vector<256x128xbf16>
    %c0_15 = arith.constant 0 : index
    %c0_16 = arith.constant 0 : index
    %31 = vector.load %arg6[%c0_15, %c0_16] : memref<128x384xbf16, #tpu.memory_space<vmem>>, vector<128x384xbf16>
    %cst_17 = arith.constant dense<0.000000e+00> : vector<256x384xf32>
    %32 = tpu.matmul %30, %31, %cst_17 {dimension_numbers = #tpu.dot_dimension_numbers<[1], [0], [0], [1], [0, 0, 1, 1], [], []>} : vector<256x128xbf16>, vector<128x384xbf16>, vector<256x384xf32> -> vector<256x384xf32>
    %c0_18 = arith.constant 0 : index
    %c0_19 = arith.constant 0 : index
    %33 = vector.load %arg7[%c0_18, %c0_19] : memref<1x384xf32, #tpu.memory_space<vmem>>, vector<1x384xf32>
    %34 = vector.broadcast %33 : vector<1x384xf32> to vector<256x384xf32>
    %35 = arith.addf %32, %34 : vector<256x384xf32>
    %36 = vector.extract_strided_slice %35 {offsets = [0, 0], sizes = [256, 128], strides = [1, 1]} : vector<256x384xf32> to vector<256x128xf32>
    %37 = vector.extract_strided_slice %35 {offsets = [0, 128], sizes = [256, 128], strides = [1, 1]} : vector<256x384xf32> to vector<256x128xf32>
    %38 = vector.extract_strided_slice %35 {offsets = [0, 256], sizes = [256, 128], strides = [1, 1]} : vector<256x384xf32> to vector<256x128xf32>
    %c0_20 = arith.constant 0 : index
    %c0_21 = arith.constant 0 : index
    %39 = vector.load %arg8[%c0_20, %c0_21] : memref<3x128xf32, #tpu.memory_space<vmem>>, vector<3x128xf32>
    %40 = tpu.iota {dimensions = array<i32: 0>} : vector<256x1xi32>
    %c16_i32 = arith.constant 16 : i32
    %c0_i32 = arith.constant 0 : i32
    %41 = arith.cmpi eq, %c16_i32, %c0_i32 : i32
    %c1_i32 = arith.constant 1 : i32
    %42 = arith.select %41, %c1_i32, %c16_i32 : i32
    %43 = vector.broadcast %42 : i32 to vector<256x1xi32>
    %44 = arith.remsi %40, %43 : vector<256x1xi32>
    %c0_i32_22 = arith.constant 0 : i32
    %45 = vector.broadcast %c0_i32_22 : i32 to vector<256x1xi32>
    %46 = arith.cmpi ne, %44, %45 : vector<256x1xi32>
    %c0_i32_23 = arith.constant 0 : i32
    %47 = vector.broadcast %c0_i32_23 : i32 to vector<256x1xi32>
    %48 = arith.cmpi slt, %44, %47 : vector<256x1xi32>
    %c0_i32_24 = arith.constant 0 : i32
    %49 = arith.cmpi slt, %42, %c0_i32_24 : i32
    %50 = vector.broadcast %49 : i1 to vector<256x1xi1>
    %51 = vector.broadcast %50 : vector<256x1xi1> to vector<256x1xi1>
    %52 = arith.xori %48, %51 : vector<256x1xi1>
    %53 = arith.andi %52, %46 : vector<256x1xi1>
    %54 = vector.broadcast %42 : i32 to vector<256x1xi32>
    %55 = arith.addi %44, %54 : vector<256x1xi32>
    %56 = arith.select %53, %55, %44 : vector<256x1xi1>, vector<256x1xi32>
    %c1_i32_25 = arith.constant 1 : i32
    %57 = vector.broadcast %c1_i32_25 : i32 to vector<256x1xi32>
    %58 = arith.cmpi sge, %56, %57 : vector<256x1xi32>
    %c2_i32 = arith.constant 2 : i32
    %59 = vector.broadcast %c2_i32 : i32 to vector<256x1xi32>
    %60 = arith.cmpi sge, %56, %59 : vector<256x1xi32>
    %61 = vector.extract_strided_slice %39 {offsets = [2, 0], sizes = [1, 128], strides = [1, 1]} : vector<3x128xf32> to vector<1x128xf32>
    %62 = vector.broadcast %61 : vector<1x128xf32> to vector<256x128xf32>
    %63 = arith.mulf %38, %62 : vector<256x128xf32>
    %c1_i32_26 = arith.constant 1 : i32
    %64 = tpu.dynamic_rotate %38 by %c1_i32_26 dim 0 : vector<256x128xf32>, i32 -> vector<256x128xf32>
    %cst_27 = arith.constant 0.000000e+00 : f32
    %65 = vector.shape_cast %58 : vector<256x1xi1> to vector<256x1xi1>
    %66 = vector.broadcast %65 : vector<256x1xi1> to vector<256x128xi1>
    %67 = vector.broadcast %cst_27 : f32 to vector<256x128xf32>
    %68 = arith.select %66, %64, %67 : vector<256x128xi1>, vector<256x128xf32>
    %69 = vector.extract_strided_slice %39 {offsets = [1, 0], sizes = [1, 128], strides = [1, 1]} : vector<3x128xf32> to vector<1x128xf32>
    %70 = vector.broadcast %69 : vector<1x128xf32> to vector<256x128xf32>
    %71 = arith.mulf %68, %70 : vector<256x128xf32>
    %72 = arith.addf %63, %71 : vector<256x128xf32>
    %c2_i32_28 = arith.constant 2 : i32
    %73 = tpu.dynamic_rotate %38 by %c2_i32_28 dim 0 : vector<256x128xf32>, i32 -> vector<256x128xf32>
    %cst_29 = arith.constant 0.000000e+00 : f32
    %74 = vector.shape_cast %60 : vector<256x1xi1> to vector<256x1xi1>
    %75 = vector.broadcast %74 : vector<256x1xi1> to vector<256x128xi1>
    %76 = vector.broadcast %cst_29 : f32 to vector<256x128xf32>
    %77 = arith.select %75, %73, %76 : vector<256x128xi1>, vector<256x128xf32>
    %78 = vector.extract_strided_slice %39 {offsets = [0, 0], sizes = [1, 128], strides = [1, 1]} : vector<3x128xf32> to vector<1x128xf32>
    %79 = vector.broadcast %78 : vector<1x128xf32> to vector<256x128xf32>
    %80 = arith.mulf %77, %79 : vector<256x128xf32>
    %81 = arith.addf %72, %80 : vector<256x128xf32>
    %c0_30 = arith.constant 0 : index
    %c0_31 = arith.constant 0 : index
    %82 = vector.load %arg9[%c0_30, %c0_31] : memref<1x128xf32, #tpu.memory_space<vmem>>, vector<1x128xf32>
    %83 = vector.broadcast %82 : vector<1x128xf32> to vector<256x128xf32>
    %84 = arith.addf %81, %83 : vector<256x128xf32>
    %85 = arith.negf %37 : vector<256x128xf32>
    %86 = math.exp %85 : vector<256x128xf32>
    %cst_32 = arith.constant 1.000000e+00 : f32
    %87 = vector.broadcast %cst_32 : f32 to vector<256x128xf32>
    %88 = arith.addf %87, %86 : vector<256x128xf32>
    %89 = arith.divf %87, %88 : vector<256x128xf32>
    %90 = arith.mulf %36, %89 : vector<256x128xf32>
    %91 = arith.mulf %90, %84 : vector<256x128xf32>
    %92 = arith.truncf %91 : vector<256x128xf32> to vector<256x128xbf16>
    %c0_33 = arith.constant 0 : index
    %c0_34 = arith.constant 0 : index
    %93 = vector.load %arg10[%c0_33, %c0_34] : memref<128x128xbf16, #tpu.memory_space<vmem>>, vector<128x128xbf16>
    %cst_35 = arith.constant dense<0.000000e+00> : vector<256x128xf32>
    %94 = tpu.matmul %92, %93, %cst_35 {dimension_numbers = #tpu.dot_dimension_numbers<[1], [0], [0], [1], [0, 0, 1, 1], [], []>} : vector<256x128xbf16>, vector<128x128xbf16>, vector<256x128xf32> -> vector<256x128xf32>
    %c0_36 = arith.constant 0 : index
    %c0_37 = arith.constant 0 : index
    %95 = vector.load %arg11[%c0_36, %c0_37] : memref<1x128xf32, #tpu.memory_space<vmem>>, vector<1x128xf32>
    %96 = vector.broadcast %95 : vector<1x128xf32> to vector<256x128xf32>
    %97 = arith.addf %94, %96 : vector<256x128xf32>
    %98 = arith.addf %97, %7 : vector<256x128xf32>
    %cst_38 = arith.constant dense<0.000000e+00> : vector<256xf32>
    %99 = vector.multi_reduction <add>, %98, %cst_38 [1] : vector<256x128xf32> to vector<256xf32>
    %100 = vector.shape_cast %99 : vector<256xf32> to vector<256x1xf32>
    %cst_39 = arith.constant 1.280000e+02 : f32
    %101 = vector.broadcast %cst_39 : f32 to vector<256x1xf32>
    %102 = arith.divf %100, %101 : vector<256x1xf32>
    %103 = vector.broadcast %102 : vector<256x1xf32> to vector<256x128xf32>
    %104 = arith.subf %98, %103 : vector<256x128xf32>
    %105 = arith.mulf %104, %104 : vector<256x128xf32>
    %cst_40 = arith.constant dense<0.000000e+00> : vector<256xf32>
    %106 = vector.multi_reduction <add>, %105, %cst_40 [1] : vector<256x128xf32> to vector<256xf32>
    %107 = vector.shape_cast %106 : vector<256xf32> to vector<256x1xf32>
    %cst_41 = arith.constant 1.280000e+02 : f32
    %108 = vector.broadcast %cst_41 : f32 to vector<256x1xf32>
    %109 = arith.divf %107, %108 : vector<256x1xf32>
    %cst_42 = arith.constant 9.99999974E-6 : f32
    %110 = vector.broadcast %cst_42 : f32 to vector<256x1xf32>
    %111 = arith.addf %109, %110 : vector<256x1xf32>
    %112 = math.rsqrt %111 : vector<256x1xf32>
    %113 = vector.broadcast %112 : vector<256x1xf32> to vector<256x128xf32>
    %114 = arith.mulf %104, %113 : vector<256x128xf32>
    %c0_43 = arith.constant 0 : index
    %c0_44 = arith.constant 0 : index
    %115 = vector.load %arg12[%c0_43, %c0_44] : memref<1x128xf32, #tpu.memory_space<vmem>>, vector<1x128xf32>
    %116 = vector.broadcast %115 : vector<1x128xf32> to vector<256x128xf32>
    %117 = arith.mulf %114, %116 : vector<256x128xf32>
    %c0_45 = arith.constant 0 : index
    %c0_46 = arith.constant 0 : index
    %118 = vector.load %arg13[%c0_45, %c0_46] : memref<1x128xf32, #tpu.memory_space<vmem>>, vector<1x128xf32>
    %119 = vector.broadcast %118 : vector<1x128xf32> to vector<256x128xf32>
    %120 = arith.addf %117, %119 : vector<256x128xf32>
    %121 = arith.truncf %120 : vector<256x128xf32> to vector<256x128xbf16>
    %c0_47 = arith.constant 0 : index
    %c0_48 = arith.constant 0 : index
    %122 = vector.load %arg14[%c0_47, %c0_48] : memref<128x256xbf16, #tpu.memory_space<vmem>>, vector<128x256xbf16>
    %cst_49 = arith.constant dense<0.000000e+00> : vector<256x256xf32>
    %123 = tpu.matmul %121, %122, %cst_49 {dimension_numbers = #tpu.dot_dimension_numbers<[1], [0], [0], [1], [0, 0, 1, 1], [], []>} : vector<256x128xbf16>, vector<128x256xbf16>, vector<256x256xf32> -> vector<256x256xf32>
    %c0_50 = arith.constant 0 : index
    %c0_51 = arith.constant 0 : index
    %124 = vector.load %arg15[%c0_50, %c0_51] : memref<1x256xf32, #tpu.memory_space<vmem>>, vector<1x256xf32>
    %125 = vector.broadcast %124 : vector<1x256xf32> to vector<256x256xf32>
    %126 = arith.addf %123, %125 : vector<256x256xf32>
    %cst_52 = arith.constant 5.000000e-01 : f32
    %127 = vector.broadcast %cst_52 : f32 to vector<256x256xf32>
    %128 = arith.mulf %127, %126 : vector<256x256xf32>
    %cst_53 = arith.constant 4.471500e-02 : f32
    %129 = vector.broadcast %cst_53 : f32 to vector<256x256xf32>
    %130 = arith.mulf %129, %126 : vector<256x256xf32>
    %131 = arith.mulf %130, %126 : vector<256x256xf32>
    %132 = arith.mulf %131, %126 : vector<256x256xf32>
    %133 = arith.addf %126, %132 : vector<256x256xf32>
    %cst_54 = arith.constant 0.797884583 : f32
    %134 = vector.broadcast %cst_54 : f32 to vector<256x256xf32>
    %135 = arith.mulf %134, %133 : vector<256x256xf32>
    %136 = math.tanh %135 : vector<256x256xf32>
    %cst_55 = arith.constant 1.000000e+00 : f32
    %137 = vector.broadcast %cst_55 : f32 to vector<256x256xf32>
    %138 = arith.addf %137, %136 : vector<256x256xf32>
    %139 = arith.mulf %128, %138 : vector<256x256xf32>
    %140 = arith.truncf %139 : vector<256x256xf32> to vector<256x256xbf16>
    %c0_56 = arith.constant 0 : index
    %c0_57 = arith.constant 0 : index
    %141 = vector.load %arg16[%c0_56, %c0_57] : memref<256x128xbf16, #tpu.memory_space<vmem>>, vector<256x128xbf16>
    %cst_58 = arith.constant dense<0.000000e+00> : vector<256x128xf32>
    %142 = tpu.matmul %140, %141, %cst_58 {dimension_numbers = #tpu.dot_dimension_numbers<[1], [0], [0], [1], [0, 0, 1, 1], [], []>} : vector<256x256xbf16>, vector<256x128xbf16>, vector<256x128xf32> -> vector<256x128xf32>
    %c0_59 = arith.constant 0 : index
    %c0_60 = arith.constant 0 : index
    %143 = vector.load %arg17[%c0_59, %c0_60] : memref<1x128xf32, #tpu.memory_space<vmem>>, vector<1x128xf32>
    %144 = vector.broadcast %143 : vector<1x128xf32> to vector<256x128xf32>
    %145 = arith.addf %142, %144 : vector<256x128xf32>
    %146 = arith.addf %145, %98 : vector<256x128xf32>
    %147 = arith.truncf %146 : vector<256x128xf32> to vector<256x128xbf16>
    %c0_61 = arith.constant 0 : index
    %c0_62 = arith.constant 0 : index
    %148 = vector.load %arg18[%c0_61, %c0_62] : memref<128x128xbf16, #tpu.memory_space<vmem>>, vector<128x128xbf16>
    %cst_63 = arith.constant dense<0.000000e+00> : vector<256x128xf32>
    %149 = tpu.matmul %147, %148, %cst_63 {dimension_numbers = #tpu.dot_dimension_numbers<[1], [0], [0], [1], [0, 0, 1, 1], [], []>} : vector<256x128xbf16>, vector<128x128xbf16>, vector<256x128xf32> -> vector<256x128xf32>
    %c0_64 = arith.constant 0 : index
    %c0_65 = arith.constant 0 : index
    %150 = vector.load %arg19[%c0_64, %c0_65] : memref<1x128xf32, #tpu.memory_space<vmem>>, vector<1x128xf32>
    %151 = vector.broadcast %150 : vector<1x128xf32> to vector<256x128xf32>
    %152 = arith.addf %149, %151 : vector<256x128xf32>
    %153 = vector.shape_cast %152 : vector<256x128xf32> to vector<16x16x128xf32>
    %c0_66 = arith.constant 0 : index
    %c0_67 = arith.constant 0 : index
    %c0_68 = arith.constant 0 : index
    %154 = vector.load %arg20[%c0_66, %c0_67, %c0_68] : memref<16x16x128xf32, #tpu.memory_space<vmem>>, vector<16x16x128xf32>
    tpu.vector_store %arg20[%c0_66, %c0_67, %c0_68], %153 {strides = array<i32>} : memref<16x16x128xf32, #tpu.memory_space<vmem>>, vector<16x16x128xf32>,
    return
  }
  func.func @transform_0(%arg0: i32) -> (i32, i32, i32) {
    %c0_i32 = arith.constant 0 : i32
    %c0_i32_0 = arith.constant 0 : i32
    %c0_i32_1 = arith.constant 0 : i32
    return %arg0, %c0_i32, %c0_i32_0 : i32, i32, i32
  }
  func.func @transform_1(%arg0: i32) -> (i32, i32) {
    %c0_i32 = arith.constant 0 : i32
    %c0_i32_0 = arith.constant 0 : i32
    %c0_i32_1 = arith.constant 0 : i32
    return %c0_i32, %c0_i32_0 : i32, i32
  }
  func.func @transform_2(%arg0: i32) -> (i32, i32) {
    %c0_i32 = arith.constant 0 : i32
    %c0_i32_0 = arith.constant 0 : i32
    %c0_i32_1 = arith.constant 0 : i32
    return %c0_i32, %c0_i32_0 : i32, i32
  }
  func.func @transform_3(%arg0: i32) -> (i32, i32) {
    %c0_i32 = arith.constant 0 : i32
    %c0_i32_0 = arith.constant 0 : i32
    %c0_i32_1 = arith.constant 0 : i32
    return %c0_i32, %c0_i32_0 : i32, i32
  }
  func.func @transform_4(%arg0: i32) -> (i32, i32) {
    %c0_i32 = arith.constant 0 : i32
    %c0_i32_0 = arith.constant 0 : i32
    %c0_i32_1 = arith.constant 0 : i32
    return %c0_i32, %c0_i32_0 : i32, i32
  }
  func.func @transform_5(%arg0: i32) -> (i32, i32) {
    %c0_i32 = arith.constant 0 : i32
    %c0_i32_0 = arith.constant 0 : i32
    %c0_i32_1 = arith.constant 0 : i32
    return %c0_i32, %c0_i32_0 : i32, i32
  }
  func.func @transform_6(%arg0: i32) -> (i32, i32) {
    %c0_i32 = arith.constant 0 : i32
    %c0_i32_0 = arith.constant 0 : i32
    %c0_i32_1 = arith.constant 0 : i32
    return %c0_i32, %c0_i32_0 : i32, i32
  }
  func.func @transform_7(%arg0: i32) -> (i32, i32) {
    %c0_i32 = arith.constant 0 : i32
    %c0_i32_0 = arith.constant 0 : i32
    %c0_i32_1 = arith.constant 0 : i32
    return %c0_i32, %c0_i32_0 : i32, i32
  }
  func.func @transform_8(%arg0: i32) -> (i32, i32) {
    %c0_i32 = arith.constant 0 : i32
    %c0_i32_0 = arith.constant 0 : i32
    %c0_i32_1 = arith.constant 0 : i32
    return %c0_i32, %c0_i32_0 : i32, i32
  }
  func.func @transform_9(%arg0: i32) -> (i32, i32) {
    %c0_i32 = arith.constant 0 : i32
    %c0_i32_0 = arith.constant 0 : i32
    %c0_i32_1 = arith.constant 0 : i32
    return %c0_i32, %c0_i32_0 : i32, i32
  }
  func.func @transform_10(%arg0: i32) -> (i32, i32) {
    %c0_i32 = arith.constant 0 : i32
    %c0_i32_0 = arith.constant 0 : i32
    %c0_i32_1 = arith.constant 0 : i32
    return %c0_i32, %c0_i32_0 : i32, i32
  }
  func.func @transform_11(%arg0: i32) -> (i32, i32) {
    %c0_i32 = arith.constant 0 : i32
    %c0_i32_0 = arith.constant 0 : i32
    %c0_i32_1 = arith.constant 0 : i32
    return %c0_i32, %c0_i32_0 : i32, i32
  }
  func.func @transform_12(%arg0: i32) -> (i32, i32) {
    %c0_i32 = arith.constant 0 : i32
    %c0_i32_0 = arith.constant 0 : i32
    %c0_i32_1 = arith.constant 0 : i32
    return %c0_i32, %c0_i32_0 : i32, i32
  }
  func.func @transform_13(%arg0: i32) -> (i32, i32) {
    %c0_i32 = arith.constant 0 : i32
    %c0_i32_0 = arith.constant 0 : i32
    %c0_i32_1 = arith.constant 0 : i32
    return %c0_i32, %c0_i32_0 : i32, i32
  }
  func.func @transform_14(%arg0: i32) -> (i32, i32) {
    %c0_i32 = arith.constant 0 : i32
    %c0_i32_0 = arith.constant 0 : i32
    %c0_i32_1 = arith.constant 0 : i32
    return %c0_i32, %c0_i32_0 : i32, i32
  }
  func.func @transform_15(%arg0: i32) -> (i32, i32) {
    %c0_i32 = arith.constant 0 : i32
    %c0_i32_0 = arith.constant 0 : i32
    %c0_i32_1 = arith.constant 0 : i32
    return %c0_i32, %c0_i32_0 : i32, i32
  }
  func.func @transform_16(%arg0: i32) -> (i32, i32) {
    %c0_i32 = arith.constant 0 : i32
    %c0_i32_0 = arith.constant 0 : i32
    %c0_i32_1 = arith.constant 0 : i32
    return %c0_i32, %c0_i32_0 : i32, i32
  }
  func.func @transform_17(%arg0: i32) -> (i32, i32) {
    %c0_i32 = arith.constant 0 : i32
    %c0_i32_0 = arith.constant 0 : i32
    %c0_i32_1 = arith.constant 0 : i32
    return %c0_i32, %c0_i32_0 : i32, i32
  }
  func.func @transform_18(%arg0: i32) -> (i32, i32) {
    %c0_i32 = arith.constant 0 : i32
    %c0_i32_0 = arith.constant 0 : i32
    %c0_i32_1 = arith.constant 0 : i32
    return %c0_i32, %c0_i32_0 : i32, i32
  }
  func.func @transform_19(%arg0: i32) -> (i32, i32, i32) {
    %c0_i32 = arith.constant 0 : i32
    %c0_i32_0 = arith.constant 0 : i32
    %c0_i32_1 = arith.constant 0 : i32
    return %arg0, %c0_i32, %c0_i32_0 : i32, i32, i32
  }
}

</mosaic_0001>

<llo_original>
// kernel: model_parallel_hyena_glt_forward.1
$region0: #{model_parallel_hyena_glt_forward.1}
  #allocation0 [shape = 'u32[]', space=smem, size = 0x4, offset = 0x4, fixed_abs, tag = 'smem constant byte address 0x4 - core index']
  #allocation1 [shape = 'u32[144,128]{1,0:T(1,128)}', space=vmem, size = 0x12000, scoped, tag = 'internal scratch']
  %s0 = inlined_call_operand.vmem [shape: f32[32,16,128], index: 0, kind: input, shape index: {}]
  %s1 = inlined_call_operand.vmem [shape: bf16[128,128], index: 1, kind: input, shape index: {}]
  %s2 = inlined_call_operand.vmem [shape: f32[1,128], index: 2, kind: input, shape index: {}]
  %s3 = inlined_call_operand.vmem [shape: f32[1,128], index: 3, kind: input, shape index: {}]
  %s4 = inlined_call_operand.vmem [shape: f32[1,128], index: 4, kind: input, shape index: {}]
  %s5 = inlined_call_operand.vmem [shape: bf16[128,384], index: 5, kind: input, shape index: {}]
  %s6 = inlined_call_operand.vmem [shape: f32[1,384], index: 6, kind: input, shape index: {}]
  %s7 = inlined_call_operand.vmem [shape: f32[3,128], index: 7, kind: input, shape index: {}]
  %s8 = inlined_call_operand.vmem [shape: f32[1,128], index: 8, kind: input, shape index: {}]
  %s9 = inlined_call_operand.vmem [shape: bf16[128,128], index: 9, kind: input, shape index: {}]
  %s10 = inlined_call_operand.vmem [shape: f32[1,128], index: 10, kind: input, shape index: {}]
  %s11 = inlined_call_operand.vmem [shape: f32[1,128], index: 11, kind: input, shape index: {}]
  %s12 = inlined_call_operand.vmem [shape: f32[1,128], index: 12, kind: input, shape index: {}]
  %s13 = inlined_call_operand.vmem [shape: bf16[128,256], index: 13, kind: input, shape index: {}]
  %s14 = inlined_call_operand.vmem [shape: f32[1,256], index: 14, kind: input, shape index: {}]
  %s15 = inlined_call_operand.vmem [shape: bf16[256,128], index: 15, kind: input, shape index: {}]
  %s16 = inlined_call_operand.vmem [shape: f32[1,128], index: 16, kind: input, shape index: {}]
  %s17 = inlined_call_operand.vmem [shape: bf16[128,128], index: 17, kind: input, shape index: {}]
  %s18 = inlined_call_operand.vmem [shape: f32[1,128], index: 18, kind: input, shape index: {}]
  %s19 = inlined_call_operand.vmem [shape: f32[32,16,128], index: 19, kind: output, shape index: {}]
  %s20 = sld [smem:[#allocation0]]
  $region109: #{model_parallel_hyena_glt_forward.1} parent=0
    _
  %s22 = ssub.s32 1, %s20
  %s23 = scalar_select 0, %s22, %s20
  loop: start=0, step=1, limit=4
  $region2: #{model_parallel_hyena_glt_forward.1} parent=0 // loop_pre_header
    _
  $region3: #{model_parallel_hyena_glt_forward.1} parent=0 // loop_header
    %s25 = sphi 0, %s29
    %p26 = scmp.ge.s32.totalorder %s25, 4
    %s35 = sphi 0, %s37
    %s38 = sphi 0, %s35
    %s39 = sphi 0, %s38
    %s55 = sphi 0, %s39
    %s59 = sphi 0, %s59
    %s61 = sphi 0, %s59
    %s62 = sphi 0, %s61
    %s76 = sphi 0, %s62
    %s80 = sphi 0, %s80
    %s82 = sphi 0, %s80
    %s83 = sphi 0, %s82
    %s97 = sphi 0, %s83
    %s101 = sphi 0, %s101
    %s103 = sphi 0, %s101
    %s104 = sphi 0, %s103
    %s118 = sphi 0, %s104
    %s122 = sphi 0, %s122
    %s124 = sphi 0, %s122
    %s125 = sphi 0, %s124
    %s139 = sphi 0, %s125
    %s143 = sphi 0, %s143
    %s145 = sphi 0, %s143
    %s146 = sphi 0, %s145
    %s160 = sphi 0, %s146
    %s164 = sphi 0, %s164
    %s166 = sphi 0, %s164
    %s167 = sphi 0, %s166
    %s181 = sphi 0, %s167
    %s185 = sphi 0, %s185
    %s187 = sphi 0, %s185
    %s188 = sphi 0, %s187
    %s202 = sphi 0, %s188
    %s206 = sphi 0, %s206
    %s208 = sphi 0, %s206
    %s209 = sphi 0, %s208
    %s223 = sphi 0, %s209
    %s227 = sphi 0, %s227
    %s229 = sphi 0, %s227
    %s230 = sphi 0, %s229
    %s244 = sphi 0, %s230
    %s248 = sphi 0, %s248
    %s250 = sphi 0, %s248
    %s251 = sphi 0, %s250
    %s265 = sphi 0, %s251
    %s269 = sphi 0, %s269
    %s271 = sphi 0, %s269
    %s272 = sphi 0, %s271
    %s286 = sphi 0, %s272
    %s290 = sphi 0, %s290
    %s292 = sphi 0, %s290
    %s293 = sphi 0, %s292
    %s307 = sphi 0, %s293
    %s311 = sphi 0, %s311
    %s313 = sphi 0, %s311
    %s314 = sphi 0, %s313
    %s328 = sphi 0, %s314
    %s332 = sphi 0, %s332
    %s334 = sphi 0, %s332
    %s335 = sphi 0, %s334
    %s349 = sphi 0, %s335
    %s353 = sphi 0, %s353
    %s355 = sphi 0, %s353
    %s356 = sphi 0, %s355
    %s370 = sphi 0, %s356
    %s374 = sphi 0, %s374
    %s376 = sphi 0, %s374
    %s377 = sphi 0, %s376
    %s391 = sphi 0, %s377
    %s395 = sphi 0, %s395
    %s397 = sphi 0, %s395
    %s398 = sphi 0, %s397
    %s412 = sphi 0, %s398
    %s416 = sphi 0, %s416
    %s418 = sphi 0, %s416
    %s419 = sphi 0, %s418
    %s433 = sphi 0, %s419
    %s439 = sphi 0, %s441
    %s442 = sphi 0, %s439
    %s443 = sphi 0, %s442
    %s459 = sphi 0, %s443
  $region4: #{model_parallel_hyena_glt_forward.1} parent=0 // loop_header_branch
    %28 = sbr.rel (%p26) target = $region8
  $region5: #{model_parallel_hyena_glt_forward.1} parent=0 // loop_body
    %s30 = ssub.s32 %s25, 1
    %s31 = ssub.s32 %s25, 2
    %s32 = sadd.s32 %s25, 1
    %s33 = ssub.s32 %s25, %s32
    %p34 = scmp.eq.s32.totalorder %s33, 0
    %s36 = sadd.s32 %s35, 1
    %s37 = scalar_select %p34, %s35, %s36
    %p40 = pneg %p34
    %p41 = scmp.eq.s32.totalorder %s25, 1
    %p42 = por %p40, %p41
    %p43 = scmp.ne.s32.totalorder %s35, %s38
    %p44 = scmp.eq.s32.totalorder %s25, 0
    %p45 = por %p43, %p44
    %p46 = scmp.ne.s32.totalorder %s35, %s38
    %p47 = scmp.eq.s32.totalorder %s30, 1
    %p48 = por %p46, %p47
    %p49 = scmp.ne.s32.totalorder %s38, %s39
    %p50 = scmp.eq.s32.totalorder %s30, 0
    %p51 = por %p49, %p50
    %p52 = scmp.ne.s32.totalorder %s38, %s39
    %p53 = scmp.eq.s32.totalorder %s31, 1
    %p54 = por %p52, %p53
    %p56 = scmp.ne.s32.totalorder %s39, %s55
    %p57 = scmp.eq.s32.totalorder %s31, 0
    %p58 = por %p56, %p57
    %s60 = sadd.s32 %s59, 1
    %p63 = scmp.eq.s32.totalorder %s25, 1
    %p64 = scmp.ne.s32.totalorder %s59, %s61
    %p65 = scmp.eq.s32.totalorder %s25, 0
    %p66 = por %p64, %p65
    %p67 = scmp.ne.s32.totalorder %s59, %s61
    %p68 = scmp.eq.s32.totalorder %s30, 1
    %p69 = por %p67, %p68
    %p70 = scmp.ne.s32.totalorder %s61, %s62
    %p71 = scmp.eq.s32.totalorder %s30, 0
    %p72 = por %p70, %p71
    %p73 = scmp.ne.s32.totalorder %s61, %s62
    %p74 = scmp.eq.s32.totalorder %s31, 1
    %p75 = por %p73, %p74
    %p77 = scmp.ne.s32.totalorder %s62, %s76
    %p78 = scmp.eq.s32.totalorder %s31, 0
    %p79 = por %p77, %p78
    %s81 = sadd.s32 %s80, 1
    %p84 = scmp.eq.s32.totalorder %s25, 1
    %p85 = scmp.ne.s32.totalorder %s80, %s82
    %p86 = scmp.eq.s32.totalorder %s25, 0
    %p87 = por %p85, %p86
    %p88 = scmp.ne.s32.totalorder %s80, %s82
    %p89 = scmp.eq.s32.totalorder %s30, 1
    %p90 = por %p88, %p89
    %p91 = scmp.ne.s32.totalorder %s82, %s83
    %p92 = scmp.eq.s32.totalorder %s30, 0
    %p93 = por %p91, %p92
    %p94 = scmp.ne.s32.totalorder %s82, %s83
    %p95 = scmp.eq.s32.totalorder %s31, 1
    %p96 = por %p94, %p95
    %p98 = scmp.ne.s32.totalorder %s83, %s97
    %p99 = scmp.eq.s32.totalorder %s31, 0
    %p100 = por %p98, %p99
    %s102 = sadd.s32 %s101, 1
    %p105 = scmp.eq.s32.totalorder %s25, 1
    %p106 = scmp.ne.s32.totalorder %s101, %s103
    %p107 = scmp.eq.s32.totalorder %s25, 0
    %p108 = por %p106, %p107
    %p109 = scmp.ne.s32.totalorder %s101, %s103
    %p110 = scmp.eq.s32.totalorder %s30, 1
    %p111 = por %p109, %p110
    %p112 = scmp.ne.s32.totalorder %s103, %s104
    %p113 = scmp.eq.s32.totalorder %s30, 0
    %p114 = por %p112, %p113
    %p115 = scmp.ne.s32.totalorder %s103, %s104
    %p116 = scmp.eq.s32.totalorder %s31, 1
    %p117 = por %p115, %p116
    %p119 = scmp.ne.s32.totalorder %s104, %s118
    %p120 = scmp.eq.s32.totalorder %s31, 0
    %p121 = por %p119, %p120
    %s123 = sadd.s32 %s122, 1
    %p126 = scmp.eq.s32.totalorder %s25, 1
    %p127 = scmp.ne.s32.totalorder %s122, %s124
    %p128 = scmp.eq.s32.totalorder %s25, 0
    %p129 = por %p127, %p128
    %p130 = scmp.ne.s32.totalorder %s122, %s124
    %p131 = scmp.eq.s32.totalorder %s30, 1
    %p132 = por %p130, %p131
    %p133 = scmp.ne.s32.totalorder %s124, %s125
    %p134 = scmp.eq.s32.totalorder %s30, 0
    %p135 = por %p133, %p134
    %p136 = scmp.ne.s32.totalorder %s124, %s125
    %p137 = scmp.eq.s32.totalorder %s31, 1
    %p138 = por %p136, %p137
    %p140 = scmp.ne.s32.totalorder %s125, %s139
    %p141 = scmp.eq.s32.totalorder %s31, 0
    %p142 = por %p140, %p141
    %s144 = sadd.s32 %s143, 1
    %p147 = scmp.eq.s32.totalorder %s25, 1
    %p148 = scmp.ne.s32.totalorder %s143, %s145
    %p149 = scmp.eq.s32.totalorder %s25, 0
    %p150 = por %p148, %p149
    %p151 = scmp.ne.s32.totalorder %s143, %s145
    %p152 = scmp.eq.s32.totalorder %s30, 1
    %p153 = por %p151, %p152
    %p154 = scmp.ne.s32.totalorder %s145, %s146
    %p155 = scmp.eq.s32.totalorder %s30, 0
    %p156 = por %p154, %p155
    %p157 = scmp.ne.s32.totalorder %s145, %s146
    %p158 = scmp.eq.s32.totalorder %s31, 1
    %p159 = por %p157, %p158
    %p161 = scmp.ne.s32.totalorder %s146, %s160
    %p162 = scmp.eq.s32.totalorder %s31, 0
    %p163 = por %p161, %p162
    %s165 = sadd.s32 %s164, 1
    %p168 = scmp.eq.s32.totalorder %s25, 1
    %p169 = scmp.ne.s32.totalorder %s164, %s166
    %p170 = scmp.eq.s32.totalorder %s25, 0
    %p171 = por %p169, %p170
    %p172 = scmp.ne.s32.totalorder %s164, %s166
    %p173 = scmp.eq.s32.totalorder %s30, 1
    %p174 = por %p172, %p173
    %p175 = scmp.ne.s32.totalorder %s166, %s167
    %p176 = scmp.eq.s32.totalorder %s30, 0
    %p177 = por %p175, %p176
    %p178 = scmp.ne.s32.totalorder %s166, %s167
    %p179 = scmp.eq.s32.totalorder %s31, 1
    %p180 = por %p178, %p179
    %p182 = scmp.ne.s32.totalorder %s167, %s181
    %p183 = scmp.eq.s32.totalorder %s31, 0
    %p184 = por %p182, %p183
    %s186 = sadd.s32 %s185, 1
    %p189 = scmp.eq.s32.totalorder %s25, 1
    %p190 = scmp.ne.s32.totalorder %s185, %s187
    %p191 = scmp.eq.s32.totalorder %s25, 0
    %p192 = por %p190, %p191
    %p193 = scmp.ne.s32.totalorder %s185, %s187
    %p194 = scmp.eq.s32.totalorder %s30, 1
    %p195 = por %p193, %p194
    %p196 = scmp.ne.s32.totalorder %s187, %s188
    %p197 = scmp.eq.s32.totalorder %s30, 0
    %p198 = por %p196, %p197
    %p199 = scmp.ne.s32.totalorder %s187, %s188
    %p200 = scmp.eq.s32.totalorder %s31, 1
    %p201 = por %p199, %p200
    %p203 = scmp.ne.s32.totalorder %s188, %s202
    %p204 = scmp.eq.s32.totalorder %s31, 0
    %p205 = por %p203, %p204
    %s207 = sadd.s32 %s206, 1
    %p210 = scmp.eq.s32.totalorder %s25, 1
    %p211 = scmp.ne.s32.totalorder %s206, %s208
    %p212 = scmp.eq.s32.totalorder %s25, 0
    %p213 = por %p211, %p212
    %p214 = scmp.ne.s32.totalorder %s206, %s208
    %p215 = scmp.eq.s32.totalorder %s30, 1
    %p216 = por %p214, %p215
    %p217 = scmp.ne.s32.totalorder %s208, %s209
    %p218 = scmp.eq.s32.totalorder %s30, 0
    %p219 = por %p217, %p218
    %p220 = scmp.ne.s32.totalorder %s208, %s209
    %p221 = scmp.eq.s32.totalorder %s31, 1
    %p222 = por %p220, %p221
    %p224 = scmp.ne.s32.totalorder %s209, %s223
    %p225 = scmp.eq.s32.totalorder %s31, 0
    %p226 = por %p224, %p225
    %s228 = sadd.s32 %s227, 1
    %p231 = scmp.eq.s32.totalorder %s25, 1
    %p232 = scmp.ne.s32.totalorder %s227, %s229
    %p233 = scmp.eq.s32.totalorder %s25, 0
    %p234 = por %p232, %p233
    %p235 = scmp.ne.s32.totalorder %s227, %s229
    %p236 = scmp.eq.s32.totalorder %s30, 1
    %p237 = por %p235, %p236
    %p238 = scmp.ne.s32.totalorder %s229, %s230
    %p239 = scmp.eq.s32.totalorder %s30, 0
    %p240 = por %p238, %p239
    %p241 = scmp.ne.s32.totalorder %s229, %s230
    %p242 = scmp.eq.s32.totalorder %s31, 1
    %p243 = por %p241, %p242
    %p245 = scmp.ne.s32.totalorder %s230, %s244
    %p246 = scmp.eq.s32.totalorder %s31, 0
    %p247 = por %p245, %p246
    %s249 = sadd.s32 %s248, 1
    %p252 = scmp.eq.s32.totalorder %s25, 1
    %p253 = scmp.ne.s32.totalorder %s248, %s250
    %p254 = scmp.eq.s32.totalorder %s25, 0
    %p255 = por %p253, %p254
    %p256 = scmp.ne.s32.totalorder %s248, %s250
    %p257 = scmp.eq.s32.totalorder %s30, 1
    %p258 = por %p256, %p257
    %p259 = scmp.ne.s32.totalorder %s250, %s251
    %p260 = scmp.eq.s32.totalorder %s30, 0
    %p261 = por %p259, %p260
    %p262 = scmp.ne.s32.totalorder %s250, %s251
    %p263 = scmp.eq.s32.totalorder %s31, 1
    %p264 = por %p262, %p263
    %p266 = scmp.ne.s32.totalorder %s251, %s265
    %p267 = scmp.eq.s32.totalorder %s31, 0
    %p268 = por %p266, %p267
    %s270 = sadd.s32 %s269, 1
    %p273 = scmp.eq.s32.totalorder %s25, 1
    %p274 = scmp.ne.s32.totalorder %s269, %s271
    %p275 = scmp.eq.s32.totalorder %s25, 0
    %p276 = por %p274, %p275
    %p277 = scmp.ne.s32.totalorder %s269, %s271
    %p278 = scmp.eq.s32.totalorder %s30, 1
    %p279 = por %p277, %p278
    %p280 = scmp.ne.s32.totalorder %s271, %s272
    %p281 = scmp.eq.s32.totalorder %s30, 0
    %p282 = por %p280, %p281
    %p283 = scmp.ne.s32.totalorder %s271, %s272
    %p284 = scmp.eq.s32.totalorder %s31, 1
    %p285 = por %p283, %p284
    %p287 = scmp.ne.s32.totalorder %s272, %s286
    %p288 = scmp.eq.s32.totalorder %s31, 0
    %p289 = por %p287, %p288
    %s291 = sadd.s32 %s290, 1
    %p294 = scmp.eq.s32.totalorder %s25, 1
    %p295 = scmp.ne.s32.totalorder %s290, %s292
    %p296 = scmp.eq.s32.totalorder %s25, 0
    %p297 = por %p295, %p296
    %p298 = scmp.ne.s32.totalorder %s290, %s292
    %p299 = scmp.eq.s32.totalorder %s30, 1
    %p300 = por %p298, %p299
    %p301 = scmp.ne.s32.totalorder %s292, %s293
    %p302 = scmp.eq.s32.totalorder %s30, 0
    %p303 = por %p301, %p302
    %p304 = scmp.ne.s32.totalorder %s292, %s293
    %p305 = scmp.eq.s32.totalorder %s31, 1
    %p306 = por %p304, %p305
    %p308 = scmp.ne.s32.totalorder %s293, %s307
    %p309 = scmp.eq.s32.totalorder %s31, 0
    %p310 = por %p308, %p309
    %s312 = sadd.s32 %s311, 1
    %p315 = scmp.eq.s32.totalorder %s25, 1
    %p316 = scmp.ne.s32.totalorder %s311, %s313
    %p317 = scmp.eq.s32.totalorder %s25, 0
    %p318 = por %p316, %p317
    %p319 = scmp.ne.s32.totalorder %s311, %s313
    %p320 = scmp.eq.s32.totalorder %s30, 1
    %p321 = por %p319, %p320
    %p322 = scmp.ne.s32.totalorder %s313, %s314
    %p323 = scmp.eq.s32.totalorder %s30, 0
    %p324 = por %p322, %p323
    %p325 = scmp.ne.s32.totalorder %s313, %s314
    %p326 = scmp.eq.s32.totalorder %s31, 1
    %p327 = por %p325, %p326
    %p329 = scmp.ne.s32.totalorder %s314, %s328
    %p330 = scmp.eq.s32.totalorder %s31, 0
    %p331 = por %p329, %p330
    %s333 = sadd.s32 %s332, 1
    %p336 = scmp.eq.s32.totalorder %s25, 1
    %p337 = scmp.ne.s32.totalorder %s332, %s334
    %p338 = scmp.eq.s32.totalorder %s25, 0
    %p339 = por %p337, %p338
    %p340 = scmp.ne.s32.totalorder %s332, %s334
    %p341 = scmp.eq.s32.totalorder %s30, 1
    %p342 = por %p340, %p341
    %p343 = scmp.ne.s32.totalorder %s334, %s335
    %p344 = scmp.eq.s32.totalorder %s30, 0
    %p345 = por %p343, %p344
    %p346 = scmp.ne.s32.totalorder %s334, %s335
    %p347 = scmp.eq.s32.totalorder %s31, 1
    %p348 = por %p346, %p347
    %p350 = scmp.ne.s32.totalorder %s335, %s349
    %p351 = scmp.eq.s32.totalorder %s31, 0
    %p352 = por %p350, %p351
    %s354 = sadd.s32 %s353, 1
    %p357 = scmp.eq.s32.totalorder %s25, 1
    %p358 = scmp.ne.s32.totalorder %s353, %s355
    %p359 = scmp.eq.s32.totalorder %s25, 0
    %p360 = por %p358, %p359
    %p361 = scmp.ne.s32.totalorder %s353, %s355
    %p362 = scmp.eq.s32.totalorder %s30, 1
    %p363 = por %p361, %p362
    %p364 = scmp.ne.s32.totalorder %s355, %s356
    %p365 = scmp.eq.s32.totalorder %s30, 0
    %p366 = por %p364, %p365
    %p367 = scmp.ne.s32.totalorder %s355, %s356
    %p368 = scmp.eq.s32.totalorder %s31, 1
    %p369 = por %p367, %p368
    %p371 = scmp.ne.s32.totalorder %s356, %s370
    %p372 = scmp.eq.s32.totalorder %s31, 0
    %p373 = por %p371, %p372
    %s375 = sadd.s32 %s374, 1
    %p378 = scmp.eq.s32.totalorder %s25, 1
    %p379 = scmp.ne.s32.totalorder %s374, %s376
    %p380 = scmp.eq.s32.totalorder %s25, 0
    %p381 = por %p379, %p380
    %p382 = scmp.ne.s32.totalorder %s374, %s376
    %p383 = scmp.eq.s32.totalorder %s30, 1
    %p384 = por %p382, %p383
    %p385 = scmp.ne.s32.totalorder %s376, %s377
    %p386 = scmp.eq.s32.totalorder %s30, 0
    %p387 = por %p385, %p386
    %p388 = scmp.ne.s32.totalorder %s376, %s377
    %p389 = scmp.eq.s32.totalorder %s31, 1
    %p390 = por %p388, %p389
    %p392 = scmp.ne.s32.totalorder %s377, %s391
    %p393 = scmp.eq.s32.totalorder %s31, 0
    %p394 = por %p392, %p393
    %s396 = sadd.s32 %s395, 1
    %p399 = scmp.eq.s32.totalorder %s25, 1
    %p400 = scmp.ne.s32.totalorder %s395, %s397
    %p401 = scmp.eq.s32.totalorder %s25, 0
    %p402 = por %p400, %p401
    %p403 = scmp.ne.s32.totalorder %s395, %s397
    %p404 = scmp.eq.s32.totalorder %s30, 1
    %p405 = por %p403, %p404
    %p406 = scmp.ne.s32.totalorder %s397, %s398
    %p407 = scmp.eq.s32.totalorder %s30, 0
    %p408 = por %p406, %p407
    %p409 = scmp.ne.s32.totalorder %s397, %s398
    %p410 = scmp.eq.s32.totalorder %s31, 1
    %p411 = por %p409, %p410
    %p413 = scmp.ne.s32.totalorder %s398, %s412
    %p414 = scmp.eq.s32.totalorder %s31, 0
    %p415 = por %p413, %p414
    %s417 = sadd.s32 %s416, 1
    %p420 = scmp.eq.s32.totalorder %s25, 1
    %p421 = scmp.ne.s32.totalorder %s416, %s418
    %p422 = scmp.eq.s32.totalorder %s25, 0
    %p423 = por %p421, %p422
    %p424 = scmp.ne.s32.totalorder %s416, %s418
    %p425 = scmp.eq.s32.totalorder %s30, 1
    %p426 = por %p424, %p425
    %p427 = scmp.ne.s32.totalorder %s418, %s419
    %p428 = scmp.eq.s32.totalorder %s30, 0
    %p429 = por %p427, %p428
    %p430 = scmp.ne.s32.totalorder %s418, %s419
    %p431 = scmp.eq.s32.totalorder %s31, 1
    %p432 = por %p430, %p431
    %p434 = scmp.ne.s32.totalorder %s419, %s433
    %p435 = scmp.eq.s32.totalorder %s31, 0
    %p436 = por %p434, %p435
    %s437 = ssub.s32 %s25, %s32
    %p438 = scmp.eq.s32.totalorder %s437, 0
    %s440 = sadd.s32 %s439, 1
    %s441 = scalar_select %p438, %s439, %s440
    %p444 = pneg %p438
    %p445 = scmp.eq.s32.totalorder %s25, 1
    %p446 = por %p444, %p445
    %p447 = scmp.ne.s32.totalorder %s439, %s442
    %p448 = scmp.eq.s32.totalorder %s25, 0
    %p449 = por %p447, %p448
    %p450 = scmp.ne.s32.totalorder %s439, %s442
    %p451 = scmp.eq.s32.totalorder %s30, 1
    %p452 = por %p450, %p451
    %p453 = scmp.ne.s32.totalorder %s442, %s443
    %p454 = scmp.eq.s32.totalorder %s30, 0
    %p455 = por %p453, %p454
    %p456 = scmp.ne.s32.totalorder %s442, %s443
    %p457 = scmp.eq.s32.totalorder %s31, 1
    %p458 = por %p456, %p457
    %p460 = scmp.ne.s32.totalorder %s443, %s459
    %p461 = scmp.eq.s32.totalorder %s31, 0
    %p462 = por %p460, %p461
    %p463 = scmp.le.s32.totalorder 1, %s25
    %p464 = scmp.lt.s32.totalorder %s25, 3
    %p465 = pnand %p463, %p464
    %p466 = pneg %p465
    // Predicated region
    $region9: #{model_parallel_hyena_glt_forward.1} parent=5 // pred_check
      _
    $region10: #{model_parallel_hyena_glt_forward.1} parent=5 // pred_check_branch
      %468 = sbr.rel (%p465) target = $region12
    $region11: #{model_parallel_hyena_glt_forward.1} parent=5 // pred_region
      %s469 = ssub.s32 %s25, 1
      // Predicated region
      $region13: #{model_parallel_hyena_glt_forward.1} parent=11 // pred_check
        %p470 = pneg %p72
      $region14: #{model_parallel_hyena_glt_forward.1} parent=11 // pred_check_branch
        %472 = sbr.rel (%p470) target = $region16
      $region15: #{model_parallel_hyena_glt_forward.1} parent=11 // pred_region
        _
      $region16: #{model_parallel_hyena_glt_forward.1} parent=11 // pred_fallthru
        _
      // Predicated region
      $region17: #{model_parallel_hyena_glt_forward.1} parent=11 // pred_check
        %p473 = pneg %p93
      $region18: #{model_parallel_hyena_glt_forward.1} parent=11 // pred_check_branch
        %475 = sbr.rel (%p473) target = $region20
      $region19: #{model_parallel_hyena_glt_forward.1} parent=11 // pred_region
        _
      $region20: #{model_parallel_hyena_glt_forward.1} parent=11 // pred_fallthru
        _
      // Predicated region
      $region21: #{model_parallel_hyena_glt_forward.1} parent=11 // pred_check
        %p476 = pneg %p114
      $region22: #{model_parallel_hyena_glt_forward.1} parent=11 // pred_check_branch
        %478 = sbr.rel (%p476) target = $region24
      $region23: #{model_parallel_hyena_glt_forward.1} parent=11 // pred_region
        _
      $region24: #{model_parallel_hyena_glt_forward.1} parent=11 // pred_fallthru
        _
      // Predicated region
      $region25: #{model_parallel_hyena_glt_forward.1} parent=11 // pred_check
        %p479 = pneg %p135
      $region26: #{model_parallel_hyena_glt_forward.1} parent=11 // pred_check_branch
        %481 = sbr.rel (%p479) target = $region28
      $region27: #{model_parallel_hyena_glt_forward.1} parent=11 // pred_region
        _
      $region28: #{model_parallel_hyena_glt_forward.1} parent=11 // pred_fallthru
        _
      // Predicated region
      $region29: #{model_parallel_hyena_glt_forward.1} parent=11 // pred_check
        %p482 = pneg %p156
      $region30: #{model_parallel_hyena_glt_forward.1} parent=11 // pred_check_branch
        %484 = sbr.rel (%p482) target = $region32
      $region31: #{model_parallel_hyena_glt_forward.1} parent=11 // pred_region
        _
      $region32: #{model_parallel_hyena_glt_forward.1} parent=11 // pred_fallthru
        _
      // Predicated region
      $region33: #{model_parallel_hyena_glt_forward.1} parent=11 // pred_check
        %p485 = pneg %p177
      $region34: #{model_parallel_hyena_glt_forward.1} parent=11 // pred_check_branch
        %487 = sbr.rel (%p485) target = $region36
      $region35: #{model_parallel_hyena_glt_forward.1} parent=11 // pred_region
        _
      $region36: #{model_parallel_hyena_glt_forward.1} parent=11 // pred_fallthru
        _
      // Predicated region
      $region37: #{model_parallel_hyena_glt_forward.1} parent=11 // pred_check
        %p488 = pneg %p198
      $region38: #{model_parallel_hyena_glt_forward.1} parent=11 // pred_check_branch
        %490 = sbr.rel (%p488) target = $region40
      $region39: #{model_parallel_hyena_glt_forward.1} parent=11 // pred_region
        _
      $region40: #{model_parallel_hyena_glt_forward.1} parent=11 // pred_fallthru
        _
      // Predicated region
      $region41: #{model_parallel_hyena_glt_forward.1} parent=11 // pred_check
        %p491 = pneg %p219
      $region42: #{model_parallel_hyena_glt_forward.1} parent=11 // pred_check_branch
        %493 = sbr.rel (%p491) target = $region44
      $region43: #{model_parallel_hyena_glt_forward.1} parent=11 // pred_region
        _
      $region44: #{model_parallel_hyena_glt_forward.1} parent=11 // pred_fallthru
        _
      // Predicated region
      $region45: #{model_parallel_hyena_glt_forward.1} parent=11 // pred_check
        %p494 = pneg %p240
      $region46: #{model_parallel_hyena_glt_forward.1} parent=11 // pred_check_branch
        %496 = sbr.rel (%p494) target = $region48
      $region47: #{model_parallel_hyena_glt_forward.1} parent=11 // pred_region
        _
      $region48: #{model_parallel_hyena_glt_forward.1} parent=11 // pred_fallthru
        _
      // Predicated region
      $region49: #{model_parallel_hyena_glt_forward.1} parent=11 // pred_check
        %p497 = pneg %p261
      $region50: #{model_parallel_hyena_glt_forward.1} parent=11 // pred_check_branch
        %499 = sbr.rel (%p497) target = $region52
      $region51: #{model_parallel_hyena_glt_forward.1} parent=11 // pred_region
        _
      $region52: #{model_parallel_hyena_glt_forward.1} parent=11 // pred_fallthru
        _
      // Predicated region
      $region53: #{model_parallel_hyena_glt_forward.1} parent=11 // pred_check
        %p500 = pneg %p282
      $region54: #{model_parallel_hyena_glt_forward.1} parent=11 // pred_check_branch
        %502 = sbr.rel (%p500) target = $region56
      $region55: #{model_parallel_hyena_glt_forward.1} parent=11 // pred_region
        _
      $region56: #{model_parallel_hyena_glt_forward.1} parent=11 // pred_fallthru
        _
      // Predicated region
      $region57: #{model_parallel_hyena_glt_forward.1} parent=11 // pred_check
        %p503 = pneg %p303
      $region58: #{model_parallel_hyena_glt_forward.1} parent=11 // pred_check_branch
        %505 = sbr.rel (%p503) target = $region60
      $region59: #{model_parallel_hyena_glt_forward.1} parent=11 // pred_region
        _
      $region60: #{model_parallel_hyena_glt_forward.1} parent=11 // pred_fallthru
        _
      // Predicated region
      $region61: #{model_parallel_hyena_glt_forward.1} parent=11 // pred_check
        %p506 = pneg %p324
      $region62: #{model_parallel_hyena_glt_forward.1} parent=11 // pred_check_branch
        %508 = sbr.rel (%p506) target = $region64
      $region63: #{model_parallel_hyena_glt_forward.1} parent=11 // pred_region
        _
      $region64: #{model_parallel_hyena_glt_forward.1} parent=11 // pred_fallthru
        _
      // Predicated region
      $region65: #{model_parallel_hyena_glt_forward.1} parent=11 // pred_check
        %p509 = pneg %p345
      $region66: #{model_parallel_hyena_glt_forward.1} parent=11 // pred_check_branch
        %511 = sbr.rel (%p509) target = $region68
      $region67: #{model_parallel_hyena_glt_forward.1} parent=11 // pred_region
        _
      $region68: #{model_parallel_hyena_glt_forward.1} parent=11 // pred_fallthru
        _
      // Predicated region
      $region69: #{model_parallel_hyena_glt_forward.1} parent=11 // pred_check
        %p512 = pneg %p366
      $region70: #{model_parallel_hyena_glt_forward.1} parent=11 // pred_check_branch
        %514 = sbr.rel (%p512) target = $region72
      $region71: #{model_parallel_hyena_glt_forward.1} parent=11 // pred_region
        _
      $region72: #{model_parallel_hyena_glt_forward.1} parent=11 // pred_fallthru
        _
      // Predicated region
      $region73: #{model_parallel_hyena_glt_forward.1} parent=11 // pred_check
        %p515 = pneg %p387
      $region74: #{model_parallel_hyena_glt_forward.1} parent=11 // pred_check_branch
        %517 = sbr.rel (%p515) target = $region76
      $region75: #{model_parallel_hyena_glt_forward.1} parent=11 // pred_region
        _
      $region76: #{model_parallel_hyena_glt_forward.1} parent=11 // pred_fallthru
        _
      // Predicated region
      $region77: #{model_parallel_hyena_glt_forward.1} parent=11 // pred_check
        %p518 = pneg %p408
      $region78: #{model_parallel_hyena_glt_forward.1} parent=11 // pred_check_branch
        %520 = sbr.rel (%p518) target = $region80
      $region79: #{model_parallel_hyena_glt_forward.1} parent=11 // pred_region
        _
      $region80: #{model_parallel_hyena_glt_forward.1} parent=11 // pred_fallthru
        _
      // Predicated region
      $region81: #{model_parallel_hyena_glt_forward.1} parent=11 // pred_check
        %p521 = pneg %p429
      $region82: #{model_parallel_hyena_glt_forward.1} parent=11 // pred_check_branch
        %523 = sbr.rel (%p521) target = $region84
      $region83: #{model_parallel_hyena_glt_forward.1} parent=11 // pred_region
        _
      $region84: #{model_parallel_hyena_glt_forward.1} parent=11 // pred_fallthru
        _
    $region12: #{model_parallel_hyena_glt_forward.1} parent=5 // pred_fallthru
      _
    %p524 = scmp.lt.s32.totalorder %s25, 2
    // Predicated region
    $region85: #{model_parallel_hyena_glt_forward.1} parent=5 // pred_check
      %p525 = pneg %p524
    $region86: #{model_parallel_hyena_glt_forward.1} parent=5 // pred_check_branch
      %527 = sbr.rel (%p525) target = $region88
    $region87: #{model_parallel_hyena_glt_forward.1} parent=5 // pred_region
      // Predicated region
      $region89: #{model_parallel_hyena_glt_forward.1} parent=87 // pred_check
        %p528 = pneg %p45
      $region90: #{model_parallel_hyena_glt_forward.1} parent=87 // pred_check_branch
        %530 = sbr.rel (%p528) target = $region92
      $region91: #{model_parallel_hyena_glt_forward.1} parent=87 // pred_region
        %s531 = smul.u32 16, %s25
        %p532 = scmp.lt.s32.totalorder %s531, 31
        %s533 = scalar_select %p532, %s531, 31
        %s534 = smul.addr %s533, 2
        %s535 = smul.addr %s534, 8
        %s536 = scalar_lea.vmem %s0, %s535
        %s537 = smul.u32 16, %s25
      $region92: #{model_parallel_hyena_glt_forward.1} parent=87 // pred_fallthru
        _
    $region88: #{model_parallel_hyena_glt_forward.1} parent=5 // pred_fallthru
      _
    %p538 = scmp.le.s32.totalorder 1, %s25
    %p539 = scmp.lt.s32.totalorder %s25, 3
    %p540 = pnand %p538, %p539
    %p541 = pneg %p540
    // Predicated region
    $region93: #{model_parallel_hyena_glt_forward.1} parent=5 // pred_check
      _
    $region94: #{model_parallel_hyena_glt_forward.1} parent=5 // pred_check_branch
      %543 = sbr.rel (%p540) target = $region96
    $region95: #{model_parallel_hyena_glt_forward.1} parent=5 // pred_region
      %s544 = ssub.s32 %s25, 1
      %s545 = smul.u32 16, %s30
      %p546 = scmp.lt.s32.totalorder %s545, 31
      %s547 = scalar_select %p546, %s545, 31
      %s548 = smul.addr %s547, 2
      %s549 = smul.addr %s548, 8
      %s550 = scalar_lea.vmem %s0, %s549
      %p551 = pneg %p51
      %p552 = pneg %p48
      %p553 = pneg %p72
      %p554 = pneg %p69
      %p555 = pneg %p93
      %p556 = pneg %p90
      %p557 = pneg %p114
      %p558 = pneg %p111
      %p559 = pneg %p135
      %p560 = pneg %p132
      %p561 = pneg %p156
      %p562 = pneg %p153
      %p563 = pneg %p177
      %p564 = pneg %p174
      %p565 = pneg %p198
      %p566 = pneg %p195
      %p567 = pneg %p219
      %p568 = pneg %p216
      %p569 = pneg %p240
      %p570 = pneg %p237
      %p571 = pneg %p261
      %p572 = pneg %p258
      %p573 = pneg %p282
      %p574 = pneg %p279
      %p575 = pneg %p303
      %p576 = pneg %p300
      %p577 = pneg %p324
      %p578 = pneg %p321
      %p579 = pneg %p345
      %p580 = pneg %p342
      %p581 = pneg %p366
      %p582 = pneg %p363
      %p583 = pneg %p387
      %p584 = pneg %p384
      %p585 = pneg %p408
      %p586 = pneg %p405
      %p587 = pneg %p429
      %p588 = pneg %p426
      %p589 = pneg %p455
      %p590 = pneg %p452
      %s591 = smul.u32 16, %s30
      %p592 = scmp.lt.s32.totalorder %s591, 31
      %s593 = scalar_select %p592, %s591, 31
      %s594 = smul.addr %s593, 2
      %s595 = smul.addr %s594, 8
      %s596 = scalar_lea.vmem %s19, %s595
      %s597 = smul.u32 16, %s30
      %p598 = scmp.lt.s32.totalorder %s597, 31
      %s599 = scalar_select %p598, %s597, 31
      %s600 = smul.addr %s599, 2
      %s601 = smul.addr %s600, 8
      %s602 = scalar_lea.vmem %s0, %s601
      %s603 = smul.u32 16, %s30
      %s604 = smul.u32 16, %s30
      %p605 = scmp.lt.s32.totalorder %s604, 31
      %s606 = scalar_select %p605, %s604, 31
      %s607 = smul.addr %s606, 2
      %s608 = smul.addr %s607, 8
      %s609 = scalar_lea.vmem %s19, %s608
      %s610 = smul.u32 16, %s30
      %v612 = vld [vmem:[%s602] sm:$0xff]
      %v613 = vld [vmem:[%s602 + $0x8] sm:$0xff]
      %v614 = vld [vmem:[%s602 + $0x10] sm:$0xff]
      %v615 = vld [vmem:[%s602 + $0x18] sm:$0xff]
      %v616 = vld [vmem:[%s602 + $0x20] sm:$0xff]
      %v617 = vld [vmem:[%s602 + $0x28] sm:$0xff]
      %v618 = vld [vmem:[%s602 + $0x30] sm:$0xff]
      %v619 = vld [vmem:[%s602 + $0x38] sm:$0xff]
      %v620 = vld [vmem:[%s602 + $0x40] sm:$0xff]
      %v621 = vld [vmem:[%s602 + $0x48] sm:$0xff]
      %v622 = vld [vmem:[%s602 + $0x50] sm:$0xff]
      %v623 = vld [vmem:[%s602 + $0x58] sm:$0xff]
      %v624 = vld [vmem:[%s602 + $0x60] sm:$0xff]
      %v625 = vld [vmem:[%s602 + $0x68] sm:$0xff]
      %v626 = vld [vmem:[%s602 + $0x70] sm:$0xff]
      %v627 = vld [vmem:[%s602 + $0x78] sm:$0xff]
      %v628 = vld [vmem:[%s602 + $0x80] sm:$0xff]
      %v629 = vld [vmem:[%s602 + $0x88] sm:$0xff]
      %v630 = vld [vmem:[%s602 + $0x90] sm:$0xff]
      %v631 = vld [vmem:[%s602 + $0x98] sm:$0xff]
      %v632 = vld [vmem:[%s602 + $0xa0] sm:$0xff]
      %v633 = vld [vmem:[%s602 + $0xa8] sm:$0xff]
      %v634 = vld [vmem:[%s602 + $0xb0] sm:$0xff]
      %v635 = vld [vmem:[%s602 + $0xb8] sm:$0xff]
      %v636 = vld [vmem:[%s602 + $0xc0] sm:$0xff]
      %v637 = vld [vmem:[%s602 + $0xc8] sm:$0xff]
      %v638 = vld [vmem:[%s602 + $0xd0] sm:$0xff]
      %v639 = vld [vmem:[%s602 + $0xd8] sm:$0xff]
      %v640 = vld [vmem:[%s602 + $0xe0] sm:$0xff]
      %v641 = vld [vmem:[%s602 + $0xe8] sm:$0xff]
      %v642 = vld [vmem:[%s602 + $0xf0] sm:$0xff]
      %v643 = vld [vmem:[%s602 + $0xf8] sm:$0xff]
      %v644 = vpack.c.bf16 %v613, %v612
      %v645 = vpack.c.bf16 %v615, %v614
      %v646 = vpack.c.bf16 %v617, %v616
      %v647 = vpack.c.bf16 %v619, %v618
      %v648 = vpack.c.bf16 %v621, %v620
      %v649 = vpack.c.bf16 %v623, %v622
      %v650 = vpack.c.bf16 %v625, %v624
      %v651 = vpack.c.bf16 %v627, %v626
      %v652 = vpack.c.bf16 %v629, %v628
      %v653 = vpack.c.bf16 %v631, %v630
      %v654 = vpack.c.bf16 %v633, %v632
      %v655 = vpack.c.bf16 %v635, %v634
      %v656 = vpack.c.bf16 %v637, %v636
      %v657 = vpack.c.bf16 %v639, %v638
      %v658 = vpack.c.bf16 %v641, %v640
      %v659 = vpack.c.bf16 %v643, %v642
      %v660 = vld [vmem:[%s1] sm:$0xf]
      %v661 = vld [vmem:[%s1 + $0x4] sm:$0xf]
      %v662 = vld [vmem:[%s1 + $0x8] sm:$0xf]
      %v663 = vld [vmem:[%s1 + $0xc] sm:$0xf]
      %v664 = vld [vmem:[%s1 + $0x10] sm:$0xf]
      %v665 = vld [vmem:[%s1 + $0x14] sm:$0xf]
      %v666 = vld [vmem:[%s1 + $0x18] sm:$0xf]
      %v667 = vld [vmem:[%s1 + $0x1c] sm:$0xf]
      %v668 = vld [vmem:[%s1 + $0x20] sm:$0xf]
      %v669 = vld [vmem:[%s1 + $0x24] sm:$0xf]
      %v670 = vld [vmem:[%s1 + $0x28] sm:$0xf]
      %v671 = vld [vmem:[%s1 + $0x2c] sm:$0xf]
      %v672 = vld [vmem:[%s1 + $0x30] sm:$0xf]
      %v673 = vld [vmem:[%s1 + $0x34] sm:$0xf]
      %v674 = vld [vmem:[%s1 + $0x38] sm:$0xf]
      %v675 = vld [vmem:[%s1 + $0x3c] sm:$0xf]
      %v676 = vld [vmem:[%s2] sm:$0x1]
      %v678 = vlaneseq
      %v679 = vshrl.u32 %v678, 7
      %v680 = vsub.s32 0, %v679
      %v681 = vrot.slane %v676, %v680
      %v699 = vunpack.c.l.b16 %v660
      %v700 = vunpack.c.l.b16 %v661
      %v701 = vunpack.c.l.b16 %v662
      %v702 = vunpack.c.l.b16 %v663
      %v703 = vunpack.c.l.b16 %v664
      %v704 = vunpack.c.l.b16 %v665
      %v705 = vunpack.c.l.b16 %v666
      %v706 = vunpack.c.l.b16 %v667
      %v707 = vunpack.c.l.b16 %v668
      %v708 = vunpack.c.l.b16 %v669
      %v709 = vunpack.c.l.b16 %v670
      %v710 = vunpack.c.l.b16 %v671
      %v711 = vunpack.c.l.b16 %v672
      %v712 = vunpack.c.l.b16 %v673
      %v713 = vunpack.c.l.b16 %v674
      %v714 = vunpack.c.l.b16 %v675
      %v715 = vpack.c.b16 %v700, %v699
      %v716 = vpack.c.b16 %v702, %v701
      %v717 = vpack.c.b16 %v704, %v703
      %v718 = vpack.c.b16 %v706, %v705
      %v719 = vpack.c.b16 %v708, %v707
      %v720 = vpack.c.b16 %v710, %v709
      %v721 = vpack.c.b16 %v712, %v711
      %v722 = vpack.c.b16 %v714, %v713
      %731 = vmatprep.subr.bf16.mxu0 0
      %732 = vmatpush1.bf16.msra.mxu0 %v722
      %733 = vmatprep.subr.bf16.mxu0 0
      %734 = vmatpush1.bf16.msra.mxu0 %v721
      %735 = vmatprep.subr.bf16.mxu0 0
      %736 = vmatpush1.bf16.msra.mxu0 %v720
      %737 = vmatprep.subr.bf16.mxu0 0
      %738 = vmatpush1.bf16.msra.mxu0 %v719
      %739 = vmatprep.subr.bf16.mxu0 0
      %740 = vmatpush1.bf16.msra.mxu0 %v718
      %741 = vmatprep.subr.bf16.mxu0 0
      %742 = vmatpush1.bf16.msra.mxu0 %v717
      %743 = vmatprep.subr.bf16.mxu0 0
      %744 = vmatpush1.bf16.msra.mxu0 %v716
      %745 = vmatprep.subr.bf16.mxu0 0
      %746 = vmatpush1.bf16.msra.mxu0 %v715
      %747 = vmatprep.subr.bf16.mxu0 0
      %748 = vmatpush2.bf16.msra.mxu0 0
      %749 = vmatprep.subr.bf16.mxu0 0
      %750 = vmatpush2.bf16.msra.mxu0 0
      %751 = vmatprep.subr.bf16.mxu0 0
      %752 = vmatpush2.bf16.msra.mxu0 0
      %753 = vmatprep.subr.bf16.mxu0 0
      %754 = vmatpush2.bf16.msra.mxu0 0
      %755 = vmatprep.subr.bf16.mxu0 0
      %756 = vmatpush2.bf16.msra.mxu0 0
      %757 = vmatprep.subr.bf16.mxu0 0
      %758 = vmatpush2.bf16.msra.mxu0 0
      %759 = vmatprep.subr.bf16.mxu0 0
      %760 = vmatpush2.bf16.msra.mxu0 0
      %761 = vmatprep.subr.bf16.mxu0 0
      %762 = vmatpush2.bf16.msra.mxu0 0
      %763 = vmatprep.mubr.bf16.mxu0 0
      %764 = vmatmul.mubr.bf16.gmra.mxu0 %v644
      %v765 = vpop.f32.mrf.mxu0
      %v766 = vadd.f32 %v681, %v765
      %v767 = vpop.f32.mrf.mxu0
      %v768 = vpop.f32.mrf.mxu0
      %v769 = vadd.f32 %v681, %v768
      %v770 = vpop.f32.mrf.mxu0
      %771 = vmatprep.mubr.bf16.mxu0 0
      %772 = vmatmul.mubr.bf16.gmra.mxu0 %v645
      %v773 = vpop.f32.mrf.mxu0
      %v774 = vadd.f32 %v681, %v773
      %v775 = vpop.f32.mrf.mxu0
      %v776 = vpop.f32.mrf.mxu0
      %v777 = vadd.f32 %v681, %v776
      %v778 = vpop.f32.mrf.mxu0
      %779 = vmatprep.mubr.bf16.mxu0 0
      %780 = vmatmul.mubr.bf16.gmra.mxu0 %v646
      %v781 = vpop.f32.mrf.mxu0
      %v782 = vadd.f32 %v681, %v781
      %v783 = vpop.f32.mrf.mxu0
      %v784 = vpop.f32.mrf.mxu0
      %v785 = vadd.f32 %v681, %v784
      %v786 = vpop.f32.mrf.mxu0
      %787 = vmatprep.mubr.bf16.mxu0 0
      %788 = vmatmul.mubr.bf16.gmra.mxu0 %v647
      %v789 = vpop.f32.mrf.mxu0
      %v790 = vadd.f32 %v681, %v789
      %v791 = vpop.f32.mrf.mxu0
      %v792 = vpop.f32.mrf.mxu0
      %v793 = vadd.f32 %v681, %v792
      %v794 = vpop.f32.mrf.mxu0
      %795 = vmatprep.mubr.bf16.mxu0 0
      %796 = vmatmul.mubr.bf16.gmra.mxu0 %v648
      %v797 = vpop.f32.mrf.mxu0
      %v798 = vadd.f32 %v681, %v797
      %v799 = vpop.f32.mrf.mxu0
      %v800 = vpop.f32.mrf.mxu0
      %v801 = vadd.f32 %v681, %v800
      %v802 = vpop.f32.mrf.mxu0
      %803 = vmatprep.mubr.bf16.mxu0 0
      %804 = vmatmul.mubr.bf16.gmra.mxu0 %v649
      %v805 = vpop.f32.mrf.mxu0
      %v806 = vadd.f32 %v681, %v805
      %v807 = vpop.f32.mrf.mxu0
      %v808 = vpop.f32.mrf.mxu0
      %v809 = vadd.f32 %v681, %v808
      %v810 = vpop.f32.mrf.mxu0
      %811 = vmatprep.mubr.bf16.mxu0 0
      %812 = vmatmul.mubr.bf16.gmra.mxu0 %v650
      %v813 = vpop.f32.mrf.mxu0
      %v814 = vadd.f32 %v681, %v813
      %v815 = vpop.f32.mrf.mxu0
      %v816 = vpop.f32.mrf.mxu0
      %v817 = vadd.f32 %v681, %v816
      %v818 = vpop.f32.mrf.mxu0
      %819 = vmatprep.mubr.bf16.mxu0 0
      %820 = vmatmul.mubr.bf16.gmra.mxu0 %v651
      %v821 = vpop.f32.mrf.mxu0
      %v822 = vadd.f32 %v681, %v821
      %v823 = vpop.f32.mrf.mxu0
      %v824 = vpop.f32.mrf.mxu0
      %v825 = vadd.f32 %v681, %v824
      %v826 = vpop.f32.mrf.mxu0
      %827 = vmatprep.mubr.bf16.mxu0 0
      %828 = vmatmul.mubr.bf16.gmra.mxu0 %v652
      %v829 = vpop.f32.mrf.mxu0
      %v830 = vadd.f32 %v681, %v829
      %v831 = vpop.f32.mrf.mxu0
      %v832 = vpop.f32.mrf.mxu0
      %v833 = vadd.f32 %v681, %v832
      %v834 = vpop.f32.mrf.mxu0
      %835 = vmatprep.mubr.bf16.mxu0 0
      %836 = vmatmul.mubr.bf16.gmra.mxu0 %v653
      %v837 = vpop.f32.mrf.mxu0
      %v838 = vadd.f32 %v681, %v837
      %v839 = vpop.f32.mrf.mxu0
      %v840 = vpop.f32.mrf.mxu0
      %v841 = vadd.f32 %v681, %v840
      %v842 = vpop.f32.mrf.mxu0
      %843 = vmatprep.mubr.bf16.mxu0 0
      %844 = vmatmul.mubr.bf16.gmra.mxu0 %v654
      %v845 = vpop.f32.mrf.mxu0
      %v846 = vadd.f32 %v681, %v845
      %v847 = vpop.f32.mrf.mxu0
      %v848 = vpop.f32.mrf.mxu0
      %v849 = vadd.f32 %v681, %v848
      %v850 = vpop.f32.mrf.mxu0
      %851 = vmatprep.mubr.bf16.mxu0 0
      %852 = vmatmul.mubr.bf16.gmra.mxu0 %v655
      %v853 = vpop.f32.mrf.mxu0
      %v854 = vadd.f32 %v681, %v853
      %v855 = vpop.f32.mrf.mxu0
      %v856 = vpop.f32.mrf.mxu0
      %v857 = vadd.f32 %v681, %v856
      %v858 = vpop.f32.mrf.mxu0
      %859 = vmatprep.mubr.bf16.mxu0 0
      %860 = vmatmul.mubr.bf16.gmra.mxu0 %v656
      %v861 = vpop.f32.mrf.mxu0
      %v862 = vadd.f32 %v681, %v861
      %v863 = vpop.f32.mrf.mxu0
      %v864 = vpop.f32.mrf.mxu0
      %v865 = vadd.f32 %v681, %v864
      %v866 = vpop.f32.mrf.mxu0
      %867 = vmatprep.mubr.bf16.mxu0 0
      %868 = vmatmul.mubr.bf16.gmra.mxu0 %v657
      %v869 = vpop.f32.mrf.mxu0
      %v870 = vadd.f32 %v681, %v869
      %v871 = vpop.f32.mrf.mxu0
      %v872 = vpop.f32.mrf.mxu0
      %v873 = vadd.f32 %v681, %v872
      %v874 = vpop.f32.mrf.mxu0
      %875 = vmatprep.mubr.bf16.mxu0 0
      %876 = vmatmul.mubr.bf16.gmra.mxu0 %v658
      %v877 = vpop.f32.mrf.mxu0
      %v878 = vadd.f32 %v681, %v877
      %v879 = vpop.f32.mrf.mxu0
      %v880 = vpop.f32.mrf.mxu0
      %v881 = vadd.f32 %v681, %v880
      %v882 = vpop.f32.mrf.mxu0
      %883 = vmatprep.mubr.bf16.mxu0 0
      %884 = vmatmul.mubr.bf16.gmra.mxu0 %v659
      %v885 = vpop.f32.mrf.mxu0
      %v886 = vadd.f32 %v681, %v885
      %v887 = vpop.f32.mrf.mxu0
      %v888 = vpop.f32.mrf.mxu0
      %v889 = vadd.f32 %v681, %v888
      %v890 = vpop.f32.mrf.mxu0
      %891 = vdwg.mxu0
      %892 = vadd.xlane.f32.xlu0 %v766
      %v893 = vpop.xlane.xlu0 %892
      %894 = vadd.xlane.f32.xlu0 %v769
      %v895 = vpop.xlane.xlu0 %894
      %896 = vadd.xlane.f32.xlu0 %v774
      %v897 = vpop.xlane.xlu0 %896
      %898 = vadd.xlane.f32.xlu0 %v777
      %v899 = vpop.xlane.xlu0 %898
      %900 = vadd.xlane.f32.xlu0 %v782
      %v901 = vpop.xlane.xlu0 %900
      %902 = vadd.xlane.f32.xlu0 %v785
      %v903 = vpop.xlane.xlu0 %902
      %904 = vadd.xlane.f32.xlu0 %v790
      %v905 = vpop.xlane.xlu0 %904
      %906 = vadd.xlane.f32.xlu0 %v793
      %v907 = vpop.xlane.xlu0 %906
      %908 = vadd.xlane.f32.xlu0 %v798
      %v909 = vpop.xlane.xlu0 %908
      %910 = vadd.xlane.f32.xlu0 %v801
      %v911 = vpop.xlane.xlu0 %910
      %912 = vadd.xlane.f32.xlu0 %v806
      %v913 = vpop.xlane.xlu0 %912
      %914 = vadd.xlane.f32.xlu0 %v809
      %v915 = vpop.xlane.xlu0 %914
      %916 = vadd.xlane.f32.xlu0 %v814
      %v917 = vpop.xlane.xlu0 %916
      %918 = vadd.xlane.f32.xlu0 %v817
      %v919 = vpop.xlane.xlu0 %918
      %920 = vadd.xlane.f32.xlu0 %v822
      %v921 = vpop.xlane.xlu0 %920
      %922 = vadd.xlane.f32.xlu0 %v825
      %v923 = vpop.xlane.xlu0 %922
      %924 = vadd.xlane.f32.xlu0 %v830
      %v925 = vpop.xlane.xlu0 %924
      %926 = vadd.xlane.f32.xlu0 %v833
      %v927 = vpop.xlane.xlu0 %926
      %928 = vadd.xlane.f32.xlu0 %v838
      %v929 = vpop.xlane.xlu0 %928
      %930 = vadd.xlane.f32.xlu0 %v841
      %v931 = vpop.xlane.xlu0 %930
      %932 = vadd.xlane.f32.xlu0 %v846
      %v933 = vpop.xlane.xlu0 %932
      %934 = vadd.xlane.f32.xlu0 %v849
      %v935 = vpop.xlane.xlu0 %934
      %936 = vadd.xlane.f32.xlu0 %v854
      %v937 = vpop.xlane.xlu0 %936
      %938 = vadd.xlane.f32.xlu0 %v857
      %v939 = vpop.xlane.xlu0 %938
      %940 = vadd.xlane.f32.xlu0 %v862
      %v941 = vpop.xlane.xlu0 %940
      %942 = vadd.xlane.f32.xlu0 %v865
      %v943 = vpop.xlane.xlu0 %942
      %944 = vadd.xlane.f32.xlu0 %v870
      %v945 = vpop.xlane.xlu0 %944
      %946 = vadd.xlane.f32.xlu0 %v873
      %v947 = vpop.xlane.xlu0 %946
      %948 = vadd.xlane.f32.xlu0 %v878
      %v949 = vpop.xlane.xlu0 %948
      %950 = vadd.xlane.f32.xlu0 %v881
      %v951 = vpop.xlane.xlu0 %950
      %952 = vadd.xlane.f32.xlu0 %v886
      %v953 = vpop.xlane.xlu0 %952
      %954 = vadd.xlane.f32.xlu0 %v889
      %v955 = vpop.xlane.xlu0 %954
      %v956 = vrcp.pop 128.0
      %v957 = vmul.f32 %v893, %v956
      %v958 = vmul.f32 %v895, %v956
      %v959 = vmul.f32 %v897, %v956
      %v960 = vmul.f32 %v899, %v956
      %v961 = vmul.f32 %v901, %v956
      %v962 = vmul.f32 %v903, %v956
      %v963 = vmul.f32 %v905, %v956
      %v964 = vmul.f32 %v907, %v956
      %v965 = vmul.f32 %v909, %v956
      %v966 = vmul.f32 %v911, %v956
      %v967 = vmul.f32 %v913, %v956
      %v968 = vmul.f32 %v915, %v956
      %v969 = vmul.f32 %v917, %v956
      %v970 = vmul.f32 %v919, %v956
      %v971 = vmul.f32 %v921, %v956
      %v972 = vmul.f32 %v923, %v956
      %v973 = vmul.f32 %v925, %v956
      %v974 = vmul.f32 %v927, %v956
      %v975 = vmul.f32 %v929, %v956
      %v976 = vmul.f32 %v931, %v956
      %v977 = vmul.f32 %v933, %v956
      %v978 = vmul.f32 %v935, %v956
      %v979 = vmul.f32 %v937, %v956
      %v980 = vmul.f32 %v939, %v956
      %v981 = vmul.f32 %v941, %v956
      %v982 = vmul.f32 %v943, %v956
      %v983 = vmul.f32 %v945, %v956
      %v984 = vmul.f32 %v947, %v956
      %v985 = vmul.f32 %v949, %v956
      %v986 = vmul.f32 %v951, %v956
      %v987 = vmul.f32 %v953, %v956
      %v988 = vmul.f32 %v955, %v956
      %v989 = vsub.f32 %v766, %v957
      %v990 = vsub.f32 %v769, %v958
      %v991 = vsub.f32 %v774, %v959
      %v992 = vsub.f32 %v777, %v960
      %v993 = vsub.f32 %v782, %v961
      %v994 = vsub.f32 %v785, %v962
      %v995 = vsub.f32 %v790, %v963
      %v996 = vsub.f32 %v793, %v964
      %v997 = vsub.f32 %v798, %v965
      %v998 = vsub.f32 %v801, %v966
      %v999 = vsub.f32 %v806, %v967
      %v1000 = vsub.f32 %v809, %v968
      %v1001 = vsub.f32 %v814, %v969
      %v1002 = vsub.f32 %v817, %v970
      %v1003 = vsub.f32 %v822, %v971
      %v1004 = vsub.f32 %v825, %v972
      %v1005 = vsub.f32 %v830, %v973
      %v1006 = vsub.f32 %v833, %v974
      %v1007 = vsub.f32 %v838, %v975
      %v1008 = vsub.f32 %v841, %v976
      %v1009 = vsub.f32 %v846, %v977
      %v1010 = vsub.f32 %v849, %v978
      %v1011 = vsub.f32 %v854, %v979
      %v1012 = vsub.f32 %v857, %v980
      %v1013 = vsub.f32 %v862, %v981
      %v1014 = vsub.f32 %v865, %v982
      %v1015 = vsub.f32 %v870, %v983
      %v1016 = vsub.f32 %v873, %v984
      %v1017 = vsub.f32 %v878, %v985
      %v1018 = vsub.f32 %v881, %v986
      %v1019 = vsub.f32 %v886, %v987
      %v1020 = vsub.f32 %v889, %v988
      %v1021 = vmul.f32 %v989, %v989
      %v1022 = vmul.f32 %v990, %v990
      %v1023 = vmul.f32 %v991, %v991
      %v1024 = vmul.f32 %v992, %v992
      %v1025 = vmul.f32 %v993, %v993
      %v1026 = vmul.f32 %v994, %v994
      %v1027 = vmul.f32 %v995, %v995
      %v1028 = vmul.f32 %v996, %v996
      %v1029 = vmul.f32 %v997, %v997
      %v1030 = vmul.f32 %v998, %v998
      %v1031 = vmul.f32 %v999, %v999
      %v1032 = vmul.f32 %v1000, %v1000
      %v1033 = vmul.f32 %v1001, %v1001
      %v1034 = vmul.f32 %v1002, %v1002
      %v1035 = vmul.f32 %v1003, %v1003
      %v1036 = vmul.f32 %v1004, %v1004
      %v1037 = vmul.f32 %v1005, %v1005
      %v1038 = vmul.f32 %v1006, %v1006
      %v1039 = vmul.f32 %v1007, %v1007
      %v1040 = vmul.f32 %v1008, %v1008
      %v1041 = vmul.f32 %v1009, %v1009
      %v1042 = vmul.f32 %v1010, %v1010
      %v1043 = vmul.f32 %v1011, %v1011
      %v1044 = vmul.f32 %v1012, %v1012
      %v1045 = vmul.f32 %v1013, %v1013
      %v1046 = vmul.f32 %v1014, %v1014
      %v1047 = vmul.f32 %v1015, %v1015
      %v1048 = vmul.f32 %v1016, %v1016
      %v1049 = vmul.f32 %v1017, %v1017
      %v1050 = vmul.f32 %v1018, %v1018
      %v1051 = vmul.f32 %v1019, %v1019
      %v1052 = vmul.f32 %v1020, %v1020
      %1053 = vadd.xlane.f32.xlu0 %v1021
      %v1054 = vpop.xlane.xlu0 %1053
      %1055 = vadd.xlane.f32.xlu0 %v1022
      %v1056 = vpop.xlane.xlu0 %1055
      %1057 = vadd.xlane.f32.xlu0 %v1023
      %v1058 = vpop.xlane.xlu0 %1057
      %1059 = vadd.xlane.f32.xlu0 %v1024
      %v1060 = vpop.xlane.xlu0 %1059
      %1061 = vadd.xlane.f32.xlu0 %v1025
      %v1062 = vpop.xlane.xlu0 %1061
      %1063 = vadd.xlane.f32.xlu0 %v1026
      %v1064 = vpop.xlane.xlu0 %1063
      %1065 = vadd.xlane.f32.xlu0 %v1027
      %v1066 = vpop.xlane.xlu0 %1065
      %1067 = vadd.xlane.f32.xlu0 %v1028
      %v1068 = vpop.xlane.xlu0 %1067
      %1069 = vadd.xlane.f32.xlu0 %v1029
      %v1070 = vpop.xlane.xlu0 %1069
      %1071 = vadd.xlane.f32.xlu0 %v1030
      %v1072 = vpop.xlane.xlu0 %1071
      %1073 = vadd.xlane.f32.xlu0 %v1031
      %v1074 = vpop.xlane.xlu0 %1073
      %1075 = vadd.xlane.f32.xlu0 %v1032
      %v1076 = vpop.xlane.xlu0 %1075
      %1077 = vadd.xlane.f32.xlu0 %v1033
      %v1078 = vpop.xlane.xlu0 %1077
      %1079 = vadd.xlane.f32.xlu0 %v1034
      %v1080 = vpop.xlane.xlu0 %1079
      %1081 = vadd.xlane.f32.xlu0 %v1035
      %v1082 = vpop.xlane.xlu0 %1081
      %1083 = vadd.xlane.f32.xlu0 %v1036
      %v1084 = vpop.xlane.xlu0 %1083
      %1085 = vadd.xlane.f32.xlu0 %v1037
      %v1086 = vpop.xlane.xlu0 %1085
      %1087 = vadd.xlane.f32.xlu0 %v1038
      %v1088 = vpop.xlane.xlu0 %1087
      %1089 = vadd.xlane.f32.xlu0 %v1039
      %v1090 = vpop.xlane.xlu0 %1089
      %1091 = vadd.xlane.f32.xlu0 %v1040
      %v1092 = vpop.xlane.xlu0 %1091
      %1093 = vadd.xlane.f32.xlu0 %v1041
      %v1094 = vpop.xlane.xlu0 %1093
      %1095 = vadd.xlane.f32.xlu0 %v1042
      %v1096 = vpop.xlane.xlu0 %1095
      %1097 = vadd.xlane.f32.xlu0 %v1043
      %v1098 = vpop.xlane.xlu0 %1097
      %1099 = vadd.xlane.f32.xlu0 %v1044
      %v1100 = vpop.xlane.xlu0 %1099
      %1101 = vadd.xlane.f32.xlu0 %v1045
      %v1102 = vpop.xlane.xlu0 %1101
      %1103 = vadd.xlane.f32.xlu0 %v1046
      %v1104 = vpop.xlane.xlu0 %1103
      %1105 = vadd.xlane.f32.xlu0 %v1047
      %v1106 = vpop.xlane.xlu0 %1105
      %1107 = vadd.xlane.f32.xlu0 %v1048
      %v1108 = vpop.xlane.xlu0 %1107
      %1109 = vadd.xlane.f32.xlu0 %v1049
      %v1110 = vpop.xlane.xlu0 %1109
      %1111 = vadd.xlane.f32.xlu0 %v1050
      %v1112 = vpop.xlane.xlu0 %1111
      %1113 = vadd.xlane.f32.xlu0 %v1051
      %v1114 = vpop.xlane.xlu0 %1113
      %1115 = vadd.xlane.f32.xlu0 %v1052
      %v1116 = vpop.xlane.xlu0 %1115
      %v1117 = vmul.f32 %v1054, %v956
      %v1118 = vmul.f32 %v1056, %v956
      %v1119 = vmul.f32 %v1058, %v956
      %v1120 = vmul.f32 %v1060, %v956
      %v1121 = vmul.f32 %v1062, %v956
      %v1122 = vmul.f32 %v1064, %v956
      %v1123 = vmul.f32 %v1066, %v956
      %v1124 = vmul.f32 %v1068, %v956
      %v1125 = vmul.f32 %v1070, %v956
      %v1126 = vmul.f32 %v1072, %v956
      %v1127 = vmul.f32 %v1074, %v956
      %v1128 = vmul.f32 %v1076, %v956
      %v1129 = vmul.f32 %v1078, %v956
      %v1130 = vmul.f32 %v1080, %v956
      %v1131 = vmul.f32 %v1082, %v956
      %v1132 = vmul.f32 %v1084, %v956
      %v1133 = vmul.f32 %v1086, %v956
      %v1134 = vmul.f32 %v1088, %v956
      %v1135 = vmul.f32 %v1090, %v956
      %v1136 = vmul.f32 %v1092, %v956
      %v1137 = vmul.f32 %v1094, %v956
      %v1138 = vmul.f32 %v1096, %v956
      %v1139 = vmul.f32 %v1098, %v956
      %v1140 = vmul.f32 %v1100, %v956
      %v1141 = vmul.f32 %v1102, %v956
      %v1142 = vmul.f32 %v1104, %v956
      %v1143 = vmul.f32 %v1106, %v956
      %v1144 = vmul.f32 %v1108, %v956
      %v1145 = vmul.f32 %v1110, %v956
      %v1146 = vmul.f32 %v1112, %v956
      %v1147 = vmul.f32 %v1114, %v956
      %v1148 = vmul.f32 %v1116, %v956
      %v1149 = vadd.f32 %v1117, 1e-05
      %v1150 = vadd.f32 %v1118, 1e-05
      %v1151 = vadd.f32 %v1119, 1e-05
      %v1152 = vadd.f32 %v1120, 1e-05
      %v1153 = vadd.f32 %v1121, 1e-05
      %v1154 = vadd.f32 %v1122, 1e-05
      %v1155 = vadd.f32 %v1123, 1e-05
      %v1156 = vadd.f32 %v1124, 1e-05
      %v1157 = vadd.f32 %v1125, 1e-05
      %v1158 = vadd.f32 %v1126, 1e-05
      %v1159 = vadd.f32 %v1127, 1e-05
      %v1160 = vadd.f32 %v1128, 1e-05
      %v1161 = vadd.f32 %v1129, 1e-05
      %v1162 = vadd.f32 %v1130, 1e-05
      %v1163 = vadd.f32 %v1131, 1e-05
      %v1164 = vadd.f32 %v1132, 1e-05
      %v1165 = vadd.f32 %v1133, 1e-05
      %v1166 = vadd.f32 %v1134, 1e-05
      %v1167 = vadd.f32 %v1135, 1e-05
      %v1168 = vadd.f32 %v1136, 1e-05
      %v1169 = vadd.f32 %v1137, 1e-05
      %v1170 = vadd.f32 %v1138, 1e-05
      %v1171 = vadd.f32 %v1139, 1e-05
      %v1172 = vadd.f32 %v1140, 1e-05
      %v1173 = vadd.f32 %v1141, 1e-05
      %v1174 = vadd.f32 %v1142, 1e-05
      %v1175 = vadd.f32 %v1143, 1e-05
      %v1176 = vadd.f32 %v1144, 1e-05
      %v1177 = vadd.f32 %v1145, 1e-05
      %v1178 = vadd.f32 %v1146, 1e-05
      %v1179 = vadd.f32 %v1147, 1e-05
      %v1180 = vadd.f32 %v1148, 1e-05
      %v1181 = vrsqrt.pop %v1149
      %v1182 = vrsqrt.pop %v1150
      %v1183 = vrsqrt.pop %v1151
      %v1184 = vrsqrt.pop %v1152
      %v1185 = vrsqrt.pop %v1153
      %v1186 = vrsqrt.pop %v1154
      %v1187 = vrsqrt.pop %v1155
      %v1188 = vrsqrt.pop %v1156
      %v1189 = vrsqrt.pop %v1157
      %v1190 = vrsqrt.pop %v1158
      %v1191 = vrsqrt.pop %v1159
      %v1192 = vrsqrt.pop %v1160
      %v1193 = vrsqrt.pop %v1161
      %v1194 = vrsqrt.pop %v1162
      %v1195 = vrsqrt.pop %v1163
      %v1196 = vrsqrt.pop %v1164
      %v1197 = vrsqrt.pop %v1165
      %v1198 = vrsqrt.pop %v1166
      %v1199 = vrsqrt.pop %v1167
      %v1200 = vrsqrt.pop %v1168
      %v1201 = vrsqrt.pop %v1169
      %v1202 = vrsqrt.pop %v1170
      %v1203 = vrsqrt.pop %v1171
      %v1204 = vrsqrt.pop %v1172
      %v1205 = vrsqrt.pop %v1173
      %v1206 = vrsqrt.pop %v1174
      %v1207 = vrsqrt.pop %v1175
      %v1208 = vrsqrt.pop %v1176
      %v1209 = vrsqrt.pop %v1177
      %v1210 = vrsqrt.pop %v1178
      %v1211 = vrsqrt.pop %v1179
      %v1212 = vrsqrt.pop %v1180
      %v1213 = vmul.f32 %v989, %v1181
      %v1214 = vmul.f32 %v990, %v1182
      %v1215 = vmul.f32 %v991, %v1183
      %v1216 = vmul.f32 %v992, %v1184
      %v1217 = vmul.f32 %v993, %v1185
      %v1218 = vmul.f32 %v994, %v1186
      %v1219 = vmul.f32 %v995, %v1187
      %v1220 = vmul.f32 %v996, %v1188
      %v1221 = vmul.f32 %v997, %v1189
      %v1222 = vmul.f32 %v998, %v1190
      %v1223 = vmul.f32 %v999, %v1191
      %v1224 = vmul.f32 %v1000, %v1192
      %v1225 = vmul.f32 %v1001, %v1193
      %v1226 = vmul.f32 %v1002, %v1194
      %v1227 = vmul.f32 %v1003, %v1195
      %v1228 = vmul.f32 %v1004, %v1196
      %v1229 = vmul.f32 %v1005, %v1197
      %v1230 = vmul.f32 %v1006, %v1198
      %v1231 = vmul.f32 %v1007, %v1199
      %v1232 = vmul.f32 %v1008, %v1200
      %v1233 = vmul.f32 %v1009, %v1201
      %v1234 = vmul.f32 %v1010, %v1202
      %v1235 = vmul.f32 %v1011, %v1203
      %v1236 = vmul.f32 %v1012, %v1204
      %v1237 = vmul.f32 %v1013, %v1205
      %v1238 = vmul.f32 %v1014, %v1206
      %v1239 = vmul.f32 %v1015, %v1207
      %v1240 = vmul.f32 %v1016, %v1208
      %v1241 = vmul.f32 %v1017, %v1209
      %v1242 = vmul.f32 %v1018, %v1210
      %v1243 = vmul.f32 %v1019, %v1211
      %v1244 = vmul.f32 %v1020, %v1212
      %v1245 = vld [vmem:[%s3] sm:$0x1]
      %v1247 = vlaneseq
      %v1248 = vshrl.u32 %v1247, 7
      %v1249 = vsub.s32 0, %v1248
      %v1250 = vrot.slane %v1245, %v1249
      %v1252 = vmul.f32 %v1213, %v1250
      %v1253 = vmul.f32 %v1214, %v1250
      %v1254 = vmul.f32 %v1215, %v1250
      %v1255 = vmul.f32 %v1216, %v1250
      %v1256 = vmul.f32 %v1217, %v1250
      %v1257 = vmul.f32 %v1218, %v1250
      %v1258 = vmul.f32 %v1219, %v1250
      %v1259 = vmul.f32 %v1220, %v1250
      %v1260 = vmul.f32 %v1221, %v1250
      %v1261 = vmul.f32 %v1222, %v1250
      %v1262 = vmul.f32 %v1223, %v1250
      %v1263 = vmul.f32 %v1224, %v1250
      %v1264 = vmul.f32 %v1225, %v1250
      %v1265 = vmul.f32 %v1226, %v1250
      %v1266 = vmul.f32 %v1227, %v1250
      %v1267 = vmul.f32 %v1228, %v1250
      %v1268 = vmul.f32 %v1229, %v1250
      %v1269 = vmul.f32 %v1230, %v1250
      %v1270 = vmul.f32 %v1231, %v1250
      %v1271 = vmul.f32 %v1232, %v1250
      %v1272 = vmul.f32 %v1233, %v1250
      %v1273 = vmul.f32 %v1234, %v1250
      %v1274 = vmul.f32 %v1235, %v1250
      %v1275 = vmul.f32 %v1236, %v1250
      %v1276 = vmul.f32 %v1237, %v1250
      %v1277 = vmul.f32 %v1238, %v1250
      %v1278 = vmul.f32 %v1239, %v1250
      %v1279 = vmul.f32 %v1240, %v1250
      %v1280 = vmul.f32 %v1241, %v1250
      %v1281 = vmul.f32 %v1242, %v1250
      %v1282 = vmul.f32 %v1243, %v1250
      %v1283 = vmul.f32 %v1244, %v1250
      %v1284 = vld [vmem:[%s4] sm:$0x1]
      %v1286 = vlaneseq
      %v1287 = vshrl.u32 %v1286, 7
      %v1288 = vsub.s32 0, %v1287
      %v1289 = vrot.slane %v1284, %v1288
      %v1291 = vadd.f32 %v1252, %v1289
      %v1292 = vadd.f32 %v1253, %v1289
      %v1293 = vadd.f32 %v1254, %v1289
      %v1294 = vadd.f32 %v1255, %v1289
      %v1295 = vadd.f32 %v1256, %v1289
      %v1296 = vadd.f32 %v1257, %v1289
      %v1297 = vadd.f32 %v1258, %v1289
      %v1298 = vadd.f32 %v1259, %v1289
      %v1299 = vadd.f32 %v1260, %v1289
      %v1300 = vadd.f32 %v1261, %v1289
      %v1301 = vadd.f32 %v1262, %v1289
      %v1302 = vadd.f32 %v1263, %v1289
      %v1303 = vadd.f32 %v1264, %v1289
      %v1304 = vadd.f32 %v1265, %v1289
      %v1305 = vadd.f32 %v1266, %v1289
      %v1306 = vadd.f32 %v1267, %v1289
      %v1307 = vadd.f32 %v1268, %v1289
      %v1308 = vadd.f32 %v1269, %v1289
      %v1309 = vadd.f32 %v1270, %v1289
      %v1310 = vadd.f32 %v1271, %v1289
      %v1311 = vadd.f32 %v1272, %v1289
      %v1312 = vadd.f32 %v1273, %v1289
      %v1313 = vadd.f32 %v1274, %v1289
      %v1314 = vadd.f32 %v1275, %v1289
      %v1315 = vadd.f32 %v1276, %v1289
      %v1316 = vadd.f32 %v1277, %v1289
      %v1317 = vadd.f32 %v1278, %v1289
      %v1318 = vadd.f32 %v1279, %v1289
      %v1319 = vadd.f32 %v1280, %v1289
      %v1320 = vadd.f32 %v1281, %v1289
      %v1321 = vadd.f32 %v1282, %v1289
      %v1322 = vadd.f32 %v1283, %v1289
      %v1323 = vpack.c.bf16 %v1292, %v1291
      %v1324 = vpack.c.bf16 %v1294, %v1293
      %v1325 = vpack.c.bf16 %v1296, %v1295
      %v1326 = vpack.c.bf16 %v1298, %v1297
      %v1327 = vpack.c.bf16 %v1300, %v1299
      %v1328 = vpack.c.bf16 %v1302, %v1301
      %v1329 = vpack.c.bf16 %v1304, %v1303
      %v1330 = vpack.c.bf16 %v1306, %v1305
      %v1331 = vpack.c.bf16 %v1308, %v1307
      %v1332 = vpack.c.bf16 %v1310, %v1309
      %v1333 = vpack.c.bf16 %v1312, %v1311
      %v1334 = vpack.c.bf16 %v1314, %v1313
      %v1335 = vpack.c.bf16 %v1316, %v1315
      %v1336 = vpack.c.bf16 %v1318, %v1317
      %v1337 = vpack.c.bf16 %v1320, %v1319
      %v1338 = vpack.c.bf16 %v1322, %v1321
      %v1339 = vld [vmem:[%s5] sm:$0xff]
      %v1340 = vld [vmem:[%s5 + $0x8] sm:$0xf]
      %v1341 = vld [vmem:[%s5 + $0xc] sm:$0xff]
      %v1342 = vld [vmem:[%s5 + $0x14] sm:$0xf]
      %v1343 = vld [vmem:[%s5 + $0x18] sm:$0xff]
      %v1344 = vld [vmem:[%s5 + $0x20] sm:$0xf]
      %v1345 = vld [vmem:[%s5 + $0x24] sm:$0xff]
      %v1346 = vld [vmem:[%s5 + $0x2c] sm:$0xf]
      %v1347 = vld [vmem:[%s5 + $0x30] sm:$0xff]
      %v1348 = vld [vmem:[%s5 + $0x38] sm:$0xf]
      %v1349 = vld [vmem:[%s5 + $0x3c] sm:$0xff]
      %v1350 = vld [vmem:[%s5 + $0x44] sm:$0xf]
      %v1351 = vld [vmem:[%s5 + $0x48] sm:$0xff]
      %v1352 = vld [vmem:[%s5 + $0x50] sm:$0xf]
      %v1353 = vld [vmem:[%s5 + $0x54] sm:$0xff]
      %v1354 = vld [vmem:[%s5 + $0x5c] sm:$0xf]
      %v1355 = vld [vmem:[%s5 + $0x60] sm:$0xff]
      %v1356 = vld [vmem:[%s5 + $0x68] sm:$0xf]
      %v1357 = vld [vmem:[%s5 + $0x6c] sm:$0xff]
      %v1358 = vld [vmem:[%s5 + $0x74] sm:$0xf]
      %v1359 = vld [vmem:[%s5 + $0x78] sm:$0xff]
      %v1360 = vld [vmem:[%s5 + $0x80] sm:$0xf]
      %v1361 = vld [vmem:[%s5 + $0x84] sm:$0xff]
      %v1362 = vld [vmem:[%s5 + $0x8c] sm:$0xf]
      %v1363 = vld [vmem:[%s5 + $0x90] sm:$0xff]
      %v1364 = vld [vmem:[%s5 + $0x98] sm:$0xf]
      %v1365 = vld [vmem:[%s5 + $0x9c] sm:$0xff]
      %v1366 = vld [vmem:[%s5 + $0xa4] sm:$0xf]
      %v1367 = vld [vmem:[%s5 + $0xa8] sm:$0xff]
      %v1368 = vld [vmem:[%s5 + $0xb0] sm:$0xf]
      %v1369 = vld [vmem:[%s5 + $0xb4] sm:$0xff]
      %v1370 = vld [vmem:[%s5 + $0xbc] sm:$0xf]
      %v1371 = vld [vmem:[%s6] sm:$0x7]
      %v1373 = vlaneseq
      %v1374 = vshrl.u32 %v1373, 7
      %v1375 = vsub.s32 0, %v1374
      %v1376 = vrot.slane %v1371, %v1375
      %v1377 = vlaneseq
      %v1378 = vshrl.u32 %v1377, 7
      %v1379 = vsub.s32 1, %v1378
      %v1380 = vrot.slane %v1371, %v1379
      %v1381 = vlaneseq
      %v1382 = vshrl.u32 %v1381, 7
      %v1383 = vsub.s32 2, %v1382
      %v1384 = vrot.slane %v1371, %v1383
      %v1420 = vunpack.c.l.b16 %v1339
      %v1421 = vunpack.c.h.b16 %v1339
      %v1422 = vunpack.c.l.b16 %v1340
      %v1423 = vunpack.c.l.b16 %v1341
      %v1424 = vunpack.c.h.b16 %v1341
      %v1425 = vunpack.c.l.b16 %v1342
      %v1426 = vunpack.c.l.b16 %v1343
      %v1427 = vunpack.c.h.b16 %v1343
      %v1428 = vunpack.c.l.b16 %v1344
      %v1429 = vunpack.c.l.b16 %v1345
      %v1430 = vunpack.c.h.b16 %v1345
      %v1431 = vunpack.c.l.b16 %v1346
      %v1432 = vunpack.c.l.b16 %v1347
      %v1433 = vunpack.c.h.b16 %v1347
      %v1434 = vunpack.c.l.b16 %v1348
      %v1435 = vunpack.c.l.b16 %v1349
      %v1436 = vunpack.c.h.b16 %v1349
      %v1437 = vunpack.c.l.b16 %v1350
      %v1438 = vunpack.c.l.b16 %v1351
      %v1439 = vunpack.c.h.b16 %v1351
      %v1440 = vunpack.c.l.b16 %v1352
      %v1441 = vunpack.c.l.b16 %v1353
      %v1442 = vunpack.c.h.b16 %v1353
      %v1443 = vunpack.c.l.b16 %v1354
      %v1444 = vunpack.c.l.b16 %v1355
      %v1445 = vunpack.c.h.b16 %v1355
      %v1446 = vunpack.c.l.b16 %v1356
      %v1447 = vunpack.c.l.b16 %v1357
      %v1448 = vunpack.c.h.b16 %v1357
      %v1449 = vunpack.c.l.b16 %v1358
      %v1450 = vunpack.c.l.b16 %v1359
      %v1451 = vunpack.c.h.b16 %v1359
      %v1452 = vunpack.c.l.b16 %v1360
      %v1453 = vunpack.c.l.b16 %v1361
      %v1454 = vunpack.c.h.b16 %v1361
      %v1455 = vunpack.c.l.b16 %v1362
      %v1456 = vunpack.c.l.b16 %v1363
      %v1457 = vunpack.c.h.b16 %v1363
      %v1458 = vunpack.c.l.b16 %v1364
      %v1459 = vunpack.c.l.b16 %v1365
      %v1460 = vunpack.c.h.b16 %v1365
      %v1461 = vunpack.c.l.b16 %v1366
      %v1462 = vunpack.c.l.b16 %v1367
      %v1463 = vunpack.c.h.b16 %v1367
      %v1464 = vunpack.c.l.b16 %v1368
      %v1465 = vunpack.c.l.b16 %v1369
      %v1466 = vunpack.c.h.b16 %v1369
      %v1467 = vunpack.c.l.b16 %v1370
      %v1468 = vpack.c.b16 %v1423, %v1420
      %v1469 = vpack.c.b16 %v1424, %v1421
      %v1470 = vpack.c.b16 %v1425, %v1422
      %v1471 = vpack.c.b16 %v1429, %v1426
      %v1472 = vpack.c.b16 %v1430, %v1427
      %v1473 = vpack.c.b16 %v1431, %v1428
      %v1474 = vpack.c.b16 %v1435, %v1432
      %v1475 = vpack.c.b16 %v1436, %v1433
      %v1476 = vpack.c.b16 %v1437, %v1434
      %v1477 = vpack.c.b16 %v1441, %v1438
      %v1478 = vpack.c.b16 %v1442, %v1439
      %v1479 = vpack.c.b16 %v1443, %v1440
      %v1480 = vpack.c.b16 %v1447, %v1444
      %v1481 = vpack.c.b16 %v1448, %v1445
      %v1482 = vpack.c.b16 %v1449, %v1446
      %v1483 = vpack.c.b16 %v1453, %v1450
      %v1484 = vpack.c.b16 %v1454, %v1451
      %v1485 = vpack.c.b16 %v1455, %v1452
      %v1486 = vpack.c.b16 %v1459, %v1456
      %v1487 = vpack.c.b16 %v1460, %v1457
      %v1488 = vpack.c.b16 %v1461, %v1458
      %v1489 = vpack.c.b16 %v1465, %v1462
      %v1490 = vpack.c.b16 %v1466, %v1463
      %v1491 = vpack.c.b16 %v1467, %v1464
      %1516 = vmatprep.subr.bf16.mxu0 %v1490
      %1517 = vmatpush1.bf16.msra.mxu0 %v1489
      %1518 = vmatprep.subr.bf16.mxu0 %v1487
      %1519 = vmatpush1.bf16.msra.mxu0 %v1486
      %1520 = vmatprep.subr.bf16.mxu0 %v1484
      %1521 = vmatpush1.bf16.msra.mxu0 %v1483
      %1522 = vmatprep.subr.bf16.mxu0 %v1481
      %1523 = vmatpush1.bf16.msra.mxu0 %v1480
      %1524 = vmatprep.subr.bf16.mxu0 %v1478
      %1525 = vmatpush1.bf16.msra.mxu0 %v1477
      %1526 = vmatprep.subr.bf16.mxu0 %v1475
      %1527 = vmatpush1.bf16.msra.mxu0 %v1474
      %1528 = vmatprep.subr.bf16.mxu0 %v1472
      %1529 = vmatpush1.bf16.msra.mxu0 %v1471
      %1530 = vmatprep.subr.bf16.mxu0 %v1469
      %1531 = vmatpush1.bf16.msra.mxu0 %v1468
      %1532 = vmatprep.subr.bf16.mxu0 0
      %1533 = vmatpush2.bf16.msra.mxu0 0
      %1534 = vmatprep.subr.bf16.mxu0 0
      %1535 = vmatpush2.bf16.msra.mxu0 0
      %1536 = vmatprep.subr.bf16.mxu0 0
      %1537 = vmatpush2.bf16.msra.mxu0 0
      %1538 = vmatprep.subr.bf16.mxu0 0
      %1539 = vmatpush2.bf16.msra.mxu0 0
      %1540 = vmatprep.subr.bf16.mxu0 0
      %1541 = vmatpush2.bf16.msra.mxu0 0
      %1542 = vmatprep.subr.bf16.mxu0 0
      %1543 = vmatpush2.bf16.msra.mxu0 0
      %1544 = vmatprep.subr.bf16.mxu0 0
      %1545 = vmatpush2.bf16.msra.mxu0 0
      %1546 = vmatprep.subr.bf16.mxu0 0
      %1547 = vmatpush2.bf16.msra.mxu0 0
      %1548 = vmatprep.mubr.bf16.mxu0 0
      %1549 = vmatmul.mubr.bf16.gmra.mxu0 %v1323
      %v1550 = vpop.f32.mrf.mxu0
      %v1551 = vadd.f32 %v1376, %v1550
      %v1552 = vpop.f32.mrf.mxu0
      %v1553 = vadd.f32 %v1380, %v1552
      %v1554 = vpop.f32.mrf.mxu0
      %v1555 = vadd.f32 %v1376, %v1554
      %v1556 = vpop.f32.mrf.mxu0
      %v1557 = vadd.f32 %v1380, %v1556
      %1558 = vmatprep.mubr.bf16.mxu0 0
      %1559 = vmatmul.mubr.bf16.gmra.mxu0 %v1324
      %v1560 = vpop.f32.mrf.mxu0
      %v1561 = vadd.f32 %v1376, %v1560
      %v1562 = vpop.f32.mrf.mxu0
      %v1563 = vadd.f32 %v1380, %v1562
      %v1564 = vpop.f32.mrf.mxu0
      %v1565 = vadd.f32 %v1376, %v1564
      %v1566 = vpop.f32.mrf.mxu0
      %v1567 = vadd.f32 %v1380, %v1566
      %1568 = vmatprep.mubr.bf16.mxu0 0
      %1569 = vmatmul.mubr.bf16.gmra.mxu0 %v1325
      %v1570 = vpop.f32.mrf.mxu0
      %v1571 = vadd.f32 %v1376, %v1570
      %v1572 = vpop.f32.mrf.mxu0
      %v1573 = vadd.f32 %v1380, %v1572
      %v1574 = vpop.f32.mrf.mxu0
      %v1575 = vadd.f32 %v1376, %v1574
      %v1576 = vpop.f32.mrf.mxu0
      %v1577 = vadd.f32 %v1380, %v1576
      %1578 = vmatprep.mubr.bf16.mxu0 0
      %1579 = vmatmul.mubr.bf16.gmra.mxu0 %v1326
      %v1580 = vpop.f32.mrf.mxu0
      %v1581 = vadd.f32 %v1376, %v1580
      %v1582 = vpop.f32.mrf.mxu0
      %v1583 = vadd.f32 %v1380, %v1582
      %v1584 = vpop.f32.mrf.mxu0
      %v1585 = vadd.f32 %v1376, %v1584
      %v1586 = vpop.f32.mrf.mxu0
      %v1587 = vadd.f32 %v1380, %v1586
      %1588 = vmatprep.mubr.bf16.mxu0 0
      %1589 = vmatmul.mubr.bf16.gmra.mxu0 %v1327
      %v1590 = vpop.f32.mrf.mxu0
      %v1591 = vadd.f32 %v1376, %v1590
      %v1592 = vpop.f32.mrf.mxu0
      %v1593 = vadd.f32 %v1380, %v1592
      %v1594 = vpop.f32.mrf.mxu0
      %v1595 = vadd.f32 %v1376, %v1594
      %v1596 = vpop.f32.mrf.mxu0
      %v1597 = vadd.f32 %v1380, %v1596
      %1598 = vmatprep.mubr.bf16.mxu0 0
      %1599 = vmatmul.mubr.bf16.gmra.mxu0 %v1328
      %v1600 = vpop.f32.mrf.mxu0
      %v1601 = vadd.f32 %v1376, %v1600
      %v1602 = vpop.f32.mrf.mxu0
      %v1603 = vadd.f32 %v1380, %v1602
      %v1604 = vpop.f32.mrf.mxu0
      %v1605 = vadd.f32 %v1376, %v1604
      %v1606 = vpop.f32.mrf.mxu0
      %v1607 = vadd.f32 %v1380, %v1606
      %1608 = vmatprep.mubr.bf16.mxu0 0
      %1609 = vmatmul.mubr.bf16.gmra.mxu0 %v1329
      %v1610 = vpop.f32.mrf.mxu0
      %v1611 = vadd.f32 %v1376, %v1610
      %v1612 = vpop.f32.mrf.mxu0
      %v1613 = vadd.f32 %v1380, %v1612
      %v1614 = vpop.f32.mrf.mxu0
      %v1615 = vadd.f32 %v1376, %v1614
      %v1616 = vpop.f32.mrf.mxu0
      %v1617 = vadd.f32 %v1380, %v1616
      %1618 = vmatprep.mubr.bf16.mxu0 0
      %1619 = vmatmul.mubr.bf16.gmra.mxu0 %v1330
      %v1620 = vpop.f32.mrf.mxu0
      %v1621 = vadd.f32 %v1376, %v1620
      %v1622 = vpop.f32.mrf.mxu0
      %v1623 = vadd.f32 %v1380, %v1622
      %v1624 = vpop.f32.mrf.mxu0
      %v1625 = vadd.f32 %v1376, %v1624
      %v1626 = vpop.f32.mrf.mxu0
      %v1627 = vadd.f32 %v1380, %v1626
      %1628 = vmatprep.mubr.bf16.mxu0 0
      %1629 = vmatmul.mubr.bf16.gmra.mxu0 %v1331
      %v1630 = vpop.f32.mrf.mxu0
      %v1631 = vadd.f32 %v1376, %v1630
      %v1632 = vpop.f32.mrf.mxu0
      %v1633 = vadd.f32 %v1380, %v1632
      %v1634 = vpop.f32.mrf.mxu0
      %v1635 = vadd.f32 %v1376, %v1634
      %v1636 = vpop.f32.mrf.mxu0
      %v1637 = vadd.f32 %v1380, %v1636
      %1638 = vmatprep.mubr.bf16.mxu0 0
      %1639 = vmatmul.mubr.bf16.gmra.mxu0 %v1332
      %v1640 = vpop.f32.mrf.mxu0
      %v1641 = vadd.f32 %v1376, %v1640
      %v1642 = vpop.f32.mrf.mxu0
      %v1643 = vadd.f32 %v1380, %v1642
      %v1644 = vpop.f32.mrf.mxu0
      %v1645 = vadd.f32 %v1376, %v1644
      %v1646 = vpop.f32.mrf.mxu0
      %v1647 = vadd.f32 %v1380, %v1646
      %1648 = vmatprep.mubr.bf16.mxu0 0
      %1649 = vmatmul.mubr.bf16.gmra.mxu0 %v1333
      %v1650 = vpop.f32.mrf.mxu0
      %v1651 = vadd.f32 %v1376, %v1650
      %v1652 = vpop.f32.mrf.mxu0
      %v1653 = vadd.f32 %v1380, %v1652
      %v1654 = vpop.f32.mrf.mxu0
      %v1655 = vadd.f32 %v1376, %v1654
      %v1656 = vpop.f32.mrf.mxu0
      %v1657 = vadd.f32 %v1380, %v1656
      %1658 = vmatprep.mubr.bf16.mxu0 0
      %1659 = vmatmul.mubr.bf16.gmra.mxu0 %v1334
      %v1660 = vpop.f32.mrf.mxu0
      %v1661 = vadd.f32 %v1376, %v1660
      %v1662 = vpop.f32.mrf.mxu0
      %v1663 = vadd.f32 %v1380, %v1662
      %v1664 = vpop.f32.mrf.mxu0
      %v1665 = vadd.f32 %v1376, %v1664
      %v1666 = vpop.f32.mrf.mxu0
      %v1667 = vadd.f32 %v1380, %v1666
      %1668 = vmatprep.mubr.bf16.mxu0 0
      %1669 = vmatmul.mubr.bf16.gmra.mxu0 %v1335
      %v1670 = vpop.f32.mrf.mxu0
      %v1671 = vadd.f32 %v1376, %v1670
      %v1672 = vpop.f32.mrf.mxu0
      %v1673 = vadd.f32 %v1380, %v1672
      %v1674 = vpop.f32.mrf.mxu0
      %v1675 = vadd.f32 %v1376, %v1674
      %v1676 = vpop.f32.mrf.mxu0
      %v1677 = vadd.f32 %v1380, %v1676
      %1678 = vmatprep.mubr.bf16.mxu0 0
      %1679 = vmatmul.mubr.bf16.gmra.mxu0 %v1336
      %v1680 = vpop.f32.mrf.mxu0
      %v1681 = vadd.f32 %v1376, %v1680
      %v1682 = vpop.f32.mrf.mxu0
      %v1683 = vadd.f32 %v1380, %v1682
      %v1684 = vpop.f32.mrf.mxu0
      %v1685 = vadd.f32 %v1376, %v1684
      %v1686 = vpop.f32.mrf.mxu0
      %v1687 = vadd.f32 %v1380, %v1686
      %1688 = vmatprep.mubr.bf16.mxu0 0
      %1689 = vmatmul.mubr.bf16.gmra.mxu0 %v1337
      %v1690 = vpop.f32.mrf.mxu0
      %v1691 = vadd.f32 %v1376, %v1690
      %v1692 = vpop.f32.mrf.mxu0
      %v1693 = vadd.f32 %v1380, %v1692
      %v1694 = vpop.f32.mrf.mxu0
      %v1695 = vadd.f32 %v1376, %v1694
      %v1696 = vpop.f32.mrf.mxu0
      %v1697 = vadd.f32 %v1380, %v1696
      %1698 = vmatprep.mubr.bf16.mxu0 0
      %1699 = vmatmul.mubr.bf16.gmra.mxu0 %v1338
      %v1700 = vpop.f32.mrf.mxu0
      %v1701 = vadd.f32 %v1376, %v1700
      %v1702 = vpop.f32.mrf.mxu0
      %v1703 = vadd.f32 %v1380, %v1702
      %v1704 = vpop.f32.mrf.mxu0
      %v1705 = vadd.f32 %v1376, %v1704
      %v1706 = vpop.f32.mrf.mxu0
      %v1707 = vadd.f32 %v1380, %v1706
      %1708 = vdwg.mxu0
      %1709 = vmatprep.subr.bf16.mxu0 0
      %1710 = vmatpush1.bf16.msra.mxu0 %v1491
      %1711 = vmatprep.subr.bf16.mxu0 0
      %1712 = vmatpush1.bf16.msra.mxu0 %v1488
      %1713 = vmatprep.subr.bf16.mxu0 0
      %1714 = vmatpush1.bf16.msra.mxu0 %v1485
      %1715 = vmatprep.subr.bf16.mxu0 0
      %1716 = vmatpush1.bf16.msra.mxu0 %v1482
      %1717 = vmatprep.subr.bf16.mxu0 0
      %1718 = vmatpush1.bf16.msra.mxu0 %v1479
      %1719 = vmatprep.subr.bf16.mxu0 0
      %1720 = vmatpush1.bf16.msra.mxu0 %v1476
      %1721 = vmatprep.subr.bf16.mxu0 0
      %1722 = vmatpush1.bf16.msra.mxu0 %v1473
      %1723 = vmatprep.subr.bf16.mxu0 0
      %1724 = vmatpush1.bf16.msra.mxu0 %v1470
      %1725 = vmatprep.subr.bf16.mxu0 0
      %1726 = vmatpush2.bf16.msra.mxu0 0
      %1727 = vmatprep.subr.bf16.mxu0 0
      %1728 = vmatpush2.bf16.msra.mxu0 0
      %1729 = vmatprep.subr.bf16.mxu0 0
      %1730 = vmatpush2.bf16.msra.mxu0 0
      %1731 = vmatprep.subr.bf16.mxu0 0
      %1732 = vmatpush2.bf16.msra.mxu0 0
      %1733 = vmatprep.subr.bf16.mxu0 0
      %1734 = vmatpush2.bf16.msra.mxu0 0
      %1735 = vmatprep.subr.bf16.mxu0 0
      %1736 = vmatpush2.bf16.msra.mxu0 0
      %1737 = vmatprep.subr.bf16.mxu0 0
      %1738 = vmatpush2.bf16.msra.mxu0 0
      %1739 = vmatprep.subr.bf16.mxu0 0
      %1740 = vmatpush2.bf16.msra.mxu0 0
      %1741 = vmatprep.mubr.bf16.mxu0 0
      %1742 = vmatmul.mubr.bf16.gmra.mxu0 %v1323
      %v1743 = vpop.f32.mrf.mxu0
      %v1744 = vadd.f32 %v1384, %v1743
      %v1745 = vpop.f32.mrf.mxu0
      %v1746 = vpop.f32.mrf.mxu0
      %v1747 = vadd.f32 %v1384, %v1746
      %v1748 = vpop.f32.mrf.mxu0
      %1749 = vmatprep.mubr.bf16.mxu0 0
      %1750 = vmatmul.mubr.bf16.gmra.mxu0 %v1324
      %v1751 = vpop.f32.mrf.mxu0
      %v1752 = vadd.f32 %v1384, %v1751
      %v1753 = vpop.f32.mrf.mxu0
      %v1754 = vpop.f32.mrf.mxu0
      %v1755 = vadd.f32 %v1384, %v1754
      %v1756 = vpop.f32.mrf.mxu0
      %1757 = vmatprep.mubr.bf16.mxu0 0
      %1758 = vmatmul.mubr.bf16.gmra.mxu0 %v1325
      %v1759 = vpop.f32.mrf.mxu0
      %v1760 = vadd.f32 %v1384, %v1759
      %v1761 = vpop.f32.mrf.mxu0
      %v1762 = vpop.f32.mrf.mxu0
      %v1763 = vadd.f32 %v1384, %v1762
      %v1764 = vpop.f32.mrf.mxu0
      %1765 = vmatprep.mubr.bf16.mxu0 0
      %1766 = vmatmul.mubr.bf16.gmra.mxu0 %v1326
      %v1767 = vpop.f32.mrf.mxu0
      %v1768 = vadd.f32 %v1384, %v1767
      %v1769 = vpop.f32.mrf.mxu0
      %v1770 = vpop.f32.mrf.mxu0
      %v1771 = vadd.f32 %v1384, %v1770
      %v1772 = vpop.f32.mrf.mxu0
      %1773 = vmatprep.mubr.bf16.mxu0 0
      %1774 = vmatmul.mubr.bf16.gmra.mxu0 %v1327
      %v1775 = vpop.f32.mrf.mxu0
      %v1776 = vadd.f32 %v1384, %v1775
      %v1777 = vpop.f32.mrf.mxu0
      %v1778 = vpop.f32.mrf.mxu0
      %v1779 = vadd.f32 %v1384, %v1778
      %v1780 = vpop.f32.mrf.mxu0
      %1781 = vmatprep.mubr.bf16.mxu0 0
      %1782 = vmatmul.mubr.bf16.gmra.mxu0 %v1328
      %v1783 = vpop.f32.mrf.mxu0
      %v1784 = vadd.f32 %v1384, %v1783
      %v1785 = vpop.f32.mrf.mxu0
      %v1786 = vpop.f32.mrf.mxu0
      %v1787 = vadd.f32 %v1384, %v1786
      %v1788 = vpop.f32.mrf.mxu0
      %1789 = vmatprep.mubr.bf16.mxu0 0
      %1790 = vmatmul.mubr.bf16.gmra.mxu0 %v1329
      %v1791 = vpop.f32.mrf.mxu0
      %v1792 = vadd.f32 %v1384, %v1791
      %v1793 = vpop.f32.mrf.mxu0
      %v1794 = vpop.f32.mrf.mxu0
      %v1795 = vadd.f32 %v1384, %v1794
      %v1796 = vpop.f32.mrf.mxu0
      %1797 = vmatprep.mubr.bf16.mxu0 0
      %1798 = vmatmul.mubr.bf16.gmra.mxu0 %v1330
      %v1799 = vpop.f32.mrf.mxu0
      %v1800 = vadd.f32 %v1384, %v1799
      %v1801 = vpop.f32.mrf.mxu0
      %v1802 = vpop.f32.mrf.mxu0
      %v1803 = vadd.f32 %v1384, %v1802
      %v1804 = vpop.f32.mrf.mxu0
      %1805 = vmatprep.mubr.bf16.mxu0 0
      %1806 = vmatmul.mubr.bf16.gmra.mxu0 %v1331
      %v1807 = vpop.f32.mrf.mxu0
      %v1808 = vadd.f32 %v1384, %v1807
      %v1809 = vpop.f32.mrf.mxu0
      %v1810 = vpop.f32.mrf.mxu0
      %v1811 = vadd.f32 %v1384, %v1810
      %v1812 = vpop.f32.mrf.mxu0
      %1813 = vmatprep.mubr.bf16.mxu0 0
      %1814 = vmatmul.mubr.bf16.gmra.mxu0 %v1332
      %v1815 = vpop.f32.mrf.mxu0
      %v1816 = vadd.f32 %v1384, %v1815
      %v1817 = vpop.f32.mrf.mxu0
      %v1818 = vpop.f32.mrf.mxu0
      %v1819 = vadd.f32 %v1384, %v1818
      %v1820 = vpop.f32.mrf.mxu0
      %1821 = vmatprep.mubr.bf16.mxu0 0
      %1822 = vmatmul.mubr.bf16.gmra.mxu0 %v1333
      %v1823 = vpop.f32.mrf.mxu0
      %v1824 = vadd.f32 %v1384, %v1823
      %v1825 = vpop.f32.mrf.mxu0
      %v1826 = vpop.f32.mrf.mxu0
      %v1827 = vadd.f32 %v1384, %v1826
      %v1828 = vpop.f32.mrf.mxu0
      %1829 = vmatprep.mubr.bf16.mxu0 0
      %1830 = vmatmul.mubr.bf16.gmra.mxu0 %v1334
      %v1831 = vpop.f32.mrf.mxu0
      %v1832 = vadd.f32 %v1384, %v1831
      %v1833 = vpop.f32.mrf.mxu0
      %v1834 = vpop.f32.mrf.mxu0
      %v1835 = vadd.f32 %v1384, %v1834
      %v1836 = vpop.f32.mrf.mxu0
      %1837 = vmatprep.mubr.bf16.mxu0 0
      %1838 = vmatmul.mubr.bf16.gmra.mxu0 %v1335
      %v1839 = vpop.f32.mrf.mxu0
      %v1840 = vadd.f32 %v1384, %v1839
      %v1841 = vpop.f32.mrf.mxu0
      %v1842 = vpop.f32.mrf.mxu0
      %v1843 = vadd.f32 %v1384, %v1842
      %v1844 = vpop.f32.mrf.mxu0
      %1845 = vmatprep.mubr.bf16.mxu0 0
      %1846 = vmatmul.mubr.bf16.gmra.mxu0 %v1336
      %v1847 = vpop.f32.mrf.mxu0
      %v1848 = vadd.f32 %v1384, %v1847
      %v1849 = vpop.f32.mrf.mxu0
      %v1850 = vpop.f32.mrf.mxu0
      %v1851 = vadd.f32 %v1384, %v1850
      %v1852 = vpop.f32.mrf.mxu0
      %1853 = vmatprep.mubr.bf16.mxu0 0
      %1854 = vmatmul.mubr.bf16.gmra.mxu0 %v1337
      %v1855 = vpop.f32.mrf.mxu0
      %v1856 = vadd.f32 %v1384, %v1855
      %v1857 = vpop.f32.mrf.mxu0
      %v1858 = vpop.f32.mrf.mxu0
      %v1859 = vadd.f32 %v1384, %v1858
      %v1860 = vpop.f32.mrf.mxu0
      %1861 = vmatprep.mubr.bf16.mxu0 0
      %1862 = vmatmul.mubr.bf16.gmra.mxu0 %v1338
      %v1863 = vpop.f32.mrf.mxu0
      %v1864 = vadd.f32 %v1384, %v1863
      %v1865 = vpop.f32.mrf.mxu0
      %v1866 = vpop.f32.mrf.mxu0
      %v1867 = vadd.f32 %v1384, %v1866
      %v1868 = vpop.f32.mrf.mxu0
      %1869 = vdwg.mxu0
      %v1870 = vld [vmem:[%s7] sm:$0x7]
      %v1871 = vlaneseq
      %v1872 = vshrl.u32 %v1871, 7
      %v1873 = vadd.s32 %v1872, 8
      %v1874 = vadd.s32 %v1872, 16
      %v1875 = vadd.s32 %v1872, 24
      %v1876 = vadd.s32 %v1872, 32
      %v1877 = vadd.s32 %v1872, 40
      %v1878 = vadd.s32 %v1872, 48
      %v1879 = vadd.s32 %v1872, 56
      %v1880 = vadd.s32 %v1872, 64
      %v1881 = vadd.s32 %v1872, 72
      %v1882 = vadd.s32 %v1872, 80
      %v1883 = vadd.s32 %v1872, 88
      %v1884 = vadd.s32 %v1872, 96
      %v1885 = vadd.s32 %v1872, 104
      %v1886 = vadd.s32 %v1872, 112
      %v1887 = vadd.s32 %v1872, 120
      %v1888 = vadd.s32 %v1872, 128
      %v1889 = vadd.s32 %v1872, 136
      %v1890 = vadd.s32 %v1872, 144
      %v1891 = vadd.s32 %v1872, 152
      %v1892 = vadd.s32 %v1872, 160
      %v1893 = vadd.s32 %v1872, 168
      %v1894 = vadd.s32 %v1872, 176
      %v1895 = vadd.s32 %v1872, 184
      %v1896 = vadd.s32 %v1872, 192
      %v1897 = vadd.s32 %v1872, 200
      %v1898 = vadd.s32 %v1872, 208
      %v1899 = vadd.s32 %v1872, 216
      %v1900 = vadd.s32 %v1872, 224
      %v1901 = vadd.s32 %v1872, 232
      %v1902 = vadd.s32 %v1872, 240
      %v1903 = vadd.s32 %v1872, 248
      %vm1904 = vcmp.lt.s32.totalorder %v1872, 0
      %v1905 = vsub.s32 0, %v1872
      %v1906 = vsel %vm1904, %v1905, %v1872
      %v1907 = vshrl.u32 %v1906, 4
      %v1908 = vand.u32 %v1906, 15
      %v1909 = vsub.s32 0, %v1908
      %v1910 = vsel %vm1904, %v1909, %v1908
      %vm1911 = vcmp.lt.s32.totalorder %v1873, 0
      %v1912 = vsub.s32 0, %v1873
      %v1913 = vsel %vm1911, %v1912, %v1873
      %v1914 = vshrl.u32 %v1913, 4
      %v1915 = vand.u32 %v1913, 15
      %v1916 = vsub.s32 0, %v1915
      %v1917 = vsel %vm1911, %v1916, %v1915
      %vm1918 = vcmp.lt.s32.totalorder %v1874, 0
      %v1919 = vsub.s32 0, %v1874
      %v1920 = vsel %vm1918, %v1919, %v1874
      %v1921 = vshrl.u32 %v1920, 4
      %v1922 = vand.u32 %v1920, 15
      %v1923 = vsub.s32 0, %v1922
      %v1924 = vsel %vm1918, %v1923, %v1922
      %vm1925 = vcmp.lt.s32.totalorder %v1875, 0
      %v1926 = vsub.s32 0, %v1875
      %v1927 = vsel %vm1925, %v1926, %v1875
      %v1928 = vshrl.u32 %v1927, 4
      %v1929 = vand.u32 %v1927, 15
      %v1930 = vsub.s32 0, %v1929
      %v1931 = vsel %vm1925, %v1930, %v1929
      %vm1932 = vcmp.lt.s32.totalorder %v1876, 0
      %v1933 = vsub.s32 0, %v1876
      %v1934 = vsel %vm1932, %v1933, %v1876
      %v1935 = vshrl.u32 %v1934, 4
      %v1936 = vand.u32 %v1934, 15
      %v1937 = vsub.s32 0, %v1936
      %v1938 = vsel %vm1932, %v1937, %v1936
      %vm1939 = vcmp.lt.s32.totalorder %v1877, 0
      %v1940 = vsub.s32 0, %v1877
      %v1941 = vsel %vm1939, %v1940, %v1877
      %v1942 = vshrl.u32 %v1941, 4
      %v1943 = vand.u32 %v1941, 15
      %v1944 = vsub.s32 0, %v1943
      %v1945 = vsel %vm1939, %v1944, %v1943
      %vm1946 = vcmp.lt.s32.totalorder %v1878, 0
      %v1947 = vsub.s32 0, %v1878
      %v1948 = vsel %vm1946, %v1947, %v1878
      %v1949 = vshrl.u32 %v1948, 4
      %v1950 = vand.u32 %v1948, 15
      %v1951 = vsub.s32 0, %v1950
      %v1952 = vsel %vm1946, %v1951, %v1950
      %vm1953 = vcmp.lt.s32.totalorder %v1879, 0
      %v1954 = vsub.s32 0, %v1879
      %v1955 = vsel %vm1953, %v1954, %v1879
      %v1956 = vshrl.u32 %v1955, 4
      %v1957 = vand.u32 %v1955, 15
      %v1958 = vsub.s32 0, %v1957
      %v1959 = vsel %vm1953, %v1958, %v1957
      %vm1960 = vcmp.lt.s32.totalorder %v1880, 0
      %v1961 = vsub.s32 0, %v1880
      %v1962 = vsel %vm1960, %v1961, %v1880
      %v1963 = vshrl.u32 %v1962, 4
      %v1964 = vand.u32 %v1962, 15
      %v1965 = vsub.s32 0, %v1964
      %v1966 = vsel %vm1960, %v1965, %v1964
      %vm1967 = vcmp.lt.s32.totalorder %v1881, 0
      %v1968 = vsub.s32 0, %v1881
      %v1969 = vsel %vm1967, %v1968, %v1881
      %v1970 = vshrl.u32 %v1969, 4
      %v1971 = vand.u32 %v1969, 15
      %v1972 = vsub.s32 0, %v1971
      %v1973 = vsel %vm1967, %v1972, %v1971
      %vm1974 = vcmp.lt.s32.totalorder %v1882, 0
      %v1975 = vsub.s32 0, %v1882
      %v1976 = vsel %vm1974, %v1975, %v1882
      %v1977 = vshrl.u32 %v1976, 4
      %v1978 = vand.u32 %v1976, 15
      %v1979 = vsub.s32 0, %v1978
      %v1980 = vsel %vm1974, %v1979, %v1978
      %vm1981 = vcmp.lt.s32.totalorder %v1883, 0
      %v1982 = vsub.s32 0, %v1883
      %v1983 = vsel %vm1981, %v1982, %v1883
      %v1984 = vshrl.u32 %v1983, 4
      %v1985 = vand.u32 %v1983, 15
      %v1986 = vsub.s32 0, %v1985
      %v1987 = vsel %vm1981, %v1986, %v1985
      %vm1988 = vcmp.lt.s32.totalorder %v1884, 0
      %v1989 = vsub.s32 0, %v1884
      %v1990 = vsel %vm1988, %v1989, %v1884
      %v1991 = vshrl.u32 %v1990, 4
      %v1992 = vand.u32 %v1990, 15
      %v1993 = vsub.s32 0, %v1992
      %v1994 = vsel %vm1988, %v1993, %v1992
      %vm1995 = vcmp.lt.s32.totalorder %v1885, 0
      %v1996 = vsub.s32 0, %v1885
      %v1997 = vsel %vm1995, %v1996, %v1885
      %v1998 = vshrl.u32 %v1997, 4
      %v1999 = vand.u32 %v1997, 15
      %v2000 = vsub.s32 0, %v1999
      %v2001 = vsel %vm1995, %v2000, %v1999
      %vm2002 = vcmp.lt.s32.totalorder %v1886, 0
      %v2003 = vsub.s32 0, %v1886
      %v2004 = vsel %vm2002, %v2003, %v1886
      %v2005 = vshrl.u32 %v2004, 4
      %v2006 = vand.u32 %v2004, 15
      %v2007 = vsub.s32 0, %v2006
      %v2008 = vsel %vm2002, %v2007, %v2006
      %vm2009 = vcmp.lt.s32.totalorder %v1887, 0
      %v2010 = vsub.s32 0, %v1887
      %v2011 = vsel %vm2009, %v2010, %v1887
      %v2012 = vshrl.u32 %v2011, 4
      %v2013 = vand.u32 %v2011, 15
      %v2014 = vsub.s32 0, %v2013
      %v2015 = vsel %vm2009, %v2014, %v2013
      %vm2016 = vcmp.lt.s32.totalorder %v1888, 0
      %v2017 = vsub.s32 0, %v1888
      %v2018 = vsel %vm2016, %v2017, %v1888
      %v2019 = vshrl.u32 %v2018, 4
      %v2020 = vand.u32 %v2018, 15
      %v2021 = vsub.s32 0, %v2020
      %v2022 = vsel %vm2016, %v2021, %v2020
      %vm2023 = vcmp.lt.s32.totalorder %v1889, 0
      %v2024 = vsub.s32 0, %v1889
      %v2025 = vsel %vm2023, %v2024, %v1889
      %v2026 = vshrl.u32 %v2025, 4
      %v2027 = vand.u32 %v2025, 15
      %v2028 = vsub.s32 0, %v2027
      %v2029 = vsel %vm2023, %v2028, %v2027
      %vm2030 = vcmp.lt.s32.totalorder %v1890, 0
      %v2031 = vsub.s32 0, %v1890
      %v2032 = vsel %vm2030, %v2031, %v1890
      %v2033 = vshrl.u32 %v2032, 4
      %v2034 = vand.u32 %v2032, 15
      %v2035 = vsub.s32 0, %v2034
      %v2036 = vsel %vm2030, %v2035, %v2034
      %vm2037 = vcmp.lt.s32.totalorder %v1891, 0
      %v2038 = vsub.s32 0, %v1891
      %v2039 = vsel %vm2037, %v2038, %v1891
      %v2040 = vshrl.u32 %v2039, 4
      %v2041 = vand.u32 %v2039, 15
      %v2042 = vsub.s32 0, %v2041
      %v2043 = vsel %vm2037, %v2042, %v2041
      %vm2044 = vcmp.lt.s32.totalorder %v1892, 0
      %v2045 = vsub.s32 0, %v1892
      %v2046 = vsel %vm2044, %v2045, %v1892
      %v2047 = vshrl.u32 %v2046, 4
      %v2048 = vand.u32 %v2046, 15
      %v2049 = vsub.s32 0, %v2048
      %v2050 = vsel %vm2044, %v2049, %v2048
      %vm2051 = vcmp.lt.s32.totalorder %v1893, 0
      %v2052 = vsub.s32 0, %v1893
      %v2053 = vsel %vm2051, %v2052, %v1893
      %v2054 = vshrl.u32 %v2053, 4
      %v2055 = vand.u32 %v2053, 15
      %v2056 = vsub.s32 0, %v2055
      %v2057 = vsel %vm2051, %v2056, %v2055
      %vm2058 = vcmp.lt.s32.totalorder %v1894, 0
      %v2059 = vsub.s32 0, %v1894
      %v2060 = vsel %vm2058, %v2059, %v1894
      %v2061 = vshrl.u32 %v2060, 4
      %v2062 = vand.u32 %v2060, 15
      %v2063 = vsub.s32 0, %v2062
      %v2064 = vsel %vm2058, %v2063, %v2062
      %vm2065 = vcmp.lt.s32.totalorder %v1895, 0
      %v2066 = vsub.s32 0, %v1895
      %v2067 = vsel %vm2065, %v2066, %v1895
      %v2068 = vshrl.u32 %v2067, 4
      %v2069 = vand.u32 %v2067, 15
      %v2070 = vsub.s32 0, %v2069
      %v2071 = vsel %vm2065, %v2070, %v2069
      %vm2072 = vcmp.lt.s32.totalorder %v1896, 0
      %v2073 = vsub.s32 0, %v1896
      %v2074 = vsel %vm2072, %v2073, %v1896
      %v2075 = vshrl.u32 %v2074, 4
      %v2076 = vand.u32 %v2074, 15
      %v2077 = vsub.s32 0, %v2076
      %v2078 = vsel %vm2072, %v2077, %v2076
      %vm2079 = vcmp.lt.s32.totalorder %v1897, 0
      %v2080 = vsub.s32 0, %v1897
      %v2081 = vsel %vm2079, %v2080, %v1897
      %v2082 = vshrl.u32 %v2081, 4
      %v2083 = vand.u32 %v2081, 15
      %v2084 = vsub.s32 0, %v2083
      %v2085 = vsel %vm2079, %v2084, %v2083
      %vm2086 = vcmp.lt.s32.totalorder %v1898, 0
      %v2087 = vsub.s32 0, %v1898
      %v2088 = vsel %vm2086, %v2087, %v1898
      %v2089 = vshrl.u32 %v2088, 4
      %v2090 = vand.u32 %v2088, 15
      %v2091 = vsub.s32 0, %v2090
      %v2092 = vsel %vm2086, %v2091, %v2090
      %vm2093 = vcmp.lt.s32.totalorder %v1899, 0
      %v2094 = vsub.s32 0, %v1899
      %v2095 = vsel %vm2093, %v2094, %v1899
      %v2096 = vshrl.u32 %v2095, 4
      %v2097 = vand.u32 %v2095, 15
      %v2098 = vsub.s32 0, %v2097
      %v2099 = vsel %vm2093, %v2098, %v2097
      %vm2100 = vcmp.lt.s32.totalorder %v1900, 0
      %v2101 = vsub.s32 0, %v1900
      %v2102 = vsel %vm2100, %v2101, %v1900
      %v2103 = vshrl.u32 %v2102, 4
      %v2104 = vand.u32 %v2102, 15
      %v2105 = vsub.s32 0, %v2104
      %v2106 = vsel %vm2100, %v2105, %v2104
      %vm2107 = vcmp.lt.s32.totalorder %v1901, 0
      %v2108 = vsub.s32 0, %v1901
      %v2109 = vsel %vm2107, %v2108, %v1901
      %v2110 = vshrl.u32 %v2109, 4
      %v2111 = vand.u32 %v2109, 15
      %v2112 = vsub.s32 0, %v2111
      %v2113 = vsel %vm2107, %v2112, %v2111
      %vm2114 = vcmp.lt.s32.totalorder %v1902, 0
      %v2115 = vsub.s32 0, %v1902
      %v2116 = vsel %vm2114, %v2115, %v1902
      %v2117 = vshrl.u32 %v2116, 4
      %v2118 = vand.u32 %v2116, 15
      %v2119 = vsub.s32 0, %v2118
      %v2120 = vsel %vm2114, %v2119, %v2118
      %vm2121 = vcmp.lt.s32.totalorder %v1903, 0
      %v2122 = vsub.s32 0, %v1903
      %v2123 = vsel %vm2121, %v2122, %v1903
      %v2124 = vshrl.u32 %v2123, 4
      %v2125 = vand.u32 %v2123, 15
      %v2126 = vsub.s32 0, %v2125
      %v2127 = vsel %vm2121, %v2126, %v2125
      %vm2128 = vcmp.ne.s32.totalorder %v1910, 0
      %vm2129 = vcmp.ne.s32.totalorder %v1917, 0
      %vm2130 = vcmp.ne.s32.totalorder %v1924, 0
      %vm2131 = vcmp.ne.s32.totalorder %v1931, 0
      %vm2132 = vcmp.ne.s32.totalorder %v1938, 0
      %vm2133 = vcmp.ne.s32.totalorder %v1945, 0
      %vm2134 = vcmp.ne.s32.totalorder %v1952, 0
      %vm2135 = vcmp.ne.s32.totalorder %v1959, 0
      %vm2136 = vcmp.ne.s32.totalorder %v1966, 0
      %vm2137 = vcmp.ne.s32.totalorder %v1973, 0
      %vm2138 = vcmp.ne.s32.totalorder %v1980, 0
      %vm2139 = vcmp.ne.s32.totalorder %v1987, 0
      %vm2140 = vcmp.ne.s32.totalorder %v1994, 0
      %vm2141 = vcmp.ne.s32.totalorder %v2001, 0
      %vm2142 = vcmp.ne.s32.totalorder %v2008, 0
      %vm2143 = vcmp.ne.s32.totalorder %v2015, 0
      %vm2144 = vcmp.ne.s32.totalorder %v2022, 0
      %vm2145 = vcmp.ne.s32.totalorder %v2029, 0
      %vm2146 = vcmp.ne.s32.totalorder %v2036, 0
      %vm2147 = vcmp.ne.s32.totalorder %v2043, 0
      %vm2148 = vcmp.ne.s32.totalorder %v2050, 0
      %vm2149 = vcmp.ne.s32.totalorder %v2057, 0
      %vm2150 = vcmp.ne.s32.totalorder %v2064, 0
      %vm2151 = vcmp.ne.s32.totalorder %v2071, 0
      %vm2152 = vcmp.ne.s32.totalorder %v2078, 0
      %vm2153 = vcmp.ne.s32.totalorder %v2085, 0
      %vm2154 = vcmp.ne.s32.totalorder %v2092, 0
      %vm2155 = vcmp.ne.s32.totalorder %v2099, 0
      %vm2156 = vcmp.ne.s32.totalorder %v2106, 0
      %vm2157 = vcmp.ne.s32.totalorder %v2113, 0
      %vm2158 = vcmp.ne.s32.totalorder %v2120, 0
      %vm2159 = vcmp.ne.s32.totalorder %v2127, 0
      %vm2160 = vcmp.lt.s32.totalorder %v1910, 0
      %vm2161 = vcmp.lt.s32.totalorder %v1917, 0
      %vm2162 = vcmp.lt.s32.totalorder %v1924, 0
      %vm2163 = vcmp.lt.s32.totalorder %v1931, 0
      %vm2164 = vcmp.lt.s32.totalorder %v1938, 0
      %vm2165 = vcmp.lt.s32.totalorder %v1945, 0
      %vm2166 = vcmp.lt.s32.totalorder %v1952, 0
      %vm2167 = vcmp.lt.s32.totalorder %v1959, 0
      %vm2168 = vcmp.lt.s32.totalorder %v1966, 0
      %vm2169 = vcmp.lt.s32.totalorder %v1973, 0
      %vm2170 = vcmp.lt.s32.totalorder %v1980, 0
      %vm2171 = vcmp.lt.s32.totalorder %v1987, 0
      %vm2172 = vcmp.lt.s32.totalorder %v1994, 0
      %vm2173 = vcmp.lt.s32.totalorder %v2001, 0
      %vm2174 = vcmp.lt.s32.totalorder %v2008, 0
      %vm2175 = vcmp.lt.s32.totalorder %v2015, 0
      %vm2176 = vcmp.lt.s32.totalorder %v2022, 0
      %vm2177 = vcmp.lt.s32.totalorder %v2029, 0
      %vm2178 = vcmp.lt.s32.totalorder %v2036, 0
      %vm2179 = vcmp.lt.s32.totalorder %v2043, 0
      %vm2180 = vcmp.lt.s32.totalorder %v2050, 0
      %vm2181 = vcmp.lt.s32.totalorder %v2057, 0
      %vm2182 = vcmp.lt.s32.totalorder %v2064, 0
      %vm2183 = vcmp.lt.s32.totalorder %v2071, 0
      %vm2184 = vcmp.lt.s32.totalorder %v2078, 0
      %vm2185 = vcmp.lt.s32.totalorder %v2085, 0
      %vm2186 = vcmp.lt.s32.totalorder %v2092, 0
      %vm2187 = vcmp.lt.s32.totalorder %v2099, 0
      %vm2188 = vcmp.lt.s32.totalorder %v2106, 0
      %vm2189 = vcmp.lt.s32.totalorder %v2113, 0
      %vm2190 = vcmp.lt.s32.totalorder %v2120, 0
      %vm2191 = vcmp.lt.s32.totalorder %v2127, 0
      %vm2192 = vmand %vm2160, %vm2128
      %vm2193 = vmand %vm2161, %vm2129
      %vm2194 = vmand %vm2162, %vm2130
      %vm2195 = vmand %vm2163, %vm2131
      %vm2196 = vmand %vm2164, %vm2132
      %vm2197 = vmand %vm2165, %vm2133
      %vm2198 = vmand %vm2166, %vm2134
      %vm2199 = vmand %vm2167, %vm2135
      %vm2200 = vmand %vm2168, %vm2136
      %vm2201 = vmand %vm2169, %vm2137
      %vm2202 = vmand %vm2170, %vm2138
      %vm2203 = vmand %vm2171, %vm2139
      %vm2204 = vmand %vm2172, %vm2140
      %vm2205 = vmand %vm2173, %vm2141
      %vm2206 = vmand %vm2174, %vm2142
      %vm2207 = vmand %vm2175, %vm2143
      %vm2208 = vmand %vm2176, %vm2144
      %vm2209 = vmand %vm2177, %vm2145
      %vm2210 = vmand %vm2178, %vm2146
      %vm2211 = vmand %vm2179, %vm2147
      %vm2212 = vmand %vm2180, %vm2148
      %vm2213 = vmand %vm2181, %vm2149
      %vm2214 = vmand %vm2182, %vm2150
      %vm2215 = vmand %vm2183, %vm2151
      %vm2216 = vmand %vm2184, %vm2152
      %vm2217 = vmand %vm2185, %vm2153
      %vm2218 = vmand %vm2186, %vm2154
      %vm2219 = vmand %vm2187, %vm2155
      %vm2220 = vmand %vm2188, %vm2156
      %vm2221 = vmand %vm2189, %vm2157
      %vm2222 = vmand %vm2190, %vm2158
      %vm2223 = vmand %vm2191, %vm2159
      %v2224 = vadd.s32 %v1910, 16
      %v2225 = vadd.s32 %v1917, 16
      %v2226 = vadd.s32 %v1924, 16
      %v2227 = vadd.s32 %v1931, 16
      %v2228 = vadd.s32 %v1938, 16
      %v2229 = vadd.s32 %v1945, 16
      %v2230 = vadd.s32 %v1952, 16
      %v2231 = vadd.s32 %v1959, 16
      %v2232 = vadd.s32 %v1966, 16
      %v2233 = vadd.s32 %v1973, 16
      %v2234 = vadd.s32 %v1980, 16
      %v2235 = vadd.s32 %v1987, 16
      %v2236 = vadd.s32 %v1994, 16
      %v2237 = vadd.s32 %v2001, 16
      %v2238 = vadd.s32 %v2008, 16
      %v2239 = vadd.s32 %v2015, 16
      %v2240 = vadd.s32 %v2022, 16
      %v2241 = vadd.s32 %v2029, 16
      %v2242 = vadd.s32 %v2036, 16
      %v2243 = vadd.s32 %v2043, 16
      %v2244 = vadd.s32 %v2050, 16
      %v2245 = vadd.s32 %v2057, 16
      %v2246 = vadd.s32 %v2064, 16
      %v2247 = vadd.s32 %v2071, 16
      %v2248 = vadd.s32 %v2078, 16
      %v2249 = vadd.s32 %v2085, 16
      %v2250 = vadd.s32 %v2092, 16
      %v2251 = vadd.s32 %v2099, 16
      %v2252 = vadd.s32 %v2106, 16
      %v2253 = vadd.s32 %v2113, 16
      %v2254 = vadd.s32 %v2120, 16
      %v2255 = vadd.s32 %v2127, 16
      %v2256 = vsel %vm2192, %v2224, %v1910
      %v2257 = vsel %vm2193, %v2225, %v1917
      %v2258 = vsel %vm2194, %v2226, %v1924
      %v2259 = vsel %vm2195, %v2227, %v1931
      %v2260 = vsel %vm2196, %v2228, %v1938
      %v2261 = vsel %vm2197, %v2229, %v1945
      %v2262 = vsel %vm2198, %v2230, %v1952
      %v2263 = vsel %vm2199, %v2231, %v1959
      %v2264 = vsel %vm2200, %v2232, %v1966
      %v2265 = vsel %vm2201, %v2233, %v1973
      %v2266 = vsel %vm2202, %v2234, %v1980
      %v2267 = vsel %vm2203, %v2235, %v1987
      %v2268 = vsel %vm2204, %v2236, %v1994
      %v2269 = vsel %vm2205, %v2237, %v2001
      %v2270 = vsel %vm2206, %v2238, %v2008
      %v2271 = vsel %vm2207, %v2239, %v2015
      %v2272 = vsel %vm2208, %v2240, %v2022
      %v2273 = vsel %vm2209, %v2241, %v2029
      %v2274 = vsel %vm2210, %v2242, %v2036
      %v2275 = vsel %vm2211, %v2243, %v2043
      %v2276 = vsel %vm2212, %v2244, %v2050
      %v2277 = vsel %vm2213, %v2245, %v2057
      %v2278 = vsel %vm2214, %v2246, %v2064
      %v2279 = vsel %vm2215, %v2247, %v2071
      %v2280 = vsel %vm2216, %v2248, %v2078
      %v2281 = vsel %vm2217, %v2249, %v2085
      %v2282 = vsel %vm2218, %v2250, %v2092
      %v2283 = vsel %vm2219, %v2251, %v2099
      %v2284 = vsel %vm2220, %v2252, %v2106
      %v2285 = vsel %vm2221, %v2253, %v2113
      %v2286 = vsel %vm2222, %v2254, %v2120
      %v2287 = vsel %vm2223, %v2255, %v2127
      %vm2288 = vcmp.ge.s32.totalorder %v2256, 1
      %vm2289 = vcmp.ge.s32.totalorder %v2257, 1
      %vm2290 = vcmp.ge.s32.totalorder %v2258, 1
      %vm2291 = vcmp.ge.s32.totalorder %v2259, 1
      %vm2292 = vcmp.ge.s32.totalorder %v2260, 1
      %vm2293 = vcmp.ge.s32.totalorder %v2261, 1
      %vm2294 = vcmp.ge.s32.totalorder %v2262, 1
      %vm2295 = vcmp.ge.s32.totalorder %v2263, 1
      %vm2296 = vcmp.ge.s32.totalorder %v2264, 1
      %vm2297 = vcmp.ge.s32.totalorder %v2265, 1
      %vm2298 = vcmp.ge.s32.totalorder %v2266, 1
      %vm2299 = vcmp.ge.s32.totalorder %v2267, 1
      %vm2300 = vcmp.ge.s32.totalorder %v2268, 1
      %vm2301 = vcmp.ge.s32.totalorder %v2269, 1
      %vm2302 = vcmp.ge.s32.totalorder %v2270, 1
      %vm2303 = vcmp.ge.s32.totalorder %v2271, 1
      %vm2304 = vcmp.ge.s32.totalorder %v2272, 1
      %vm2305 = vcmp.ge.s32.totalorder %v2273, 1
      %vm2306 = vcmp.ge.s32.totalorder %v2274, 1
      %vm2307 = vcmp.ge.s32.totalorder %v2275, 1
      %vm2308 = vcmp.ge.s32.totalorder %v2276, 1
      %vm2309 = vcmp.ge.s32.totalorder %v2277, 1
      %vm2310 = vcmp.ge.s32.totalorder %v2278, 1
      %vm2311 = vcmp.ge.s32.totalorder %v2279, 1
      %vm2312 = vcmp.ge.s32.totalorder %v2280, 1
      %vm2313 = vcmp.ge.s32.totalorder %v2281, 1
      %vm2314 = vcmp.ge.s32.totalorder %v2282, 1
      %vm2315 = vcmp.ge.s32.totalorder %v2283, 1
      %vm2316 = vcmp.ge.s32.totalorder %v2284, 1
      %vm2317 = vcmp.ge.s32.totalorder %v2285, 1
      %vm2318 = vcmp.ge.s32.totalorder %v2286, 1
      %vm2319 = vcmp.ge.s32.totalorder %v2287, 1
      %vm2320 = vcmp.ge.s32.totalorder %v2256, 2
      %vm2321 = vcmp.ge.s32.totalorder %v2257, 2
      %vm2322 = vcmp.ge.s32.totalorder %v2258, 2
      %vm2323 = vcmp.ge.s32.totalorder %v2259, 2
      %vm2324 = vcmp.ge.s32.totalorder %v2260, 2
      %vm2325 = vcmp.ge.s32.totalorder %v2261, 2
      %vm2326 = vcmp.ge.s32.totalorder %v2262, 2
      %vm2327 = vcmp.ge.s32.totalorder %v2263, 2
      %vm2328 = vcmp.ge.s32.totalorder %v2264, 2
      %vm2329 = vcmp.ge.s32.totalorder %v2265, 2
      %vm2330 = vcmp.ge.s32.totalorder %v2266, 2
      %vm2331 = vcmp.ge.s32.totalorder %v2267, 2
      %vm2332 = vcmp.ge.s32.totalorder %v2268, 2
      %vm2333 = vcmp.ge.s32.totalorder %v2269, 2
      %vm2334 = vcmp.ge.s32.totalorder %v2270, 2
      %vm2335 = vcmp.ge.s32.totalorder %v2271, 2
      %vm2336 = vcmp.ge.s32.totalorder %v2272, 2
      %vm2337 = vcmp.ge.s32.totalorder %v2273, 2
      %vm2338 = vcmp.ge.s32.totalorder %v2274, 2
      %vm2339 = vcmp.ge.s32.totalorder %v2275, 2
      %vm2340 = vcmp.ge.s32.totalorder %v2276, 2
      %vm2341 = vcmp.ge.s32.totalorder %v2277, 2
      %vm2342 = vcmp.ge.s32.totalorder %v2278, 2
      %vm2343 = vcmp.ge.s32.totalorder %v2279, 2
      %vm2344 = vcmp.ge.s32.totalorder %v2280, 2
      %vm2345 = vcmp.ge.s32.totalorder %v2281, 2
      %vm2346 = vcmp.ge.s32.totalorder %v2282, 2
      %vm2347 = vcmp.ge.s32.totalorder %v2283, 2
      %vm2348 = vcmp.ge.s32.totalorder %v2284, 2
      %vm2349 = vcmp.ge.s32.totalorder %v2285, 2
      %vm2350 = vcmp.ge.s32.totalorder %v2286, 2
      %vm2351 = vcmp.ge.s32.totalorder %v2287, 2
      %v2352 = vlaneseq
      %v2353 = vshrl.u32 %v2352, 7
      %v2354 = vsub.s32 2, %v2353
      %v2355 = vrot.slane %v1870, %v2354
      %v2356 = vmul.f32 %v1744, %v2355
      %v2357 = vmul.f32 %v1747, %v2355
      %v2358 = vmul.f32 %v1752, %v2355
      %v2359 = vmul.f32 %v1755, %v2355
      %v2360 = vmul.f32 %v1760, %v2355
      %v2361 = vmul.f32 %v1763, %v2355
      %v2362 = vmul.f32 %v1768, %v2355
      %v2363 = vmul.f32 %v1771, %v2355
      %v2364 = vmul.f32 %v1776, %v2355
      %v2365 = vmul.f32 %v1779, %v2355
      %v2366 = vmul.f32 %v1784, %v2355
      %v2367 = vmul.f32 %v1787, %v2355
      %v2368 = vmul.f32 %v1792, %v2355
      %v2369 = vmul.f32 %v1795, %v2355
      %v2370 = vmul.f32 %v1800, %v2355
      %v2371 = vmul.f32 %v1803, %v2355
      %v2372 = vmul.f32 %v1808, %v2355
      %v2373 = vmul.f32 %v1811, %v2355
      %v2374 = vmul.f32 %v1816, %v2355
      %v2375 = vmul.f32 %v1819, %v2355
      %v2376 = vmul.f32 %v1824, %v2355
      %v2377 = vmul.f32 %v1827, %v2355
      %v2378 = vmul.f32 %v1832, %v2355
      %v2379 = vmul.f32 %v1835, %v2355
      %v2380 = vmul.f32 %v1840, %v2355
      %v2381 = vmul.f32 %v1843, %v2355
      %v2382 = vmul.f32 %v1848, %v2355
      %v2383 = vmul.f32 %v1851, %v2355
      %v2384 = vmul.f32 %v1856, %v2355
      %v2385 = vmul.f32 %v1859, %v2355
      %v2386 = vmul.f32 %v1864, %v2355
      %v2387 = vmul.f32 %v1867, %v2355
      %v2388 = vrot.slane %v1744, 7
      %v2389 = vrot.slane %v1747, 7
      %v2390 = vrot.slane %v1752, 7
      %v2391 = vrot.slane %v1755, 7
      %v2392 = vrot.slane %v1760, 7
      %v2393 = vrot.slane %v1763, 7
      %v2394 = vrot.slane %v1768, 7
      %v2395 = vrot.slane %v1771, 7
      %v2396 = vrot.slane %v1776, 7
      %v2397 = vrot.slane %v1779, 7
      %v2398 = vrot.slane %v1784, 7
      %v2399 = vrot.slane %v1787, 7
      %v2400 = vrot.slane %v1792, 7
      %v2401 = vrot.slane %v1795, 7
      %v2402 = vrot.slane %v1800, 7
      %v2403 = vrot.slane %v1803, 7
      %v2404 = vrot.slane %v1808, 7
      %v2405 = vrot.slane %v1811, 7
      %v2406 = vrot.slane %v1816, 7
      %v2407 = vrot.slane %v1819, 7
      %v2408 = vrot.slane %v1824, 7
      %v2409 = vrot.slane %v1827, 7
      %v2410 = vrot.slane %v1832, 7
      %v2411 = vrot.slane %v1835, 7
      %v2412 = vrot.slane %v1840, 7
      %v2413 = vrot.slane %v1843, 7
      %v2414 = vrot.slane %v1848, 7
      %v2415 = vrot.slane %v1851, 7
      %v2416 = vrot.slane %v1856, 7
      %v2417 = vrot.slane %v1859, 7
      %v2418 = vrot.slane %v1864, 7
      %v2419 = vrot.slane %v1867, 7
      %vm2420 = vcmp.lt.s32.totalorder %v1872, 1
      %v2421 = vsel %vm2420, %v2418, %v2419
      %v2422 = vsel %vm2420, %v2417, %v2418
      %v2423 = vsel %vm2420, %v2416, %v2417
      %v2424 = vsel %vm2420, %v2415, %v2416
      %v2425 = vsel %vm2420, %v2414, %v2415
      %v2426 = vsel %vm2420, %v2413, %v2414
      %v2427 = vsel %vm2420, %v2412, %v2413
      %v2428 = vsel %vm2420, %v2411, %v2412
      %v2429 = vsel %vm2420, %v2410, %v2411
      %v2430 = vsel %vm2420, %v2409, %v2410
      %v2431 = vsel %vm2420, %v2408, %v2409
      %v2432 = vsel %vm2420, %v2407, %v2408
      %v2433 = vsel %vm2420, %v2406, %v2407
      %v2434 = vsel %vm2420, %v2405, %v2406
      %v2435 = vsel %vm2420, %v2404, %v2405
      %v2436 = vsel %vm2420, %v2403, %v2404
      %v2437 = vsel %vm2420, %v2402, %v2403
      %v2438 = vsel %vm2420, %v2401, %v2402
      %v2439 = vsel %vm2420, %v2400, %v2401
      %v2440 = vsel %vm2420, %v2399, %v2400
      %v2441 = vsel %vm2420, %v2398, %v2399
      %v2442 = vsel %vm2420, %v2397, %v2398
      %v2443 = vsel %vm2420, %v2396, %v2397
      %v2444 = vsel %vm2420, %v2395, %v2396
      %v2445 = vsel %vm2420, %v2394, %v2395
      %v2446 = vsel %vm2420, %v2393, %v2394
      %v2447 = vsel %vm2420, %v2392, %v2393
      %v2448 = vsel %vm2420, %v2391, %v2392
      %v2449 = vsel %vm2420, %v2390, %v2391
      %v2450 = vsel %vm2420, %v2389, %v2390
      %v2451 = vsel %vm2420, %v2388, %v2389
      %v2452 = vsel %vm2420, %v2419, %v2388
      %v2453 = vsel %vm2288, 1, 0
      %v2454 = vsel %vm2289, 1, 0
      %v2455 = vsel %vm2290, 1, 0
      %v2456 = vsel %vm2291, 1, 0
      %v2457 = vsel %vm2292, 1, 0
      %v2458 = vsel %vm2293, 1, 0
      %v2459 = vsel %vm2294, 1, 0
      %v2460 = vsel %vm2295, 1, 0
      %v2461 = vsel %vm2296, 1, 0
      %v2462 = vsel %vm2297, 1, 0
      %v2463 = vsel %vm2298, 1, 0
      %v2464 = vsel %vm2299, 1, 0
      %v2465 = vsel %vm2300, 1, 0
      %v2466 = vsel %vm2301, 1, 0
      %v2467 = vsel %vm2302, 1, 0
      %v2468 = vsel %vm2303, 1, 0
      %v2469 = vsel %vm2304, 1, 0
      %v2470 = vsel %vm2305, 1, 0
      %v2471 = vsel %vm2306, 1, 0
      %v2472 = vsel %vm2307, 1, 0
      %v2473 = vsel %vm2308, 1, 0
      %v2474 = vsel %vm2309, 1, 0
      %v2475 = vsel %vm2310, 1, 0
      %v2476 = vsel %vm2311, 1, 0
      %v2477 = vsel %vm2312, 1, 0
      %v2478 = vsel %vm2313, 1, 0
      %v2479 = vsel %vm2314, 1, 0
      %v2480 = vsel %vm2315, 1, 0
      %v2481 = vsel %vm2316, 1, 0
      %v2482 = vsel %vm2317, 1, 0
      %v2483 = vsel %vm2318, 1, 0
      %v2484 = vsel %vm2319, 1, 0
      %vm2485 = vcmp.eq.s32.totalorder %v2453, 1
      %vm2486 = vcmp.eq.s32.totalorder %v2454, 1
      %vm2487 = vcmp.eq.s32.totalorder %v2455, 1
      %vm2488 = vcmp.eq.s32.totalorder %v2456, 1
      %vm2489 = vcmp.eq.s32.totalorder %v2457, 1
      %vm2490 = vcmp.eq.s32.totalorder %v2458, 1
      %vm2491 = vcmp.eq.s32.totalorder %v2459, 1
      %vm2492 = vcmp.eq.s32.totalorder %v2460, 1
      %vm2493 = vcmp.eq.s32.totalorder %v2461, 1
      %vm2494 = vcmp.eq.s32.totalorder %v2462, 1
      %vm2495 = vcmp.eq.s32.totalorder %v2463, 1
      %vm2496 = vcmp.eq.s32.totalorder %v2464, 1
      %vm2497 = vcmp.eq.s32.totalorder %v2465, 1
      %vm2498 = vcmp.eq.s32.totalorder %v2466, 1
      %vm2499 = vcmp.eq.s32.totalorder %v2467, 1
      %vm2500 = vcmp.eq.s32.totalorder %v2468, 1
      %vm2501 = vcmp.eq.s32.totalorder %v2469, 1
      %vm2502 = vcmp.eq.s32.totalorder %v2470, 1
      %vm2503 = vcmp.eq.s32.totalorder %v2471, 1
      %vm2504 = vcmp.eq.s32.totalorder %v2472, 1
      %vm2505 = vcmp.eq.s32.totalorder %v2473, 1
      %vm2506 = vcmp.eq.s32.totalorder %v2474, 1
      %vm2507 = vcmp.eq.s32.totalorder %v2475, 1
      %vm2508 = vcmp.eq.s32.totalorder %v2476, 1
      %vm2509 = vcmp.eq.s32.totalorder %v2477, 1
      %vm2510 = vcmp.eq.s32.totalorder %v2478, 1
      %vm2511 = vcmp.eq.s32.totalorder %v2479, 1
      %vm2512 = vcmp.eq.s32.totalorder %v2480, 1
      %vm2513 = vcmp.eq.s32.totalorder %v2481, 1
      %vm2514 = vcmp.eq.s32.totalorder %v2482, 1
      %vm2515 = vcmp.eq.s32.totalorder %v2483, 1
      %vm2516 = vcmp.eq.s32.totalorder %v2484, 1
      %v2517 = vsel %vm2485, %v2452, 0.0
      %v2518 = vsel %vm2486, %v2451, 0.0
      %v2519 = vsel %vm2487, %v2450, 0.0
      %v2520 = vsel %vm2488, %v2449, 0.0
      %v2521 = vsel %vm2489, %v2448, 0.0
      %v2522 = vsel %vm2490, %v2447, 0.0
      %v2523 = vsel %vm2491, %v2446, 0.0
      %v2524 = vsel %vm2492, %v2445, 0.0
      %v2525 = vsel %vm2493, %v2444, 0.0
      %v2526 = vsel %vm2494, %v2443, 0.0
      %v2527 = vsel %vm2495, %v2442, 0.0
      %v2528 = vsel %vm2496, %v2441, 0.0
      %v2529 = vsel %vm2497, %v2440, 0.0
      %v2530 = vsel %vm2498, %v2439, 0.0
      %v2531 = vsel %vm2499, %v2438, 0.0
      %v2532 = vsel %vm2500, %v2437, 0.0
      %v2533 = vsel %vm2501, %v2436, 0.0
      %v2534 = vsel %vm2502, %v2435, 0.0
      %v2535 = vsel %vm2503, %v2434, 0.0
      %v2536 = vsel %vm2504, %v2433, 0.0
      %v2537 = vsel %vm2505, %v2432, 0.0
      %v2538 = vsel %vm2506, %v2431, 0.0
      %v2539 = vsel %vm2507, %v2430, 0.0
      %v2540 = vsel %vm2508, %v2429, 0.0
      %v2541 = vsel %vm2509, %v2428, 0.0
      %v2542 = vsel %vm2510, %v2427, 0.0
      %v2543 = vsel %vm2511, %v2426, 0.0
      %v2544 = vsel %vm2512, %v2425, 0.0
      %v2545 = vsel %vm2513, %v2424, 0.0
      %v2546 = vsel %vm2514, %v2423, 0.0
      %v2547 = vsel %vm2515, %v2422, 0.0
      %v2548 = vsel %vm2516, %v2421, 0.0
      %v2549 = vlaneseq
      %v2550 = vshrl.u32 %v2549, 7
      %v2551 = vsub.s32 1, %v2550
      %v2552 = vrot.slane %v1870, %v2551
      %v2553 = vmul.f32 %v2517, %v2552
      %v2554 = vmul.f32 %v2518, %v2552
      %v2555 = vmul.f32 %v2519, %v2552
      %v2556 = vmul.f32 %v2520, %v2552
      %v2557 = vmul.f32 %v2521, %v2552
      %v2558 = vmul.f32 %v2522, %v2552
      %v2559 = vmul.f32 %v2523, %v2552
      %v2560 = vmul.f32 %v2524, %v2552
      %v2561 = vmul.f32 %v2525, %v2552
      %v2562 = vmul.f32 %v2526, %v2552
      %v2563 = vmul.f32 %v2527, %v2552
      %v2564 = vmul.f32 %v2528, %v2552
      %v2565 = vmul.f32 %v2529, %v2552
      %v2566 = vmul.f32 %v2530, %v2552
      %v2567 = vmul.f32 %v2531, %v2552
      %v2568 = vmul.f32 %v2532, %v2552
      %v2569 = vmul.f32 %v2533, %v2552
      %v2570 = vmul.f32 %v2534, %v2552
      %v2571 = vmul.f32 %v2535, %v2552
      %v2572 = vmul.f32 %v2536, %v2552
      %v2573 = vmul.f32 %v2537, %v2552
      %v2574 = vmul.f32 %v2538, %v2552
      %v2575 = vmul.f32 %v2539, %v2552
      %v2576 = vmul.f32 %v2540, %v2552
      %v2577 = vmul.f32 %v2541, %v2552
      %v2578 = vmul.f32 %v2542, %v2552
      %v2579 = vmul.f32 %v2543, %v2552
      %v2580 = vmul.f32 %v2544, %v2552
      %v2581 = vmul.f32 %v2545, %v2552
      %v2582 = vmul.f32 %v2546, %v2552
      %v2583 = vmul.f32 %v2547, %v2552
      %v2584 = vmul.f32 %v2548, %v2552
      %v2585 = vadd.f32 %v2356, %v2553
      %v2586 = vadd.f32 %v2357, %v2554
      %v2587 = vadd.f32 %v2358, %v2555
      %v2588 = vadd.f32 %v2359, %v2556
      %v2589 = vadd.f32 %v2360, %v2557
      %v2590 = vadd.f32 %v2361, %v2558
      %v2591 = vadd.f32 %v2362, %v2559
      %v2592 = vadd.f32 %v2363, %v2560
      %v2593 = vadd.f32 %v2364, %v2561
      %v2594 = vadd.f32 %v2365, %v2562
      %v2595 = vadd.f32 %v2366, %v2563
      %v2596 = vadd.f32 %v2367, %v2564
      %v2597 = vadd.f32 %v2368, %v2565
      %v2598 = vadd.f32 %v2369, %v2566
      %v2599 = vadd.f32 %v2370, %v2567
      %v2600 = vadd.f32 %v2371, %v2568
      %v2601 = vadd.f32 %v2372, %v2569
      %v2602 = vadd.f32 %v2373, %v2570
      %v2603 = vadd.f32 %v2374, %v2571
      %v2604 = vadd.f32 %v2375, %v2572
      %v2605 = vadd.f32 %v2376, %v2573
      %v2606 = vadd.f32 %v2377, %v2574
      %v2607 = vadd.f32 %v2378, %v2575
      %v2608 = vadd.f32 %v2379, %v2576
      %v2609 = vadd.f32 %v2380, %v2577
      %v2610 = vadd.f32 %v2381, %v2578
      %v2611 = vadd.f32 %v2382, %v2579
      %v2612 = vadd.f32 %v2383, %v2580
      %v2613 = vadd.f32 %v2384, %v2581
      %v2614 = vadd.f32 %v2385, %v2582
      %v2615 = vadd.f32 %v2386, %v2583
      %v2616 = vadd.f32 %v2387, %v2584
      %v2617 = vrot.slane %v1744, 6
      %v2618 = vrot.slane %v1747, 6
      %v2619 = vrot.slane %v1752, 6
      %v2620 = vrot.slane %v1755, 6
      %v2621 = vrot.slane %v1760, 6
      %v2622 = vrot.slane %v1763, 6
      %v2623 = vrot.slane %v1768, 6
      %v2624 = vrot.slane %v1771, 6
      %v2625 = vrot.slane %v1776, 6
      %v2626 = vrot.slane %v1779, 6
      %v2627 = vrot.slane %v1784, 6
      %v2628 = vrot.slane %v1787, 6
      %v2629 = vrot.slane %v1792, 6
      %v2630 = vrot.slane %v1795, 6
      %v2631 = vrot.slane %v1800, 6
      %v2632 = vrot.slane %v1803, 6
      %v2633 = vrot.slane %v1808, 6
      %v2634 = vrot.slane %v1811, 6
      %v2635 = vrot.slane %v1816, 6
      %v2636 = vrot.slane %v1819, 6
      %v2637 = vrot.slane %v1824, 6
      %v2638 = vrot.slane %v1827, 6
      %v2639 = vrot.slane %v1832, 6
      %v2640 = vrot.slane %v1835, 6
      %v2641 = vrot.slane %v1840, 6
      %v2642 = vrot.slane %v1843, 6
      %v2643 = vrot.slane %v1848, 6
      %v2644 = vrot.slane %v1851, 6
      %v2645 = vrot.slane %v1856, 6
      %v2646 = vrot.slane %v1859, 6
      %v2647 = vrot.slane %v1864, 6
      %v2648 = vrot.slane %v1867, 6
      %vm2649 = vcmp.lt.s32.totalorder %v1872, 2
      %v2650 = vsel %vm2649, %v2647, %v2648
      %v2651 = vsel %vm2649, %v2646, %v2647
      %v2652 = vsel %vm2649, %v2645, %v2646
      %v2653 = vsel %vm2649, %v2644, %v2645
      %v2654 = vsel %vm2649, %v2643, %v2644
      %v2655 = vsel %vm2649, %v2642, %v2643
      %v2656 = vsel %vm2649, %v2641, %v2642
      %v2657 = vsel %vm2649, %v2640, %v2641
      %v2658 = vsel %vm2649, %v2639, %v2640
      %v2659 = vsel %vm2649, %v2638, %v2639
      %v2660 = vsel %vm2649, %v2637, %v2638
      %v2661 = vsel %vm2649, %v2636, %v2637
      %v2662 = vsel %vm2649, %v2635, %v2636
      %v2663 = vsel %vm2649, %v2634, %v2635
      %v2664 = vsel %vm2649, %v2633, %v2634
      %v2665 = vsel %vm2649, %v2632, %v2633
      %v2666 = vsel %vm2649, %v2631, %v2632
      %v2667 = vsel %vm2649, %v2630, %v2631
      %v2668 = vsel %vm2649, %v2629, %v2630
      %v2669 = vsel %vm2649, %v2628, %v2629
      %v2670 = vsel %vm2649, %v2627, %v2628
      %v2671 = vsel %vm2649, %v2626, %v2627
      %v2672 = vsel %vm2649, %v2625, %v2626
      %v2673 = vsel %vm2649, %v2624, %v2625
      %v2674 = vsel %vm2649, %v2623, %v2624
      %v2675 = vsel %vm2649, %v2622, %v2623
      %v2676 = vsel %vm2649, %v2621, %v2622
      %v2677 = vsel %vm2649, %v2620, %v2621
      %v2678 = vsel %vm2649, %v2619, %v2620
      %v2679 = vsel %vm2649, %v2618, %v2619
      %v2680 = vsel %vm2649, %v2617, %v2618
      %v2681 = vsel %vm2649, %v2648, %v2617
      %v2682 = vsel %vm2320, 1, 0
      %v2683 = vsel %vm2321, 1, 0
      %v2684 = vsel %vm2322, 1, 0
      %v2685 = vsel %vm2323, 1, 0
      %v2686 = vsel %vm2324, 1, 0
      %v2687 = vsel %vm2325, 1, 0
      %v2688 = vsel %vm2326, 1, 0
      %v2689 = vsel %vm2327, 1, 0
      %v2690 = vsel %vm2328, 1, 0
      %v2691 = vsel %vm2329, 1, 0
      %v2692 = vsel %vm2330, 1, 0
      %v2693 = vsel %vm2331, 1, 0
      %v2694 = vsel %vm2332, 1, 0
      %v2695 = vsel %vm2333, 1, 0
      %v2696 = vsel %vm2334, 1, 0
      %v2697 = vsel %vm2335, 1, 0
      %v2698 = vsel %vm2336, 1, 0
      %v2699 = vsel %vm2337, 1, 0
      %v2700 = vsel %vm2338, 1, 0
      %v2701 = vsel %vm2339, 1, 0
      %v2702 = vsel %vm2340, 1, 0
      %v2703 = vsel %vm2341, 1, 0
      %v2704 = vsel %vm2342, 1, 0
      %v2705 = vsel %vm2343, 1, 0
      %v2706 = vsel %vm2344, 1, 0
      %v2707 = vsel %vm2345, 1, 0
      %v2708 = vsel %vm2346, 1, 0
      %v2709 = vsel %vm2347, 1, 0
      %v2710 = vsel %vm2348, 1, 0
      %v2711 = vsel %vm2349, 1, 0
      %v2712 = vsel %vm2350, 1, 0
      %v2713 = vsel %vm2351, 1, 0
      %vm2714 = vcmp.eq.s32.totalorder %v2682, 1
      %vm2715 = vcmp.eq.s32.totalorder %v2683, 1
      %vm2716 = vcmp.eq.s32.totalorder %v2684, 1
      %vm2717 = vcmp.eq.s32.totalorder %v2685, 1
      %vm2718 = vcmp.eq.s32.totalorder %v2686, 1
      %vm2719 = vcmp.eq.s32.totalorder %v2687, 1
      %vm2720 = vcmp.eq.s32.totalorder %v2688, 1
      %vm2721 = vcmp.eq.s32.totalorder %v2689, 1
      %vm2722 = vcmp.eq.s32.totalorder %v2690, 1
      %vm2723 = vcmp.eq.s32.totalorder %v2691, 1
      %vm2724 = vcmp.eq.s32.totalorder %v2692, 1
      %vm2725 = vcmp.eq.s32.totalorder %v2693, 1
      %vm2726 = vcmp.eq.s32.totalorder %v2694, 1
      %vm2727 = vcmp.eq.s32.totalorder %v2695, 1
      %vm2728 = vcmp.eq.s32.totalorder %v2696, 1
      %vm2729 = vcmp.eq.s32.totalorder %v2697, 1
      %vm2730 = vcmp.eq.s32.totalorder %v2698, 1
      %vm2731 = vcmp.eq.s32.totalorder %v2699, 1
      %vm2732 = vcmp.eq.s32.totalorder %v2700, 1
      %vm2733 = vcmp.eq.s32.totalorder %v2701, 1
      %vm2734 = vcmp.eq.s32.totalorder %v2702, 1
      %vm2735 = vcmp.eq.s32.totalorder %v2703, 1
      %vm2736 = vcmp.eq.s32.totalorder %v2704, 1
      %vm2737 = vcmp.eq.s32.totalorder %v2705, 1
      %vm2738 = vcmp.eq.s32.totalorder %v2706, 1
      %vm2739 = vcmp.eq.s32.totalorder %v2707, 1
      %vm2740 = vcmp.eq.s32.totalorder %v2708, 1
      %vm2741 = vcmp.eq.s32.totalorder %v2709, 1
      %vm2742 = vcmp.eq.s32.totalorder %v2710, 1
      %vm2743 = vcmp.eq.s32.totalorder %v2711, 1
      %vm2744 = vcmp.eq.s32.totalorder %v2712, 1
      %vm2745 = vcmp.eq.s32.totalorder %v2713, 1
      %v2746 = vsel %vm2714, %v2681, 0.0
      %v2747 = vsel %vm2715, %v2680, 0.0
      %v2748 = vsel %vm2716, %v2679, 0.0
      %v2749 = vsel %vm2717, %v2678, 0.0
      %v2750 = vsel %vm2718, %v2677, 0.0
      %v2751 = vsel %vm2719, %v2676, 0.0
      %v2752 = vsel %vm2720, %v2675, 0.0
      %v2753 = vsel %vm2721, %v2674, 0.0
      %v2754 = vsel %vm2722, %v2673, 0.0
      %v2755 = vsel %vm2723, %v2672, 0.0
      %v2756 = vsel %vm2724, %v2671, 0.0
      %v2757 = vsel %vm2725, %v2670, 0.0
      %v2758 = vsel %vm2726, %v2669, 0.0
      %v2759 = vsel %vm2727, %v2668, 0.0
      %v2760 = vsel %vm2728, %v2667, 0.0
      %v2761 = vsel %vm2729, %v2666, 0.0
      %v2762 = vsel %vm2730, %v2665, 0.0
      %v2763 = vsel %vm2731, %v2664, 0.0
      %v2764 = vsel %vm2732, %v2663, 0.0
      %v2765 = vsel %vm2733, %v2662, 0.0
      %v2766 = vsel %vm2734, %v2661, 0.0
      %v2767 = vsel %vm2735, %v2660, 0.0
      %v2768 = vsel %vm2736, %v2659, 0.0
      %v2769 = vsel %vm2737, %v2658, 0.0
      %v2770 = vsel %vm2738, %v2657, 0.0
      %v2771 = vsel %vm2739, %v2656, 0.0
      %v2772 = vsel %vm2740, %v2655, 0.0
      %v2773 = vsel %vm2741, %v2654, 0.0
      %v2774 = vsel %vm2742, %v2653, 0.0
      %v2775 = vsel %vm2743, %v2652, 0.0
      %v2776 = vsel %vm2744, %v2651, 0.0
      %v2777 = vsel %vm2745, %v2650, 0.0
      %v2778 = vlaneseq
      %v2779 = vshrl.u32 %v2778, 7
      %v2780 = vsub.s32 0, %v2779
      %v2781 = vrot.slane %v1870, %v2780
      %v2782 = vmul.f32 %v2746, %v2781
      %v2783 = vmul.f32 %v2747, %v2781
      %v2784 = vmul.f32 %v2748, %v2781
      %v2785 = vmul.f32 %v2749, %v2781
      %v2786 = vmul.f32 %v2750, %v2781
      %v2787 = vmul.f32 %v2751, %v2781
      %v2788 = vmul.f32 %v2752, %v2781
      %v2789 = vmul.f32 %v2753, %v2781
      %v2790 = vmul.f32 %v2754, %v2781
      %v2791 = vmul.f32 %v2755, %v2781
      %v2792 = vmul.f32 %v2756, %v2781
      %v2793 = vmul.f32 %v2757, %v2781
      %v2794 = vmul.f32 %v2758, %v2781
      %v2795 = vmul.f32 %v2759, %v2781
      %v2796 = vmul.f32 %v2760, %v2781
      %v2797 = vmul.f32 %v2761, %v2781
      %v2798 = vmul.f32 %v2762, %v2781
      %v2799 = vmul.f32 %v2763, %v2781
      %v2800 = vmul.f32 %v2764, %v2781
      %v2801 = vmul.f32 %v2765, %v2781
      %v2802 = vmul.f32 %v2766, %v2781
      %v2803 = vmul.f32 %v2767, %v2781
      %v2804 = vmul.f32 %v2768, %v2781
      %v2805 = vmul.f32 %v2769, %v2781
      %v2806 = vmul.f32 %v2770, %v2781
      %v2807 = vmul.f32 %v2771, %v2781
      %v2808 = vmul.f32 %v2772, %v2781
      %v2809 = vmul.f32 %v2773, %v2781
      %v2810 = vmul.f32 %v2774, %v2781
      %v2811 = vmul.f32 %v2775, %v2781
      %v2812 = vmul.f32 %v2776, %v2781
      %v2813 = vmul.f32 %v2777, %v2781
      %v2814 = vadd.f32 %v2585, %v2782
      %v2815 = vadd.f32 %v2586, %v2783
      %v2816 = vadd.f32 %v2587, %v2784
      %v2817 = vadd.f32 %v2588, %v2785
      %v2818 = vadd.f32 %v2589, %v2786
      %v2819 = vadd.f32 %v2590, %v2787
      %v2820 = vadd.f32 %v2591, %v2788
      %v2821 = vadd.f32 %v2592, %v2789
      %v2822 = vadd.f32 %v2593, %v2790
      %v2823 = vadd.f32 %v2594, %v2791
      %v2824 = vadd.f32 %v2595, %v2792
      %v2825 = vadd.f32 %v2596, %v2793
      %v2826 = vadd.f32 %v2597, %v2794
      %v2827 = vadd.f32 %v2598, %v2795
      %v2828 = vadd.f32 %v2599, %v2796
      %v2829 = vadd.f32 %v2600, %v2797
      %v2830 = vadd.f32 %v2601, %v2798
      %v2831 = vadd.f32 %v2602, %v2799
      %v2832 = vadd.f32 %v2603, %v2800
      %v2833 = vadd.f32 %v2604, %v2801
      %v2834 = vadd.f32 %v2605, %v2802
      %v2835 = vadd.f32 %v2606, %v2803
      %v2836 = vadd.f32 %v2607, %v2804
      %v2837 = vadd.f32 %v2608, %v2805
      %v2838 = vadd.f32 %v2609, %v2806
      %v2839 = vadd.f32 %v2610, %v2807
      %v2840 = vadd.f32 %v2611, %v2808
      %v2841 = vadd.f32 %v2612, %v2809
      %v2842 = vadd.f32 %v2613, %v2810
      %v2843 = vadd.f32 %v2614, %v2811
      %v2844 = vadd.f32 %v2615, %v2812
      %v2845 = vadd.f32 %v2616, %v2813
      %v2846 = vld [vmem:[%s8] sm:$0x1]
      %v2848 = vlaneseq
      %v2849 = vshrl.u32 %v2848, 7
      %v2850 = vsub.s32 0, %v2849
      %v2851 = vrot.slane %v2846, %v2850
      %v2853 = vadd.f32 %v2814, %v2851
      %v2854 = vadd.f32 %v2815, %v2851
      %v2855 = vadd.f32 %v2816, %v2851
      %v2856 = vadd.f32 %v2817, %v2851
      %v2857 = vadd.f32 %v2818, %v2851
      %v2858 = vadd.f32 %v2819, %v2851
      %v2859 = vadd.f32 %v2820, %v2851
      %v2860 = vadd.f32 %v2821, %v2851
      %v2861 = vadd.f32 %v2822, %v2851
      %v2862 = vadd.f32 %v2823, %v2851
      %v2863 = vadd.f32 %v2824, %v2851
      %v2864 = vadd.f32 %v2825, %v2851
      %v2865 = vadd.f32 %v2826, %v2851
      %v2866 = vadd.f32 %v2827, %v2851
      %v2867 = vadd.f32 %v2828, %v2851
      %v2868 = vadd.f32 %v2829, %v2851
      %v2869 = vadd.f32 %v2830, %v2851
      %v2870 = vadd.f32 %v2831, %v2851
      %v2871 = vadd.f32 %v2832, %v2851
      %v2872 = vadd.f32 %v2833, %v2851
      %v2873 = vadd.f32 %v2834, %v2851
      %v2874 = vadd.f32 %v2835, %v2851
      %v2875 = vadd.f32 %v2836, %v2851
      %v2876 = vadd.f32 %v2837, %v2851
      %v2877 = vadd.f32 %v2838, %v2851
      %v2878 = vadd.f32 %v2839, %v2851
      %v2879 = vadd.f32 %v2840, %v2851
      %v2880 = vadd.f32 %v2841, %v2851
      %v2881 = vadd.f32 %v2842, %v2851
      %v2882 = vadd.f32 %v2843, %v2851
      %v2883 = vadd.f32 %v2844, %v2851
      %v2884 = vadd.f32 %v2845, %v2851
      %v2885 = vxor.u32 %v1553, 2147483648
      %v2886 = vxor.u32 %v1557, 2147483648
      %v2887 = vxor.u32 %v1563, 2147483648
      %v2888 = vxor.u32 %v1567, 2147483648
      %v2889 = vxor.u32 %v1573, 2147483648
      %v2890 = vxor.u32 %v1577, 2147483648
      %v2891 = vxor.u32 %v1583, 2147483648
      %v2892 = vxor.u32 %v1587, 2147483648
      %v2893 = vxor.u32 %v1593, 2147483648
      %v2894 = vxor.u32 %v1597, 2147483648
      %v2895 = vxor.u32 %v1603, 2147483648
      %v2896 = vxor.u32 %v1607, 2147483648
      %v2897 = vxor.u32 %v1613, 2147483648
      %v2898 = vxor.u32 %v1617, 2147483648
      %v2899 = vxor.u32 %v1623, 2147483648
      %v2900 = vxor.u32 %v1627, 2147483648
      %v2901 = vxor.u32 %v1633, 2147483648
      %v2902 = vxor.u32 %v1637, 2147483648
      %v2903 = vxor.u32 %v1643, 2147483648
      %v2904 = vxor.u32 %v1647, 2147483648
      %v2905 = vxor.u32 %v1653, 2147483648
      %v2906 = vxor.u32 %v1657, 2147483648
      %v2907 = vxor.u32 %v1663, 2147483648
      %v2908 = vxor.u32 %v1667, 2147483648
      %v2909 = vxor.u32 %v1673, 2147483648
      %v2910 = vxor.u32 %v1677, 2147483648
      %v2911 = vxor.u32 %v1683, 2147483648
      %v2912 = vxor.u32 %v1687, 2147483648
      %v2913 = vxor.u32 %v1693, 2147483648
      %v2914 = vxor.u32 %v1697, 2147483648
      %v2915 = vxor.u32 %v1703, 2147483648
      %v2916 = vxor.u32 %v1707, 2147483648
      %v2917 = vmul.f32 %v2885, 1.442695
      %v2918 = vpow.pop %v2917
      %v2919 = vmul.f32 %v2886, 1.442695
      %v2920 = vpow.pop %v2919
      %v2921 = vmul.f32 %v2887, 1.442695
      %v2922 = vpow.pop %v2921
      %v2923 = vmul.f32 %v2888, 1.442695
      %v2924 = vpow.pop %v2923
      %v2925 = vmul.f32 %v2889, 1.442695
      %v2926 = vpow.pop %v2925
      %v2927 = vmul.f32 %v2890, 1.442695
      %v2928 = vpow.pop %v2927
      %v2929 = vmul.f32 %v2891, 1.442695
      %v2930 = vpow.pop %v2929
      %v2931 = vmul.f32 %v2892, 1.442695
      %v2932 = vpow.pop %v2931
      %v2933 = vmul.f32 %v2893, 1.442695
      %v2934 = vpow.pop %v2933
      %v2935 = vmul.f32 %v2894, 1.442695
      %v2936 = vpow.pop %v2935
      %v2937 = vmul.f32 %v2895, 1.442695
      %v2938 = vpow.pop %v2937
      %v2939 = vmul.f32 %v2896, 1.442695
      %v2940 = vpow.pop %v2939
      %v2941 = vmul.f32 %v2897, 1.442695
      %v2942 = vpow.pop %v2941
      %v2943 = vmul.f32 %v2898, 1.442695
      %v2944 = vpow.pop %v2943
      %v2945 = vmul.f32 %v2899, 1.442695
      %v2946 = vpow.pop %v2945
      %v2947 = vmul.f32 %v2900, 1.442695
      %v2948 = vpow.pop %v2947
      %v2949 = vmul.f32 %v2901, 1.442695
      %v2950 = vpow.pop %v2949
      %v2951 = vmul.f32 %v2902, 1.442695
      %v2952 = vpow.pop %v2951
      %v2953 = vmul.f32 %v2903, 1.442695
      %v2954 = vpow.pop %v2953
      %v2955 = vmul.f32 %v2904, 1.442695
      %v2956 = vpow.pop %v2955
      %v2957 = vmul.f32 %v2905, 1.442695
      %v2958 = vpow.pop %v2957
      %v2959 = vmul.f32 %v2906, 1.442695
      %v2960 = vpow.pop %v2959
      %v2961 = vmul.f32 %v2907, 1.442695
      %v2962 = vpow.pop %v2961
      %v2963 = vmul.f32 %v2908, 1.442695
      %v2964 = vpow.pop %v2963
      %v2965 = vmul.f32 %v2909, 1.442695
      %v2966 = vpow.pop %v2965
      %v2967 = vmul.f32 %v2910, 1.442695
      %v2968 = vpow.pop %v2967
      %v2969 = vmul.f32 %v2911, 1.442695
      %v2970 = vpow.pop %v2969
      %v2971 = vmul.f32 %v2912, 1.442695
      %v2972 = vpow.pop %v2971
      %v2973 = vmul.f32 %v2913, 1.442695
      %v2974 = vpow.pop %v2973
      %v2975 = vmul.f32 %v2914, 1.442695
      %v2976 = vpow.pop %v2975
      %v2977 = vmul.f32 %v2915, 1.442695
      %v2978 = vpow.pop %v2977
      %v2979 = vmul.f32 %v2916, 1.442695
      %v2980 = vpow.pop %v2979
      %v2981 = vadd.f32 %v2918, 1.0
      %v2982 = vadd.f32 %v2920, 1.0
      %v2983 = vadd.f32 %v2922, 1.0
      %v2984 = vadd.f32 %v2924, 1.0
      %v2985 = vadd.f32 %v2926, 1.0
      %v2986 = vadd.f32 %v2928, 1.0
      %v2987 = vadd.f32 %v2930, 1.0
      %v2988 = vadd.f32 %v2932, 1.0
      %v2989 = vadd.f32 %v2934, 1.0
      %v2990 = vadd.f32 %v2936, 1.0
      %v2991 = vadd.f32 %v2938, 1.0
      %v2992 = vadd.f32 %v2940, 1.0
      %v2993 = vadd.f32 %v2942, 1.0
      %v2994 = vadd.f32 %v2944, 1.0
      %v2995 = vadd.f32 %v2946, 1.0
      %v2996 = vadd.f32 %v2948, 1.0
      %v2997 = vadd.f32 %v2950, 1.0
      %v2998 = vadd.f32 %v2952, 1.0
      %v2999 = vadd.f32 %v2954, 1.0
      %v3000 = vadd.f32 %v2956, 1.0
      %v3001 = vadd.f32 %v2958, 1.0
      %v3002 = vadd.f32 %v2960, 1.0
      %v3003 = vadd.f32 %v2962, 1.0
      %v3004 = vadd.f32 %v2964, 1.0
      %v3005 = vadd.f32 %v2966, 1.0
      %v3006 = vadd.f32 %v2968, 1.0
      %v3007 = vadd.f32 %v2970, 1.0
      %v3008 = vadd.f32 %v2972, 1.0
      %v3009 = vadd.f32 %v2974, 1.0
      %v3010 = vadd.f32 %v2976, 1.0
      %v3011 = vadd.f32 %v2978, 1.0
      %v3012 = vadd.f32 %v2980, 1.0
      %v3013 = vrcp.pop %v2981
      %v3014 = vmul.f32 1.0, %v3013
      %v3015 = vrcp.pop %v2982
      %v3016 = vmul.f32 1.0, %v3015
      %v3017 = vrcp.pop %v2983
      %v3018 = vmul.f32 1.0, %v3017
      %v3019 = vrcp.pop %v2984
      %v3020 = vmul.f32 1.0, %v3019
      %v3021 = vrcp.pop %v2985
      %v3022 = vmul.f32 1.0, %v3021
      %v3023 = vrcp.pop %v2986
      %v3024 = vmul.f32 1.0, %v3023
      %v3025 = vrcp.pop %v2987
      %v3026 = vmul.f32 1.0, %v3025
      %v3027 = vrcp.pop %v2988
      %v3028 = vmul.f32 1.0, %v3027
      %v3029 = vrcp.pop %v2989
      %v3030 = vmul.f32 1.0, %v3029
      %v3031 = vrcp.pop %v2990
      %v3032 = vmul.f32 1.0, %v3031
      %v3033 = vrcp.pop %v2991
      %v3034 = vmul.f32 1.0, %v3033
      %v3035 = vrcp.pop %v2992
      %v3036 = vmul.f32 1.0, %v3035
      %v3037 = vrcp.pop %v2993
      %v3038 = vmul.f32 1.0, %v3037
      %v3039 = vrcp.pop %v2994
      %v3040 = vmul.f32 1.0, %v3039
      %v3041 = vrcp.pop %v2995
      %v3042 = vmul.f32 1.0, %v3041
      %v3043 = vrcp.pop %v2996
      %v3044 = vmul.f32 1.0, %v3043
      %v3045 = vrcp.pop %v2997
      %v3046 = vmul.f32 1.0, %v3045
      %v3047 = vrcp.pop %v2998
      %v3048 = vmul.f32 1.0, %v3047
      %v3049 = vrcp.pop %v2999
      %v3050 = vmul.f32 1.0, %v3049
      %v3051 = vrcp.pop %v3000
      %v3052 = vmul.f32 1.0, %v3051
      %v3053 = vrcp.pop %v3001
      %v3054 = vmul.f32 1.0, %v3053
      %v3055 = vrcp.pop %v3002
      %v3056 = vmul.f32 1.0, %v3055
      %v3057 = vrcp.pop %v3003
      %v3058 = vmul.f32 1.0, %v3057
      %v3059 = vrcp.pop %v3004
      %v3060 = vmul.f32 1.0, %v3059
      %v3061 = vrcp.pop %v3005
      %v3062 = vmul.f32 1.0, %v3061
      %v3063 = vrcp.pop %v3006
      %v3064 = vmul.f32 1.0, %v3063
      %v3065 = vrcp.pop %v3007
      %v3066 = vmul.f32 1.0, %v3065
      %v3067 = vrcp.pop %v3008
      %v3068 = vmul.f32 1.0, %v3067
      %v3069 = vrcp.pop %v3009
      %v3070 = vmul.f32 1.0, %v3069
      %v3071 = vrcp.pop %v3010
      %v3072 = vmul.f32 1.0, %v3071
      %v3073 = vrcp.pop %v3011
      %v3074 = vmul.f32 1.0, %v3073
      %v3075 = vrcp.pop %v3012
      %v3076 = vmul.f32 1.0, %v3075
      %v3077 = vmul.f32 %v1551, %v3014
      %v3078 = vmul.f32 %v1555, %v3016
      %v3079 = vmul.f32 %v1561, %v3018
      %v3080 = vmul.f32 %v1565, %v3020
      %v3081 = vmul.f32 %v1571, %v3022
      %v3082 = vmul.f32 %v1575, %v3024
      %v3083 = vmul.f32 %v1581, %v3026
      %v3084 = vmul.f32 %v1585, %v3028
      %v3085 = vmul.f32 %v1591, %v3030
      %v3086 = vmul.f32 %v1595, %v3032
      %v3087 = vmul.f32 %v1601, %v3034
      %v3088 = vmul.f32 %v1605, %v3036
      %v3089 = vmul.f32 %v1611, %v3038
      %v3090 = vmul.f32 %v1615, %v3040
      %v3091 = vmul.f32 %v1621, %v3042
      %v3092 = vmul.f32 %v1625, %v3044
      %v3093 = vmul.f32 %v1631, %v3046
      %v3094 = vmul.f32 %v1635, %v3048
      %v3095 = vmul.f32 %v1641, %v3050
      %v3096 = vmul.f32 %v1645, %v3052
      %v3097 = vmul.f32 %v1651, %v3054
      %v3098 = vmul.f32 %v1655, %v3056
      %v3099 = vmul.f32 %v1661, %v3058
      %v3100 = vmul.f32 %v1665, %v3060
      %v3101 = vmul.f32 %v1671, %v3062
      %v3102 = vmul.f32 %v1675, %v3064
      %v3103 = vmul.f32 %v1681, %v3066
      %v3104 = vmul.f32 %v1685, %v3068
      %v3105 = vmul.f32 %v1691, %v3070
      %v3106 = vmul.f32 %v1695, %v3072
      %v3107 = vmul.f32 %v1701, %v3074
      %v3108 = vmul.f32 %v1705, %v3076
      %v3109 = vmul.f32 %v3077, %v2853
      %v3110 = vmul.f32 %v3078, %v2854
      %v3111 = vmul.f32 %v3079, %v2855
      %v3112 = vmul.f32 %v3080, %v2856
      %v3113 = vmul.f32 %v3081, %v2857
      %v3114 = vmul.f32 %v3082, %v2858
      %v3115 = vmul.f32 %v3083, %v2859
      %v3116 = vmul.f32 %v3084, %v2860
      %v3117 = vmul.f32 %v3085, %v2861
      %v3118 = vmul.f32 %v3086, %v2862
      %v3119 = vmul.f32 %v3087, %v2863
      %v3120 = vmul.f32 %v3088, %v2864
      %v3121 = vmul.f32 %v3089, %v2865
      %v3122 = vmul.f32 %v3090, %v2866
      %v3123 = vmul.f32 %v3091, %v2867
      %v3124 = vmul.f32 %v3092, %v2868
      %v3125 = vmul.f32 %v3093, %v2869
      %v3126 = vmul.f32 %v3094, %v2870
      %v3127 = vmul.f32 %v3095, %v2871
      %v3128 = vmul.f32 %v3096, %v2872
      %v3129 = vmul.f32 %v3097, %v2873
      %v3130 = vmul.f32 %v3098, %v2874
      %v3131 = vmul.f32 %v3099, %v2875
      %v3132 = vmul.f32 %v3100, %v2876
      %v3133 = vmul.f32 %v3101, %v2877
      %v3134 = vmul.f32 %v3102, %v2878
      %v3135 = vmul.f32 %v3103, %v2879
      %v3136 = vmul.f32 %v3104, %v2880
      %v3137 = vmul.f32 %v3105, %v2881
      %v3138 = vmul.f32 %v3106, %v2882
      %v3139 = vmul.f32 %v3107, %v2883
      %v3140 = vmul.f32 %v3108, %v2884
      %v3141 = vpack.c.bf16 %v3110, %v3109
      %v3142 = vpack.c.bf16 %v3112, %v3111
      %v3143 = vpack.c.bf16 %v3114, %v3113
      %v3144 = vpack.c.bf16 %v3116, %v3115
      %v3145 = vpack.c.bf16 %v3118, %v3117
      %v3146 = vpack.c.bf16 %v3120, %v3119
      %v3147 = vpack.c.bf16 %v3122, %v3121
      %v3148 = vpack.c.bf16 %v3124, %v3123
      %v3149 = vpack.c.bf16 %v3126, %v3125
      %v3150 = vpack.c.bf16 %v3128, %v3127
      %v3151 = vpack.c.bf16 %v3130, %v3129
      %v3152 = vpack.c.bf16 %v3132, %v3131
      %v3153 = vpack.c.bf16 %v3134, %v3133
      %v3154 = vpack.c.bf16 %v3136, %v3135
      %v3155 = vpack.c.bf16 %v3138, %v3137
      %v3156 = vpack.c.bf16 %v3140, %v3139
      %v3157 = vld [vmem:[%s9] sm:$0xf]
      %v3158 = vld [vmem:[%s9 + $0x4] sm:$0xf]
      %v3159 = vld [vmem:[%s9 + $0x8] sm:$0xf]
      %v3160 = vld [vmem:[%s9 + $0xc] sm:$0xf]
      %v3161 = vld [vmem:[%s9 + $0x10] sm:$0xf]
      %v3162 = vld [vmem:[%s9 + $0x14] sm:$0xf]
      %v3163 = vld [vmem:[%s9 + $0x18] sm:$0xf]
      %v3164 = vld [vmem:[%s9 + $0x1c] sm:$0xf]
      %v3165 = vld [vmem:[%s9 + $0x20] sm:$0xf]
      %v3166 = vld [vmem:[%s9 + $0x24] sm:$0xf]
      %v3167 = vld [vmem:[%s9 + $0x28] sm:$0xf]
      %v3168 = vld [vmem:[%s9 + $0x2c] sm:$0xf]
      %v3169 = vld [vmem:[%s9 + $0x30] sm:$0xf]
      %v3170 = vld [vmem:[%s9 + $0x34] sm:$0xf]
      %v3171 = vld [vmem:[%s9 + $0x38] sm:$0xf]
      %v3172 = vld [vmem:[%s9 + $0x3c] sm:$0xf]
      %v3173 = vld [vmem:[%s10] sm:$0x1]
      %v3175 = vlaneseq
      %v3176 = vshrl.u32 %v3175, 7
      %v3177 = vsub.s32 0, %v3176
      %v3178 = vrot.slane %v3173, %v3177
      %v3196 = vunpack.c.l.b16 %v3157
      %v3197 = vunpack.c.l.b16 %v3158
      %v3198 = vunpack.c.l.b16 %v3159
      %v3199 = vunpack.c.l.b16 %v3160
      %v3200 = vunpack.c.l.b16 %v3161
      %v3201 = vunpack.c.l.b16 %v3162
      %v3202 = vunpack.c.l.b16 %v3163
      %v3203 = vunpack.c.l.b16 %v3164
      %v3204 = vunpack.c.l.b16 %v3165
      %v3205 = vunpack.c.l.b16 %v3166
      %v3206 = vunpack.c.l.b16 %v3167
      %v3207 = vunpack.c.l.b16 %v3168
      %v3208 = vunpack.c.l.b16 %v3169
      %v3209 = vunpack.c.l.b16 %v3170
      %v3210 = vunpack.c.l.b16 %v3171
      %v3211 = vunpack.c.l.b16 %v3172
      %v3212 = vpack.c.b16 %v3197, %v3196
      %v3213 = vpack.c.b16 %v3199, %v3198
      %v3214 = vpack.c.b16 %v3201, %v3200
      %v3215 = vpack.c.b16 %v3203, %v3202
      %v3216 = vpack.c.b16 %v3205, %v3204
      %v3217 = vpack.c.b16 %v3207, %v3206
      %v3218 = vpack.c.b16 %v3209, %v3208
      %v3219 = vpack.c.b16 %v3211, %v3210
      %3228 = vmatprep.subr.bf16.mxu0 0
      %3229 = vmatpush1.bf16.msra.mxu0 %v3219
      %3230 = vmatprep.subr.bf16.mxu0 0
      %3231 = vmatpush1.bf16.msra.mxu0 %v3218
      %3232 = vmatprep.subr.bf16.mxu0 0
      %3233 = vmatpush1.bf16.msra.mxu0 %v3217
      %3234 = vmatprep.subr.bf16.mxu0 0
      %3235 = vmatpush1.bf16.msra.mxu0 %v3216
      %3236 = vmatprep.subr.bf16.mxu0 0
      %3237 = vmatpush1.bf16.msra.mxu0 %v3215
      %3238 = vmatprep.subr.bf16.mxu0 0
      %3239 = vmatpush1.bf16.msra.mxu0 %v3214
      %3240 = vmatprep.subr.bf16.mxu0 0
      %3241 = vmatpush1.bf16.msra.mxu0 %v3213
      %3242 = vmatprep.subr.bf16.mxu0 0
      %3243 = vmatpush1.bf16.msra.mxu0 %v3212
      %3244 = vmatprep.subr.bf16.mxu0 0
      %3245 = vmatpush2.bf16.msra.mxu0 0
      %3246 = vmatprep.subr.bf16.mxu0 0
      %3247 = vmatpush2.bf16.msra.mxu0 0
      %3248 = vmatprep.subr.bf16.mxu0 0
      %3249 = vmatpush2.bf16.msra.mxu0 0
      %3250 = vmatprep.subr.bf16.mxu0 0
      %3251 = vmatpush2.bf16.msra.mxu0 0
      %3252 = vmatprep.subr.bf16.mxu0 0
      %3253 = vmatpush2.bf16.msra.mxu0 0
      %3254 = vmatprep.subr.bf16.mxu0 0
      %3255 = vmatpush2.bf16.msra.mxu0 0
      %3256 = vmatprep.subr.bf16.mxu0 0
      %3257 = vmatpush2.bf16.msra.mxu0 0
      %3258 = vmatprep.subr.bf16.mxu0 0
      %3259 = vmatpush2.bf16.msra.mxu0 0
      %3260 = vmatprep.mubr.bf16.mxu0 0
      %3261 = vmatmul.mubr.bf16.gmra.mxu0 %v3141
      %v3262 = vpop.f32.mrf.mxu0
      %v3263 = vadd.f32 %v3178, %v3262
      %v3264 = vpop.f32.mrf.mxu0
      %v3265 = vpop.f32.mrf.mxu0
      %v3266 = vadd.f32 %v3178, %v3265
      %v3267 = vpop.f32.mrf.mxu0
      %3268 = vmatprep.mubr.bf16.mxu0 0
      %3269 = vmatmul.mubr.bf16.gmra.mxu0 %v3142
      %v3270 = vpop.f32.mrf.mxu0
      %v3271 = vadd.f32 %v3178, %v3270
      %v3272 = vpop.f32.mrf.mxu0
      %v3273 = vpop.f32.mrf.mxu0
      %v3274 = vadd.f32 %v3178, %v3273
      %v3275 = vpop.f32.mrf.mxu0
      %3276 = vmatprep.mubr.bf16.mxu0 0
      %3277 = vmatmul.mubr.bf16.gmra.mxu0 %v3143
      %v3278 = vpop.f32.mrf.mxu0
      %v3279 = vadd.f32 %v3178, %v3278
      %v3280 = vpop.f32.mrf.mxu0
      %v3281 = vpop.f32.mrf.mxu0
      %v3282 = vadd.f32 %v3178, %v3281
      %v3283 = vpop.f32.mrf.mxu0
      %3284 = vmatprep.mubr.bf16.mxu0 0
      %3285 = vmatmul.mubr.bf16.gmra.mxu0 %v3144
      %v3286 = vpop.f32.mrf.mxu0
      %v3287 = vadd.f32 %v3178, %v3286
      %v3288 = vpop.f32.mrf.mxu0
      %v3289 = vpop.f32.mrf.mxu0
      %v3290 = vadd.f32 %v3178, %v3289
      %v3291 = vpop.f32.mrf.mxu0
      %3292 = vmatprep.mubr.bf16.mxu0 0
      %3293 = vmatmul.mubr.bf16.gmra.mxu0 %v3145
      %v3294 = vpop.f32.mrf.mxu0
      %v3295 = vadd.f32 %v3178, %v3294
      %v3296 = vpop.f32.mrf.mxu0
      %v3297 = vpop.f32.mrf.mxu0
      %v3298 = vadd.f32 %v3178, %v3297
      %v3299 = vpop.f32.mrf.mxu0
      %3300 = vmatprep.mubr.bf16.mxu0 0
      %3301 = vmatmul.mubr.bf16.gmra.mxu0 %v3146
      %v3302 = vpop.f32.mrf.mxu0
      %v3303 = vadd.f32 %v3178, %v3302
      %v3304 = vpop.f32.mrf.mxu0
      %v3305 = vpop.f32.mrf.mxu0
      %v3306 = vadd.f32 %v3178, %v3305
      %v3307 = vpop.f32.mrf.mxu0
      %3308 = vmatprep.mubr.bf16.mxu0 0
      %3309 = vmatmul.mubr.bf16.gmra.mxu0 %v3147
      %v3310 = vpop.f32.mrf.mxu0
      %v3311 = vadd.f32 %v3178, %v3310
      %v3312 = vpop.f32.mrf.mxu0
      %v3313 = vpop.f32.mrf.mxu0
      %v3314 = vadd.f32 %v3178, %v3313
      %v3315 = vpop.f32.mrf.mxu0
      %3316 = vmatprep.mubr.bf16.mxu0 0
      %3317 = vmatmul.mubr.bf16.gmra.mxu0 %v3148
      %v3318 = vpop.f32.mrf.mxu0
      %v3319 = vadd.f32 %v3178, %v3318
      %v3320 = vpop.f32.mrf.mxu0
      %v3321 = vpop.f32.mrf.mxu0
      %v3322 = vadd.f32 %v3178, %v3321
      %v3323 = vpop.f32.mrf.mxu0
      %3324 = vmatprep.mubr.bf16.mxu0 0
      %3325 = vmatmul.mubr.bf16.gmra.mxu0 %v3149
      %v3326 = vpop.f32.mrf.mxu0
      %v3327 = vadd.f32 %v3178, %v3326
      %v3328 = vpop.f32.mrf.mxu0
      %v3329 = vpop.f32.mrf.mxu0
      %v3330 = vadd.f32 %v3178, %v3329
      %v3331 = vpop.f32.mrf.mxu0
      %3332 = vmatprep.mubr.bf16.mxu0 0
      %3333 = vmatmul.mubr.bf16.gmra.mxu0 %v3150
      %v3334 = vpop.f32.mrf.mxu0
      %v3335 = vadd.f32 %v3178, %v3334
      %v3336 = vpop.f32.mrf.mxu0
      %v3337 = vpop.f32.mrf.mxu0
      %v3338 = vadd.f32 %v3178, %v3337
      %v3339 = vpop.f32.mrf.mxu0
      %3340 = vmatprep.mubr.bf16.mxu0 0
      %3341 = vmatmul.mubr.bf16.gmra.mxu0 %v3151
      %v3342 = vpop.f32.mrf.mxu0
      %v3343 = vadd.f32 %v3178, %v3342
      %v3344 = vpop.f32.mrf.mxu0
      %v3345 = vpop.f32.mrf.mxu0
      %v3346 = vadd.f32 %v3178, %v3345
      %v3347 = vpop.f32.mrf.mxu0
      %3348 = vmatprep.mubr.bf16.mxu0 0
      %3349 = vmatmul.mubr.bf16.gmra.mxu0 %v3152
      %v3350 = vpop.f32.mrf.mxu0
      %v3351 = vadd.f32 %v3178, %v3350
      %v3352 = vpop.f32.mrf.mxu0
      %v3353 = vpop.f32.mrf.mxu0
      %v3354 = vadd.f32 %v3178, %v3353
      %v3355 = vpop.f32.mrf.mxu0
      %3356 = vmatprep.mubr.bf16.mxu0 0
      %3357 = vmatmul.mubr.bf16.gmra.mxu0 %v3153
      %v3358 = vpop.f32.mrf.mxu0
      %v3359 = vadd.f32 %v3178, %v3358
      %v3360 = vpop.f32.mrf.mxu0
      %v3361 = vpop.f32.mrf.mxu0
      %v3362 = vadd.f32 %v3178, %v3361
      %v3363 = vpop.f32.mrf.mxu0
      %3364 = vmatprep.mubr.bf16.mxu0 0
      %3365 = vmatmul.mubr.bf16.gmra.mxu0 %v3154
      %v3366 = vpop.f32.mrf.mxu0
      %v3367 = vadd.f32 %v3178, %v3366
      %v3368 = vpop.f32.mrf.mxu0
      %v3369 = vpop.f32.mrf.mxu0
      %v3370 = vadd.f32 %v3178, %v3369
      %v3371 = vpop.f32.mrf.mxu0
      %3372 = vmatprep.mubr.bf16.mxu0 0
      %3373 = vmatmul.mubr.bf16.gmra.mxu0 %v3155
      %v3374 = vpop.f32.mrf.mxu0
      %v3375 = vadd.f32 %v3178, %v3374
      %v3376 = vpop.f32.mrf.mxu0
      %v3377 = vpop.f32.mrf.mxu0
      %v3378 = vadd.f32 %v3178, %v3377
      %v3379 = vpop.f32.mrf.mxu0
      %3380 = vmatprep.mubr.bf16.mxu0 0
      %3381 = vmatmul.mubr.bf16.gmra.mxu0 %v3156
      %v3382 = vpop.f32.mrf.mxu0
      %v3383 = vadd.f32 %v3178, %v3382
      %v3384 = vpop.f32.mrf.mxu0
      %v3385 = vpop.f32.mrf.mxu0
      %v3386 = vadd.f32 %v3178, %v3385
      %v3387 = vpop.f32.mrf.mxu0
      %3388 = vdwg.mxu0
      %v3389 = vadd.f32 %v3263, %v766
      %v3390 = vadd.f32 %v3266, %v769
      %v3391 = vadd.f32 %v3271, %v774
      %v3392 = vadd.f32 %v3274, %v777
      %v3393 = vadd.f32 %v3279, %v782
      %v3394 = vadd.f32 %v3282, %v785
      %v3395 = vadd.f32 %v3287, %v790
      %v3396 = vadd.f32 %v3290, %v793
      %v3397 = vadd.f32 %v3295, %v798
      %v3398 = vadd.f32 %v3298, %v801
      %v3399 = vadd.f32 %v3303, %v806
      %v3400 = vadd.f32 %v3306, %v809
      %v3401 = vadd.f32 %v3311, %v814
      %v3402 = vadd.f32 %v3314, %v817
      %v3403 = vadd.f32 %v3319, %v822
      %v3404 = vadd.f32 %v3322, %v825
      %v3405 = vadd.f32 %v3327, %v830
      %v3406 = vadd.f32 %v3330, %v833
      %v3407 = vadd.f32 %v3335, %v838
      %v3408 = vadd.f32 %v3338, %v841
      %v3409 = vadd.f32 %v3343, %v846
      %v3410 = vadd.f32 %v3346, %v849
      %v3411 = vadd.f32 %v3351, %v854
      %v3412 = vadd.f32 %v3354, %v857
      %v3413 = vadd.f32 %v3359, %v862
      %v3414 = vadd.f32 %v3362, %v865
      %v3415 = vadd.f32 %v3367, %v870
      %v3416 = vadd.f32 %v3370, %v873
      %v3417 = vadd.f32 %v3375, %v878
      %v3418 = vadd.f32 %v3378, %v881
      %v3419 = vadd.f32 %v3383, %v886
      %v3420 = vadd.f32 %v3386, %v889
      %3421 = vadd.xlane.f32.xlu0 %v3389
      %v3422 = vpop.xlane.xlu0 %3421
      %3423 = vadd.xlane.f32.xlu0 %v3390
      %v3424 = vpop.xlane.xlu0 %3423
      %3425 = vadd.xlane.f32.xlu0 %v3391
      %v3426 = vpop.xlane.xlu0 %3425
      %3427 = vadd.xlane.f32.xlu0 %v3392
      %v3428 = vpop.xlane.xlu0 %3427
      %3429 = vadd.xlane.f32.xlu0 %v3393
      %v3430 = vpop.xlane.xlu0 %3429
      %3431 = vadd.xlane.f32.xlu0 %v3394
      %v3432 = vpop.xlane.xlu0 %3431
      %3433 = vadd.xlane.f32.xlu0 %v3395
      %v3434 = vpop.xlane.xlu0 %3433
      %3435 = vadd.xlane.f32.xlu0 %v3396
      %v3436 = vpop.xlane.xlu0 %3435
      %3437 = vadd.xlane.f32.xlu0 %v3397
      %v3438 = vpop.xlane.xlu0 %3437
      %3439 = vadd.xlane.f32.xlu0 %v3398
      %v3440 = vpop.xlane.xlu0 %3439
      %3441 = vadd.xlane.f32.xlu0 %v3399
      %v3442 = vpop.xlane.xlu0 %3441
      %3443 = vadd.xlane.f32.xlu0 %v3400
      %v3444 = vpop.xlane.xlu0 %3443
      %3445 = vadd.xlane.f32.xlu0 %v3401
      %v3446 = vpop.xlane.xlu0 %3445
      %3447 = vadd.xlane.f32.xlu0 %v3402
      %v3448 = vpop.xlane.xlu0 %3447
      %3449 = vadd.xlane.f32.xlu0 %v3403
      %v3450 = vpop.xlane.xlu0 %3449
      %3451 = vadd.xlane.f32.xlu0 %v3404
      %v3452 = vpop.xlane.xlu0 %3451
      %3453 = vadd.xlane.f32.xlu0 %v3405
      %v3454 = vpop.xlane.xlu0 %3453
      %3455 = vadd.xlane.f32.xlu0 %v3406
      %v3456 = vpop.xlane.xlu0 %3455
      %3457 = vadd.xlane.f32.xlu0 %v3407
      %v3458 = vpop.xlane.xlu0 %3457
      %3459 = vadd.xlane.f32.xlu0 %v3408
      %v3460 = vpop.xlane.xlu0 %3459
      %3461 = vadd.xlane.f32.xlu0 %v3409
      %v3462 = vpop.xlane.xlu0 %3461
      %3463 = vadd.xlane.f32.xlu0 %v3410
      %v3464 = vpop.xlane.xlu0 %3463
      %3465 = vadd.xlane.f32.xlu0 %v3411
      %v3466 = vpop.xlane.xlu0 %3465
      %3467 = vadd.xlane.f32.xlu0 %v3412
      %v3468 = vpop.xlane.xlu0 %3467
      %3469 = vadd.xlane.f32.xlu0 %v3413
      %v3470 = vpop.xlane.xlu0 %3469
      %3471 = vadd.xlane.f32.xlu0 %v3414
      %v3472 = vpop.xlane.xlu0 %3471
      %3473 = vadd.xlane.f32.xlu0 %v3415
      %v3474 = vpop.xlane.xlu0 %3473
      %3475 = vadd.xlane.f32.xlu0 %v3416
      %v3476 = vpop.xlane.xlu0 %3475
      %3477 = vadd.xlane.f32.xlu0 %v3417
      %v3478 = vpop.xlane.xlu0 %3477
      %3479 = vadd.xlane.f32.xlu0 %v3418
      %v3480 = vpop.xlane.xlu0 %3479
      %3481 = vadd.xlane.f32.xlu0 %v3419
      %v3482 = vpop.xlane.xlu0 %3481
      %3483 = vadd.xlane.f32.xlu0 %v3420
      %v3484 = vpop.xlane.xlu0 %3483
      %v3485 = vmul.f32 %v3422, %v956
      %v3486 = vmul.f32 %v3424, %v956
      %v3487 = vmul.f32 %v3426, %v956
      %v3488 = vmul.f32 %v3428, %v956
      %v3489 = vmul.f32 %v3430, %v956
      %v3490 = vmul.f32 %v3432, %v956
      %v3491 = vmul.f32 %v3434, %v956
      %v3492 = vmul.f32 %v3436, %v956
      %v3493 = vmul.f32 %v3438, %v956
      %v3494 = vmul.f32 %v3440, %v956
      %v3495 = vmul.f32 %v3442, %v956
      %v3496 = vmul.f32 %v3444, %v956
      %v3497 = vmul.f32 %v3446, %v956
      %v3498 = vmul.f32 %v3448, %v956
      %v3499 = vmul.f32 %v3450, %v956
      %v3500 = vmul.f32 %v3452, %v956
      %v3501 = vmul.f32 %v3454, %v956
      %v3502 = vmul.f32 %v3456, %v956
      %v3503 = vmul.f32 %v3458, %v956
      %v3504 = vmul.f32 %v3460, %v956
      %v3505 = vmul.f32 %v3462, %v956
      %v3506 = vmul.f32 %v3464, %v956
      %v3507 = vmul.f32 %v3466, %v956
      %v3508 = vmul.f32 %v3468, %v956
      %v3509 = vmul.f32 %v3470, %v956
      %v3510 = vmul.f32 %v3472, %v956
      %v3511 = vmul.f32 %v3474, %v956
      %v3512 = vmul.f32 %v3476, %v956
      %v3513 = vmul.f32 %v3478, %v956
      %v3514 = vmul.f32 %v3480, %v956
      %v3515 = vmul.f32 %v3482, %v956
      %v3516 = vmul.f32 %v3484, %v956
      %v3517 = vsub.f32 %v3389, %v3485
      %v3518 = vsub.f32 %v3390, %v3486
      %v3519 = vsub.f32 %v3391, %v3487
      %v3520 = vsub.f32 %v3392, %v3488
      %v3521 = vsub.f32 %v3393, %v3489
      %v3522 = vsub.f32 %v3394, %v3490
      %v3523 = vsub.f32 %v3395, %v3491
      %v3524 = vsub.f32 %v3396, %v3492
      %v3525 = vsub.f32 %v3397, %v3493
      %v3526 = vsub.f32 %v3398, %v3494
      %v3527 = vsub.f32 %v3399, %v3495
      %v3528 = vsub.f32 %v3400, %v3496
      %v3529 = vsub.f32 %v3401, %v3497
      %v3530 = vsub.f32 %v3402, %v3498
      %v3531 = vsub.f32 %v3403, %v3499
      %v3532 = vsub.f32 %v3404, %v3500
      %v3533 = vsub.f32 %v3405, %v3501
      %v3534 = vsub.f32 %v3406, %v3502
      %v3535 = vsub.f32 %v3407, %v3503
      %v3536 = vsub.f32 %v3408, %v3504
      %v3537 = vsub.f32 %v3409, %v3505
      %v3538 = vsub.f32 %v3410, %v3506
      %v3539 = vsub.f32 %v3411, %v3507
      %v3540 = vsub.f32 %v3412, %v3508
      %v3541 = vsub.f32 %v3413, %v3509
      %v3542 = vsub.f32 %v3414, %v3510
      %v3543 = vsub.f32 %v3415, %v3511
      %v3544 = vsub.f32 %v3416, %v3512
      %v3545 = vsub.f32 %v3417, %v3513
      %v3546 = vsub.f32 %v3418, %v3514
      %v3547 = vsub.f32 %v3419, %v3515
      %v3548 = vsub.f32 %v3420, %v3516
      %v3549 = vmul.f32 %v3517, %v3517
      %v3550 = vmul.f32 %v3518, %v3518
      %v3551 = vmul.f32 %v3519, %v3519
      %v3552 = vmul.f32 %v3520, %v3520
      %v3553 = vmul.f32 %v3521, %v3521
      %v3554 = vmul.f32 %v3522, %v3522
      %v3555 = vmul.f32 %v3523, %v3523
      %v3556 = vmul.f32 %v3524, %v3524
      %v3557 = vmul.f32 %v3525, %v3525
      %v3558 = vmul.f32 %v3526, %v3526
      %v3559 = vmul.f32 %v3527, %v3527
      %v3560 = vmul.f32 %v3528, %v3528
      %v3561 = vmul.f32 %v3529, %v3529
      %v3562 = vmul.f32 %v3530, %v3530
      %v3563 = vmul.f32 %v3531, %v3531
      %v3564 = vmul.f32 %v3532, %v3532
      %v3565 = vmul.f32 %v3533, %v3533
      %v3566 = vmul.f32 %v3534, %v3534
      %v3567 = vmul.f32 %v3535, %v3535
      %v3568 = vmul.f32 %v3536, %v3536
      %v3569 = vmul.f32 %v3537, %v3537
      %v3570 = vmul.f32 %v3538, %v3538
      %v3571 = vmul.f32 %v3539, %v3539
      %v3572 = vmul.f32 %v3540, %v3540
      %v3573 = vmul.f32 %v3541, %v3541
      %v3574 = vmul.f32 %v3542, %v3542
      %v3575 = vmul.f32 %v3543, %v3543
      %v3576 = vmul.f32 %v3544, %v3544
      %v3577 = vmul.f32 %v3545, %v3545
      %v3578 = vmul.f32 %v3546, %v3546
      %v3579 = vmul.f32 %v3547, %v3547
      %v3580 = vmul.f32 %v3548, %v3548
      %3581 = vadd.xlane.f32.xlu0 %v3549
      %v3582 = vpop.xlane.xlu0 %3581
      %3583 = vadd.xlane.f32.xlu0 %v3550
      %v3584 = vpop.xlane.xlu0 %3583
      %3585 = vadd.xlane.f32.xlu0 %v3551
      %v3586 = vpop.xlane.xlu0 %3585
      %3587 = vadd.xlane.f32.xlu0 %v3552
      %v3588 = vpop.xlane.xlu0 %3587
      %3589 = vadd.xlane.f32.xlu0 %v3553
      %v3590 = vpop.xlane.xlu0 %3589
      %3591 = vadd.xlane.f32.xlu0 %v3554
      %v3592 = vpop.xlane.xlu0 %3591
      %3593 = vadd.xlane.f32.xlu0 %v3555
      %v3594 = vpop.xlane.xlu0 %3593
      %3595 = vadd.xlane.f32.xlu0 %v3556
      %v3596 = vpop.xlane.xlu0 %3595
      %3597 = vadd.xlane.f32.xlu0 %v3557
      %v3598 = vpop.xlane.xlu0 %3597
      %3599 = vadd.xlane.f32.xlu0 %v3558
      %v3600 = vpop.xlane.xlu0 %3599
      %3601 = vadd.xlane.f32.xlu0 %v3559
      %v3602 = vpop.xlane.xlu0 %3601
      %3603 = vadd.xlane.f32.xlu0 %v3560
      %v3604 = vpop.xlane.xlu0 %3603
      %3605 = vadd.xlane.f32.xlu0 %v3561
      %v3606 = vpop.xlane.xlu0 %3605
      %3607 = vadd.xlane.f32.xlu0 %v3562
      %v3608 = vpop.xlane.xlu0 %3607
      %3609 = vadd.xlane.f32.xlu0 %v3563
      %v3610 = vpop.xlane.xlu0 %3609
      %3611 = vadd.xlane.f32.xlu0 %v3564
      %v3612 = vpop.xlane.xlu0 %3611
      %3613 = vadd.xlane.f32.xlu0 %v3565
      %v3614 = vpop.xlane.xlu0 %3613
      %3615 = vadd.xlane.f32.xlu0 %v3566
      %v3616 = vpop.xlane.xlu0 %3615
      %3617 = vadd.xlane.f32.xlu0 %v3567
      %v3618 = vpop.xlane.xlu0 %3617
      %3619 = vadd.xlane.f32.xlu0 %v3568
      %v3620 = vpop.xlane.xlu0 %3619
      %3621 = vadd.xlane.f32.xlu0 %v3569
      %v3622 = vpop.xlane.xlu0 %3621
      %3623 = vadd.xlane.f32.xlu0 %v3570
      %v3624 = vpop.xlane.xlu0 %3623
      %3625 = vadd.xlane.f32.xlu0 %v3571
      %v3626 = vpop.xlane.xlu0 %3625
      %3627 = vadd.xlane.f32.xlu0 %v3572
      %v3628 = vpop.xlane.xlu0 %3627
      %3629 = vadd.xlane.f32.xlu0 %v3573
      %v3630 = vpop.xlane.xlu0 %3629
      %3631 = vadd.xlane.f32.xlu0 %v3574
      %v3632 = vpop.xlane.xlu0 %3631
      %3633 = vadd.xlane.f32.xlu0 %v3575
      %v3634 = vpop.xlane.xlu0 %3633
      %3635 = vadd.xlane.f32.xlu0 %v3576
      %v3636 = vpop.xlane.xlu0 %3635
      %3637 = vadd.xlane.f32.xlu0 %v3577
      %v3638 = vpop.xlane.xlu0 %3637
      %3639 = vadd.xlane.f32.xlu0 %v3578
      %v3640 = vpop.xlane.xlu0 %3639
      %3641 = vadd.xlane.f32.xlu0 %v3579
      %v3642 = vpop.xlane.xlu0 %3641
      %3643 = vadd.xlane.f32.xlu0 %v3580
      %v3644 = vpop.xlane.xlu0 %3643
      %v3645 = vmul.f32 %v3582, %v956
      %v3646 = vmul.f32 %v3584, %v956
      %v3647 = vmul.f32 %v3586, %v956
      %v3648 = vmul.f32 %v3588, %v956
      %v3649 = vmul.f32 %v3590, %v956
      %v3650 = vmul.f32 %v3592, %v956
      %v3651 = vmul.f32 %v3594, %v956
      %v3652 = vmul.f32 %v3596, %v956
      %v3653 = vmul.f32 %v3598, %v956
      %v3654 = vmul.f32 %v3600, %v956
      %v3655 = vmul.f32 %v3602, %v956
      %v3656 = vmul.f32 %v3604, %v956
      %v3657 = vmul.f32 %v3606, %v956
      %v3658 = vmul.f32 %v3608, %v956
      %v3659 = vmul.f32 %v3610, %v956
      %v3660 = vmul.f32 %v3612, %v956
      %v3661 = vmul.f32 %v3614, %v956
      %v3662 = vmul.f32 %v3616, %v956
      %v3663 = vmul.f32 %v3618, %v956
      %v3664 = vmul.f32 %v3620, %v956
      %v3665 = vmul.f32 %v3622, %v956
      %v3666 = vmul.f32 %v3624, %v956
      %v3667 = vmul.f32 %v3626, %v956
      %v3668 = vmul.f32 %v3628, %v956
      %v3669 = vmul.f32 %v3630, %v956
      %v3670 = vmul.f32 %v3632, %v956
      %v3671 = vmul.f32 %v3634, %v956
      %v3672 = vmul.f32 %v3636, %v956
      %v3673 = vmul.f32 %v3638, %v956
      %v3674 = vmul.f32 %v3640, %v956
      %v3675 = vmul.f32 %v3642, %v956
      %v3676 = vmul.f32 %v3644, %v956
      %v3677 = vadd.f32 %v3645, 1e-05
      %v3678 = vadd.f32 %v3646, 1e-05
      %v3679 = vadd.f32 %v3647, 1e-05
      %v3680 = vadd.f32 %v3648, 1e-05
      %v3681 = vadd.f32 %v3649, 1e-05
      %v3682 = vadd.f32 %v3650, 1e-05
      %v3683 = vadd.f32 %v3651, 1e-05
      %v3684 = vadd.f32 %v3652, 1e-05
      %v3685 = vadd.f32 %v3653, 1e-05
      %v3686 = vadd.f32 %v3654, 1e-05
      %v3687 = vadd.f32 %v3655, 1e-05
      %v3688 = vadd.f32 %v3656, 1e-05
      %v3689 = vadd.f32 %v3657, 1e-05
      %v3690 = vadd.f32 %v3658, 1e-05
      %v3691 = vadd.f32 %v3659, 1e-05
      %v3692 = vadd.f32 %v3660, 1e-05
      %v3693 = vadd.f32 %v3661, 1e-05
      %v3694 = vadd.f32 %v3662, 1e-05
      %v3695 = vadd.f32 %v3663, 1e-05
      %v3696 = vadd.f32 %v3664, 1e-05
      %v3697 = vadd.f32 %v3665, 1e-05
      %v3698 = vadd.f32 %v3666, 1e-05
      %v3699 = vadd.f32 %v3667, 1e-05
      %v3700 = vadd.f32 %v3668, 1e-05
      %v3701 = vadd.f32 %v3669, 1e-05
      %v3702 = vadd.f32 %v3670, 1e-05
      %v3703 = vadd.f32 %v3671, 1e-05
      %v3704 = vadd.f32 %v3672, 1e-05
      %v3705 = vadd.f32 %v3673, 1e-05
      %v3706 = vadd.f32 %v3674, 1e-05
      %v3707 = vadd.f32 %v3675, 1e-05
      %v3708 = vadd.f32 %v3676, 1e-05
      %v3709 = vrsqrt.pop %v3677
      %v3710 = vrsqrt.pop %v3678
      %v3711 = vrsqrt.pop %v3679
      %v3712 = vrsqrt.pop %v3680
      %v3713 = vrsqrt.pop %v3681
      %v3714 = vrsqrt.pop %v3682
      %v3715 = vrsqrt.pop %v3683
      %v3716 = vrsqrt.pop %v3684
      %v3717 = vrsqrt.pop %v3685
      %v3718 = vrsqrt.pop %v3686
      %v3719 = vrsqrt.pop %v3687
      %v3720 = vrsqrt.pop %v3688
      %v3721 = vrsqrt.pop %v3689
      %v3722 = vrsqrt.pop %v3690
      %v3723 = vrsqrt.pop %v3691
      %v3724 = vrsqrt.pop %v3692
      %v3725 = vrsqrt.pop %v3693
      %v3726 = vrsqrt.pop %v3694
      %v3727 = vrsqrt.pop %v3695
      %v3728 = vrsqrt.pop %v3696
      %v3729 = vrsqrt.pop %v3697
      %v3730 = vrsqrt.pop %v3698
      %v3731 = vrsqrt.pop %v3699
      %v3732 = vrsqrt.pop %v3700
      %v3733 = vrsqrt.pop %v3701
      %v3734 = vrsqrt.pop %v3702
      %v3735 = vrsqrt.pop %v3703
      %v3736 = vrsqrt.pop %v3704
      %v3737 = vrsqrt.pop %v3705
      %v3738 = vrsqrt.pop %v3706
      %v3739 = vrsqrt.pop %v3707
      %v3740 = vrsqrt.pop %v3708
      %v3741 = vmul.f32 %v3517, %v3709
      %v3742 = vmul.f32 %v3518, %v3710
      %v3743 = vmul.f32 %v3519, %v3711
      %v3744 = vmul.f32 %v3520, %v3712
      %v3745 = vmul.f32 %v3521, %v3713
      %v3746 = vmul.f32 %v3522, %v3714
      %v3747 = vmul.f32 %v3523, %v3715
      %v3748 = vmul.f32 %v3524, %v3716
      %v3749 = vmul.f32 %v3525, %v3717
      %v3750 = vmul.f32 %v3526, %v3718
      %v3751 = vmul.f32 %v3527, %v3719
      %v3752 = vmul.f32 %v3528, %v3720
      %v3753 = vmul.f32 %v3529, %v3721
      %v3754 = vmul.f32 %v3530, %v3722
      %v3755 = vmul.f32 %v3531, %v3723
      %v3756 = vmul.f32 %v3532, %v3724
      %v3757 = vmul.f32 %v3533, %v3725
      %v3758 = vmul.f32 %v3534, %v3726
      %v3759 = vmul.f32 %v3535, %v3727
      %v3760 = vmul.f32 %v3536, %v3728
      %v3761 = vmul.f32 %v3537, %v3729
      %v3762 = vmul.f32 %v3538, %v3730
      %v3763 = vmul.f32 %v3539, %v3731
      %v3764 = vmul.f32 %v3540, %v3732
      %v3765 = vmul.f32 %v3541, %v3733
      %v3766 = vmul.f32 %v3542, %v3734
      %v3767 = vmul.f32 %v3543, %v3735
      %v3768 = vmul.f32 %v3544, %v3736
      %v3769 = vmul.f32 %v3545, %v3737
      %v3770 = vmul.f32 %v3546, %v3738
      %v3771 = vmul.f32 %v3547, %v3739
      %v3772 = vmul.f32 %v3548, %v3740
      %v3773 = vld [vmem:[%s11] sm:$0x1]
      %v3775 = vlaneseq
      %v3776 = vshrl.u32 %v3775, 7
      %v3777 = vsub.s32 0, %v3776
      %v3778 = vrot.slane %v3773, %v3777
      %v3780 = vmul.f32 %v3741, %v3778
      %v3781 = vmul.f32 %v3742, %v3778
      %v3782 = vmul.f32 %v3743, %v3778
      %v3783 = vmul.f32 %v3744, %v3778
      %v3784 = vmul.f32 %v3745, %v3778
      %v3785 = vmul.f32 %v3746, %v3778
      %v3786 = vmul.f32 %v3747, %v3778
      %v3787 = vmul.f32 %v3748, %v3778
      %v3788 = vmul.f32 %v3749, %v3778
      %v3789 = vmul.f32 %v3750, %v3778
      %v3790 = vmul.f32 %v3751, %v3778
      %v3791 = vmul.f32 %v3752, %v3778
      %v3792 = vmul.f32 %v3753, %v3778
      %v3793 = vmul.f32 %v3754, %v3778
      %v3794 = vmul.f32 %v3755, %v3778
      %v3795 = vmul.f32 %v3756, %v3778
      %v3796 = vmul.f32 %v3757, %v3778
      %v3797 = vmul.f32 %v3758, %v3778
      %v3798 = vmul.f32 %v3759, %v3778
      %v3799 = vmul.f32 %v3760, %v3778
      %v3800 = vmul.f32 %v3761, %v3778
      %v3801 = vmul.f32 %v3762, %v3778
      %v3802 = vmul.f32 %v3763, %v3778
      %v3803 = vmul.f32 %v3764, %v3778
      %v3804 = vmul.f32 %v3765, %v3778
      %v3805 = vmul.f32 %v3766, %v3778
      %v3806 = vmul.f32 %v3767, %v3778
      %v3807 = vmul.f32 %v3768, %v3778
      %v3808 = vmul.f32 %v3769, %v3778
      %v3809 = vmul.f32 %v3770, %v3778
      %v3810 = vmul.f32 %v3771, %v3778
      %v3811 = vmul.f32 %v3772, %v3778
      %v3812 = vld [vmem:[%s12] sm:$0x1]
      %v3814 = vlaneseq
      %v3815 = vshrl.u32 %v3814, 7
      %v3816 = vsub.s32 0, %v3815
      %v3817 = vrot.slane %v3812, %v3816
      %v3819 = vadd.f32 %v3780, %v3817
      %v3820 = vadd.f32 %v3781, %v3817
      %v3821 = vadd.f32 %v3782, %v3817
      %v3822 = vadd.f32 %v3783, %v3817
      %v3823 = vadd.f32 %v3784, %v3817
      %v3824 = vadd.f32 %v3785, %v3817
      %v3825 = vadd.f32 %v3786, %v3817
      %v3826 = vadd.f32 %v3787, %v3817
      %v3827 = vadd.f32 %v3788, %v3817
      %v3828 = vadd.f32 %v3789, %v3817
      %v3829 = vadd.f32 %v3790, %v3817
      %v3830 = vadd.f32 %v3791, %v3817
      %v3831 = vadd.f32 %v3792, %v3817
      %v3832 = vadd.f32 %v3793, %v3817
      %v3833 = vadd.f32 %v3794, %v3817
      %v3834 = vadd.f32 %v3795, %v3817
      %v3835 = vadd.f32 %v3796, %v3817
      %v3836 = vadd.f32 %v3797, %v3817
      %v3837 = vadd.f32 %v3798, %v3817
      %v3838 = vadd.f32 %v3799, %v3817
      %v3839 = vadd.f32 %v3800, %v3817
      %v3840 = vadd.f32 %v3801, %v3817
      %v3841 = vadd.f32 %v3802, %v3817
      %v3842 = vadd.f32 %v3803, %v3817
      %v3843 = vadd.f32 %v3804, %v3817
      %v3844 = vadd.f32 %v3805, %v3817
      %v3845 = vadd.f32 %v3806, %v3817
      %v3846 = vadd.f32 %v3807, %v3817
      %v3847 = vadd.f32 %v3808, %v3817
      %v3848 = vadd.f32 %v3809, %v3817
      %v3849 = vadd.f32 %v3810, %v3817
      %v3850 = vadd.f32 %v3811, %v3817
      %v3851 = vpack.c.bf16 %v3820, %v3819
      %v3852 = vpack.c.bf16 %v3822, %v3821
      %v3853 = vpack.c.bf16 %v3824, %v3823
      %v3854 = vpack.c.bf16 %v3826, %v3825
      %v3855 = vpack.c.bf16 %v3828, %v3827
      %v3856 = vpack.c.bf16 %v3830, %v3829
      %v3857 = vpack.c.bf16 %v3832, %v3831
      %v3858 = vpack.c.bf16 %v3834, %v3833
      %v3859 = vpack.c.bf16 %v3836, %v3835
      %v3860 = vpack.c.bf16 %v3838, %v3837
      %v3861 = vpack.c.bf16 %v3840, %v3839
      %v3862 = vpack.c.bf16 %v3842, %v3841
      %v3863 = vpack.c.bf16 %v3844, %v3843
      %v3864 = vpack.c.bf16 %v3846, %v3845
      %v3865 = vpack.c.bf16 %v3848, %v3847
      %v3866 = vpack.c.bf16 %v3850, %v3849
      %v3867 = vld [vmem:[%s13] sm:$0xff]
      %v3868 = vld [vmem:[%s13 + $0x8] sm:$0xff]
      %v3869 = vld [vmem:[%s13 + $0x10] sm:$0xff]
      %v3870 = vld [vmem:[%s13 + $0x18] sm:$0xff]
      %v3871 = vld [vmem:[%s13 + $0x20] sm:$0xff]
      %v3872 = vld [vmem:[%s13 + $0x28] sm:$0xff]
      %v3873 = vld [vmem:[%s13 + $0x30] sm:$0xff]
      %v3874 = vld [vmem:[%s13 + $0x38] sm:$0xff]
      %v3875 = vld [vmem:[%s13 + $0x40] sm:$0xff]
      %v3876 = vld [vmem:[%s13 + $0x48] sm:$0xff]
      %v3877 = vld [vmem:[%s13 + $0x50] sm:$0xff]
      %v3878 = vld [vmem:[%s13 + $0x58] sm:$0xff]
      %v3879 = vld [vmem:[%s13 + $0x60] sm:$0xff]
      %v3880 = vld [vmem:[%s13 + $0x68] sm:$0xff]
      %v3881 = vld [vmem:[%s13 + $0x70] sm:$0xff]
      %v3882 = vld [vmem:[%s13 + $0x78] sm:$0xff]
      %v3883 = vld [vmem:[%s14] sm:$0x3]
      %v3885 = vlaneseq
      %v3886 = vshrl.u32 %v3885, 7
      %v3887 = vsub.s32 0, %v3886
      %v3888 = vrot.slane %v3883, %v3887
      %v3889 = vlaneseq
      %v3890 = vshrl.u32 %v3889, 7
      %v3891 = vsub.s32 1, %v3890
      %v3892 = vrot.slane %v3883, %v3891
      %v3911 = vunpack.c.l.b16 %v3867
      %v3912 = vunpack.c.h.b16 %v3867
      %v3913 = vunpack.c.l.b16 %v3868
      %v3914 = vunpack.c.h.b16 %v3868
      %v3915 = vunpack.c.l.b16 %v3869
      %v3916 = vunpack.c.h.b16 %v3869
      %v3917 = vunpack.c.l.b16 %v3870
      %v3918 = vunpack.c.h.b16 %v3870
      %v3919 = vunpack.c.l.b16 %v3871
      %v3920 = vunpack.c.h.b16 %v3871
      %v3921 = vunpack.c.l.b16 %v3872
      %v3922 = vunpack.c.h.b16 %v3872
      %v3923 = vunpack.c.l.b16 %v3873
      %v3924 = vunpack.c.h.b16 %v3873
      %v3925 = vunpack.c.l.b16 %v3874
      %v3926 = vunpack.c.h.b16 %v3874
      %v3927 = vunpack.c.l.b16 %v3875
      %v3928 = vunpack.c.h.b16 %v3875
      %v3929 = vunpack.c.l.b16 %v3876
      %v3930 = vunpack.c.h.b16 %v3876
      %v3931 = vunpack.c.l.b16 %v3877
      %v3932 = vunpack.c.h.b16 %v3877
      %v3933 = vunpack.c.l.b16 %v3878
      %v3934 = vunpack.c.h.b16 %v3878
      %v3935 = vunpack.c.l.b16 %v3879
      %v3936 = vunpack.c.h.b16 %v3879
      %v3937 = vunpack.c.l.b16 %v3880
      %v3938 = vunpack.c.h.b16 %v3880
      %v3939 = vunpack.c.l.b16 %v3881
      %v3940 = vunpack.c.h.b16 %v3881
      %v3941 = vunpack.c.l.b16 %v3882
      %v3942 = vunpack.c.h.b16 %v3882
      %v3943 = vpack.c.b16 %v3913, %v3911
      %v3944 = vpack.c.b16 %v3914, %v3912
      %v3945 = vpack.c.b16 %v3917, %v3915
      %v3946 = vpack.c.b16 %v3918, %v3916
      %v3947 = vpack.c.b16 %v3921, %v3919
      %v3948 = vpack.c.b16 %v3922, %v3920
      %v3949 = vpack.c.b16 %v3925, %v3923
      %v3950 = vpack.c.b16 %v3926, %v3924
      %v3951 = vpack.c.b16 %v3929, %v3927
      %v3952 = vpack.c.b16 %v3930, %v3928
      %v3953 = vpack.c.b16 %v3933, %v3931
      %v3954 = vpack.c.b16 %v3934, %v3932
      %v3955 = vpack.c.b16 %v3937, %v3935
      %v3956 = vpack.c.b16 %v3938, %v3936
      %v3957 = vpack.c.b16 %v3941, %v3939
      %v3958 = vpack.c.b16 %v3942, %v3940
      %3975 = vmatprep.subr.bf16.mxu0 %v3958
      %3976 = vmatpush1.bf16.msra.mxu0 %v3957
      %3977 = vmatprep.subr.bf16.mxu0 %v3956
      %3978 = vmatpush1.bf16.msra.mxu0 %v3955
      %3979 = vmatprep.subr.bf16.mxu0 %v3954
      %3980 = vmatpush1.bf16.msra.mxu0 %v3953
      %3981 = vmatprep.subr.bf16.mxu0 %v3952
      %3982 = vmatpush1.bf16.msra.mxu0 %v3951
      %3983 = vmatprep.subr.bf16.mxu0 %v3950
      %3984 = vmatpush1.bf16.msra.mxu0 %v3949
      %3985 = vmatprep.subr.bf16.mxu0 %v3948
      %3986 = vmatpush1.bf16.msra.mxu0 %v3947
      %3987 = vmatprep.subr.bf16.mxu0 %v3946
      %3988 = vmatpush1.bf16.msra.mxu0 %v3945
      %3989 = vmatprep.subr.bf16.mxu0 %v3944
      %3990 = vmatpush1.bf16.msra.mxu0 %v3943
      %3991 = vmatprep.subr.bf16.mxu0 0
      %3992 = vmatpush2.bf16.msra.mxu0 0
      %3993 = vmatprep.subr.bf16.mxu0 0
      %3994 = vmatpush2.bf16.msra.mxu0 0
      %3995 = vmatprep.subr.bf16.mxu0 0
      %3996 = vmatpush2.bf16.msra.mxu0 0
      %3997 = vmatprep.subr.bf16.mxu0 0
      %3998 = vmatpush2.bf16.msra.mxu0 0
      %3999 = vmatprep.subr.bf16.mxu0 0
      %4000 = vmatpush2.bf16.msra.mxu0 0
      %4001 = vmatprep.subr.bf16.mxu0 0
      %4002 = vmatpush2.bf16.msra.mxu0 0
      %4003 = vmatprep.subr.bf16.mxu0 0
      %4004 = vmatpush2.bf16.msra.mxu0 0
      %4005 = vmatprep.subr.bf16.mxu0 0
      %4006 = vmatpush2.bf16.msra.mxu0 0
      %4007 = vmatprep.mubr.bf16.mxu0 0
      %4008 = vmatmul.mubr.bf16.gmra.mxu0 %v3851
      %v4009 = vpop.f32.mrf.mxu0
      %v4010 = vadd.f32 %v3888, %v4009
      %v4011 = vpop.f32.mrf.mxu0
      %v4012 = vadd.f32 %v3892, %v4011
      %v4013 = vpop.f32.mrf.mxu0
      %v4014 = vadd.f32 %v3888, %v4013
      %v4015 = vpop.f32.mrf.mxu0
      %v4016 = vadd.f32 %v3892, %v4015
      %4017 = vmatprep.mubr.bf16.mxu0 0
      %4018 = vmatmul.mubr.bf16.gmra.mxu0 %v3852
      %v4019 = vpop.f32.mrf.mxu0
      %v4020 = vadd.f32 %v3888, %v4019
      %v4021 = vpop.f32.mrf.mxu0
      %v4022 = vadd.f32 %v3892, %v4021
      %v4023 = vpop.f32.mrf.mxu0
      %v4024 = vadd.f32 %v3888, %v4023
      %v4025 = vpop.f32.mrf.mxu0
      %v4026 = vadd.f32 %v3892, %v4025
      %4027 = vmatprep.mubr.bf16.mxu0 0
      %4028 = vmatmul.mubr.bf16.gmra.mxu0 %v3853
      %v4029 = vpop.f32.mrf.mxu0
      %v4030 = vadd.f32 %v3888, %v4029
      %v4031 = vpop.f32.mrf.mxu0
      %v4032 = vadd.f32 %v3892, %v4031
      %v4033 = vpop.f32.mrf.mxu0
      %v4034 = vadd.f32 %v3888, %v4033
      %v4035 = vpop.f32.mrf.mxu0
      %v4036 = vadd.f32 %v3892, %v4035
      %4037 = vmatprep.mubr.bf16.mxu0 0
      %4038 = vmatmul.mubr.bf16.gmra.mxu0 %v3854
      %v4039 = vpop.f32.mrf.mxu0
      %v4040 = vadd.f32 %v3888, %v4039
      %v4041 = vpop.f32.mrf.mxu0
      %v4042 = vadd.f32 %v3892, %v4041
      %v4043 = vpop.f32.mrf.mxu0
      %v4044 = vadd.f32 %v3888, %v4043
      %v4045 = vpop.f32.mrf.mxu0
      %v4046 = vadd.f32 %v3892, %v4045
      %4047 = vmatprep.mubr.bf16.mxu0 0
      %4048 = vmatmul.mubr.bf16.gmra.mxu0 %v3855
      %v4049 = vpop.f32.mrf.mxu0
      %v4050 = vadd.f32 %v3888, %v4049
      %v4051 = vpop.f32.mrf.mxu0
      %v4052 = vadd.f32 %v3892, %v4051
      %v4053 = vpop.f32.mrf.mxu0
      %v4054 = vadd.f32 %v3888, %v4053
      %v4055 = vpop.f32.mrf.mxu0
      %v4056 = vadd.f32 %v3892, %v4055
      %4057 = vmatprep.mubr.bf16.mxu0 0
      %4058 = vmatmul.mubr.bf16.gmra.mxu0 %v3856
      %v4059 = vpop.f32.mrf.mxu0
      %v4060 = vadd.f32 %v3888, %v4059
      %v4061 = vpop.f32.mrf.mxu0
      %v4062 = vadd.f32 %v3892, %v4061
      %v4063 = vpop.f32.mrf.mxu0
      %v4064 = vadd.f32 %v3888, %v4063
      %v4065 = vpop.f32.mrf.mxu0
      %v4066 = vadd.f32 %v3892, %v4065
      %4067 = vmatprep.mubr.bf16.mxu0 0
      %4068 = vmatmul.mubr.bf16.gmra.mxu0 %v3857
      %v4069 = vpop.f32.mrf.mxu0
      %v4070 = vadd.f32 %v3888, %v4069
      %v4071 = vpop.f32.mrf.mxu0
      %v4072 = vadd.f32 %v3892, %v4071
      %v4073 = vpop.f32.mrf.mxu0
      %v4074 = vadd.f32 %v3888, %v4073
      %v4075 = vpop.f32.mrf.mxu0
      %v4076 = vadd.f32 %v3892, %v4075
      %4077 = vmatprep.mubr.bf16.mxu0 0
      %4078 = vmatmul.mubr.bf16.gmra.mxu0 %v3858
      %v4079 = vpop.f32.mrf.mxu0
      %v4080 = vadd.f32 %v3888, %v4079
      %v4081 = vpop.f32.mrf.mxu0
      %v4082 = vadd.f32 %v3892, %v4081
      %v4083 = vpop.f32.mrf.mxu0
      %v4084 = vadd.f32 %v3888, %v4083
      %v4085 = vpop.f32.mrf.mxu0
      %v4086 = vadd.f32 %v3892, %v4085
      %4087 = vmatprep.mubr.bf16.mxu0 0
      %4088 = vmatmul.mubr.bf16.gmra.mxu0 %v3859
      %v4089 = vpop.f32.mrf.mxu0
      %v4090 = vadd.f32 %v3888, %v4089
      %v4091 = vpop.f32.mrf.mxu0
      %v4092 = vadd.f32 %v3892, %v4091
      %v4093 = vpop.f32.mrf.mxu0
      %v4094 = vadd.f32 %v3888, %v4093
      %v4095 = vpop.f32.mrf.mxu0
      %v4096 = vadd.f32 %v3892, %v4095
      %4097 = vmatprep.mubr.bf16.mxu0 0
      %4098 = vmatmul.mubr.bf16.gmra.mxu0 %v3860
      %v4099 = vpop.f32.mrf.mxu0
      %v4100 = vadd.f32 %v3888, %v4099
      %v4101 = vpop.f32.mrf.mxu0
      %v4102 = vadd.f32 %v3892, %v4101
      %v4103 = vpop.f32.mrf.mxu0
      %v4104 = vadd.f32 %v3888, %v4103
      %v4105 = vpop.f32.mrf.mxu0
      %v4106 = vadd.f32 %v3892, %v4105
      %4107 = vmatprep.mubr.bf16.mxu0 0
      %4108 = vmatmul.mubr.bf16.gmra.mxu0 %v3861
      %v4109 = vpop.f32.mrf.mxu0
      %v4110 = vadd.f32 %v3888, %v4109
      %v4111 = vpop.f32.mrf.mxu0
      %v4112 = vadd.f32 %v3892, %v4111
      %v4113 = vpop.f32.mrf.mxu0
      %v4114 = vadd.f32 %v3888, %v4113
      %v4115 = vpop.f32.mrf.mxu0
      %v4116 = vadd.f32 %v3892, %v4115
      %4117 = vmatprep.mubr.bf16.mxu0 0
      %4118 = vmatmul.mubr.bf16.gmra.mxu0 %v3862
      %v4119 = vpop.f32.mrf.mxu0
      %v4120 = vadd.f32 %v3888, %v4119
      %v4121 = vpop.f32.mrf.mxu0
      %v4122 = vadd.f32 %v3892, %v4121
      %v4123 = vpop.f32.mrf.mxu0
      %v4124 = vadd.f32 %v3888, %v4123
      %v4125 = vpop.f32.mrf.mxu0
      %v4126 = vadd.f32 %v3892, %v4125
      %4127 = vmatprep.mubr.bf16.mxu0 0
      %4128 = vmatmul.mubr.bf16.gmra.mxu0 %v3863
      %v4129 = vpop.f32.mrf.mxu0
      %v4130 = vadd.f32 %v3888, %v4129
      %v4131 = vpop.f32.mrf.mxu0
      %v4132 = vadd.f32 %v3892, %v4131
      %v4133 = vpop.f32.mrf.mxu0
      %v4134 = vadd.f32 %v3888, %v4133
      %v4135 = vpop.f32.mrf.mxu0
      %v4136 = vadd.f32 %v3892, %v4135
      %4137 = vmatprep.mubr.bf16.mxu0 0
      %4138 = vmatmul.mubr.bf16.gmra.mxu0 %v3864
      %v4139 = vpop.f32.mrf.mxu0
      %v4140 = vadd.f32 %v3888, %v4139
      %v4141 = vpop.f32.mrf.mxu0
      %v4142 = vadd.f32 %v3892, %v4141
      %v4143 = vpop.f32.mrf.mxu0
      %v4144 = vadd.f32 %v3888, %v4143
      %v4145 = vpop.f32.mrf.mxu0
      %v4146 = vadd.f32 %v3892, %v4145
      %4147 = vmatprep.mubr.bf16.mxu0 0
      %4148 = vmatmul.mubr.bf16.gmra.mxu0 %v3865
      %v4149 = vpop.f32.mrf.mxu0
      %v4150 = vadd.f32 %v3888, %v4149
      %v4151 = vpop.f32.mrf.mxu0
      %v4152 = vadd.f32 %v3892, %v4151
      %v4153 = vpop.f32.mrf.mxu0
      %v4154 = vadd.f32 %v3888, %v4153
      %v4155 = vpop.f32.mrf.mxu0
      %v4156 = vadd.f32 %v3892, %v4155
      %4157 = vmatprep.mubr.bf16.mxu0 0
      %4158 = vmatmul.mubr.bf16.gmra.mxu0 %v3866
      %v4159 = vpop.f32.mrf.mxu0
      %v4160 = vadd.f32 %v3888, %v4159
      %v4161 = vpop.f32.mrf.mxu0
      %v4162 = vadd.f32 %v3892, %v4161
      %v4163 = vpop.f32.mrf.mxu0
      %v4164 = vadd.f32 %v3888, %v4163
      %v4165 = vpop.f32.mrf.mxu0
      %v4166 = vadd.f32 %v3892, %v4165
      %4167 = vdwg.mxu0
      %v4168 = vmul.f32 %v4010, 0.5
      %v4169 = vmul.f32 %v4012, 0.5
      %v4170 = vmul.f32 %v4014, 0.5
      %v4171 = vmul.f32 %v4016, 0.5
      %v4172 = vmul.f32 %v4020, 0.5
      %v4173 = vmul.f32 %v4022, 0.5
      %v4174 = vmul.f32 %v4024, 0.5
      %v4175 = vmul.f32 %v4026, 0.5
      %v4176 = vmul.f32 %v4030, 0.5
      %v4177 = vmul.f32 %v4032, 0.5
      %v4178 = vmul.f32 %v4034, 0.5
      %v4179 = vmul.f32 %v4036, 0.5
      %v4180 = vmul.f32 %v4040, 0.5
      %v4181 = vmul.f32 %v4042, 0.5
      %v4182 = vmul.f32 %v4044, 0.5
      %v4183 = vmul.f32 %v4046, 0.5
      %v4184 = vmul.f32 %v4050, 0.5
      %v4185 = vmul.f32 %v4052, 0.5
      %v4186 = vmul.f32 %v4054, 0.5
      %v4187 = vmul.f32 %v4056, 0.5
      %v4188 = vmul.f32 %v4060, 0.5
      %v4189 = vmul.f32 %v4062, 0.5
      %v4190 = vmul.f32 %v4064, 0.5
      %v4191 = vmul.f32 %v4066, 0.5
      %v4192 = vmul.f32 %v4070, 0.5
      %v4193 = vmul.f32 %v4072, 0.5
      %v4194 = vmul.f32 %v4074, 0.5
      %v4195 = vmul.f32 %v4076, 0.5
      %v4196 = vmul.f32 %v4080, 0.5
      %v4197 = vmul.f32 %v4082, 0.5
      %v4198 = vmul.f32 %v4084, 0.5
      %v4199 = vmul.f32 %v4086, 0.5
      %v4200 = vmul.f32 %v4090, 0.5
      %v4201 = vmul.f32 %v4092, 0.5
      %v4202 = vmul.f32 %v4094, 0.5
      %v4203 = vmul.f32 %v4096, 0.5
      %v4204 = vmul.f32 %v4100, 0.5
      %v4205 = vmul.f32 %v4102, 0.5
      %v4206 = vmul.f32 %v4104, 0.5
      %v4207 = vmul.f32 %v4106, 0.5
      %v4208 = vmul.f32 %v4110, 0.5
      %v4209 = vmul.f32 %v4112, 0.5
      %v4210 = vmul.f32 %v4114, 0.5
      %v4211 = vmul.f32 %v4116, 0.5
      %v4212 = vmul.f32 %v4120, 0.5
      %v4213 = vmul.f32 %v4122, 0.5
      %v4214 = vmul.f32 %v4124, 0.5
      %v4215 = vmul.f32 %v4126, 0.5
      %v4216 = vmul.f32 %v4130, 0.5
      %v4217 = vmul.f32 %v4132, 0.5
      %v4218 = vmul.f32 %v4134, 0.5
      %v4219 = vmul.f32 %v4136, 0.5
      %v4220 = vmul.f32 %v4140, 0.5
      %v4221 = vmul.f32 %v4142, 0.5
      %v4222 = vmul.f32 %v4144, 0.5
      %v4223 = vmul.f32 %v4146, 0.5
      %v4224 = vmul.f32 %v4150, 0.5
      %v4225 = vmul.f32 %v4152, 0.5
      %v4226 = vmul.f32 %v4154, 0.5
      %v4227 = vmul.f32 %v4156, 0.5
      %v4228 = vmul.f32 %v4160, 0.5
      %v4229 = vmul.f32 %v4162, 0.5
      %v4230 = vmul.f32 %v4164, 0.5
      %v4231 = vmul.f32 %v4166, 0.5
      %v4232 = vmul.f32 %v4010, 0.044715
      %v4233 = vmul.f32 %v4012, 0.044715
      %v4234 = vmul.f32 %v4014, 0.044715
      %v4235 = vmul.f32 %v4016, 0.044715
      %v4236 = vmul.f32 %v4020, 0.044715
      %v4237 = vmul.f32 %v4022, 0.044715
      %v4238 = vmul.f32 %v4024, 0.044715
      %v4239 = vmul.f32 %v4026, 0.044715
      %v4240 = vmul.f32 %v4030, 0.044715
      %v4241 = vmul.f32 %v4032, 0.044715
      %v4242 = vmul.f32 %v4034, 0.044715
      %v4243 = vmul.f32 %v4036, 0.044715
      %v4244 = vmul.f32 %v4040, 0.044715
      %v4245 = vmul.f32 %v4042, 0.044715
      %v4246 = vmul.f32 %v4044, 0.044715
      %v4247 = vmul.f32 %v4046, 0.044715
      %v4248 = vmul.f32 %v4050, 0.044715
      %v4249 = vmul.f32 %v4052, 0.044715
      %v4250 = vmul.f32 %v4054, 0.044715
      %v4251 = vmul.f32 %v4056, 0.044715
      %v4252 = vmul.f32 %v4060, 0.044715
      %v4253 = vmul.f32 %v4062, 0.044715
      %v4254 = vmul.f32 %v4064, 0.044715
      %v4255 = vmul.f32 %v4066, 0.044715
      %v4256 = vmul.f32 %v4070, 0.044715
      %v4257 = vmul.f32 %v4072, 0.044715
      %v4258 = vmul.f32 %v4074, 0.044715
      %v4259 = vmul.f32 %v4076, 0.044715
      %v4260 = vmul.f32 %v4080, 0.044715
      %v4261 = vmul.f32 %v4082, 0.044715
      %v4262 = vmul.f32 %v4084, 0.044715
      %v4263 = vmul.f32 %v4086, 0.044715
      %v4264 = vmul.f32 %v4090, 0.044715
      %v4265 = vmul.f32 %v4092, 0.044715
      %v4266 = vmul.f32 %v4094, 0.044715
      %v4267 = vmul.f32 %v4096, 0.044715
      %v4268 = vmul.f32 %v4100, 0.044715
      %v4269 = vmul.f32 %v4102, 0.044715
      %v4270 = vmul.f32 %v4104, 0.044715
      %v4271 = vmul.f32 %v4106, 0.044715
      %v4272 = vmul.f32 %v4110, 0.044715
      %v4273 = vmul.f32 %v4112, 0.044715
      %v4274 = vmul.f32 %v4114, 0.044715
      %v4275 = vmul.f32 %v4116, 0.044715
      %v4276 = vmul.f32 %v4120, 0.044715
      %v4277 = vmul.f32 %v4122, 0.044715
      %v4278 = vmul.f32 %v4124, 0.044715
      %v4279 = vmul.f32 %v4126, 0.044715
      %v4280 = vmul.f32 %v4130, 0.044715
      %v4281 = vmul.f32 %v4132, 0.044715
      %v4282 = vmul.f32 %v4134, 0.044715
      %v4283 = vmul.f32 %v4136, 0.044715
      %v4284 = vmul.f32 %v4140, 0.044715
      %v4285 = vmul.f32 %v4142, 0.044715
      %v4286 = vmul.f32 %v4144, 0.044715
      %v4287 = vmul.f32 %v4146, 0.044715
      %v4288 = vmul.f32 %v4150, 0.044715
      %v4289 = vmul.f32 %v4152, 0.044715
      %v4290 = vmul.f32 %v4154, 0.044715
      %v4291 = vmul.f32 %v4156, 0.044715
      %v4292 = vmul.f32 %v4160, 0.044715
      %v4293 = vmul.f32 %v4162, 0.044715
      %v4294 = vmul.f32 %v4164, 0.044715
      %v4295 = vmul.f32 %v4166, 0.044715
      %v4296 = vmul.f32 %v4232, %v4010
      %v4297 = vmul.f32 %v4233, %v4012
      %v4298 = vmul.f32 %v4234, %v4014
      %v4299 = vmul.f32 %v4235, %v4016
      %v4300 = vmul.f32 %v4236, %v4020
      %v4301 = vmul.f32 %v4237, %v4022
      %v4302 = vmul.f32 %v4238, %v4024
      %v4303 = vmul.f32 %v4239, %v4026
      %v4304 = vmul.f32 %v4240, %v4030
      %v4305 = vmul.f32 %v4241, %v4032
      %v4306 = vmul.f32 %v4242, %v4034
      %v4307 = vmul.f32 %v4243, %v4036
      %v4308 = vmul.f32 %v4244, %v4040
      %v4309 = vmul.f32 %v4245, %v4042
      %v4310 = vmul.f32 %v4246, %v4044
      %v4311 = vmul.f32 %v4247, %v4046
      %v4312 = vmul.f32 %v4248, %v4050
      %v4313 = vmul.f32 %v4249, %v4052
      %v4314 = vmul.f32 %v4250, %v4054
      %v4315 = vmul.f32 %v4251, %v4056
      %v4316 = vmul.f32 %v4252, %v4060
      %v4317 = vmul.f32 %v4253, %v4062
      %v4318 = vmul.f32 %v4254, %v4064
      %v4319 = vmul.f32 %v4255, %v4066
      %v4320 = vmul.f32 %v4256, %v4070
      %v4321 = vmul.f32 %v4257, %v4072
      %v4322 = vmul.f32 %v4258, %v4074
      %v4323 = vmul.f32 %v4259, %v4076
      %v4324 = vmul.f32 %v4260, %v4080
      %v4325 = vmul.f32 %v4261, %v4082
      %v4326 = vmul.f32 %v4262, %v4084
      %v4327 = vmul.f32 %v4263, %v4086
      %v4328 = vmul.f32 %v4264, %v4090
      %v4329 = vmul.f32 %v4265, %v4092
      %v4330 = vmul.f32 %v4266, %v4094
      %v4331 = vmul.f32 %v4267, %v4096
      %v4332 = vmul.f32 %v4268, %v4100
      %v4333 = vmul.f32 %v4269, %v4102
      %v4334 = vmul.f32 %v4270, %v4104
      %v4335 = vmul.f32 %v4271, %v4106
      %v4336 = vmul.f32 %v4272, %v4110
      %v4337 = vmul.f32 %v4273, %v4112
      %v4338 = vmul.f32 %v4274, %v4114
      %v4339 = vmul.f32 %v4275, %v4116
      %v4340 = vmul.f32 %v4276, %v4120
      %v4341 = vmul.f32 %v4277, %v4122
      %v4342 = vmul.f32 %v4278, %v4124
      %v4343 = vmul.f32 %v4279, %v4126
      %v4344 = vmul.f32 %v4280, %v4130
      %v4345 = vmul.f32 %v4281, %v4132
      %v4346 = vmul.f32 %v4282, %v4134
      %v4347 = vmul.f32 %v4283, %v4136
      %v4348 = vmul.f32 %v4284, %v4140
      %v4349 = vmul.f32 %v4285, %v4142
      %v4350 = vmul.f32 %v4286, %v4144
      %v4351 = vmul.f32 %v4287, %v4146
      %v4352 = vmul.f32 %v4288, %v4150
      %v4353 = vmul.f32 %v4289, %v4152
      %v4354 = vmul.f32 %v4290, %v4154
      %v4355 = vmul.f32 %v4291, %v4156
      %v4356 = vmul.f32 %v4292, %v4160
      %v4357 = vmul.f32 %v4293, %v4162
      %v4358 = vmul.f32 %v4294, %v4164
      %v4359 = vmul.f32 %v4295, %v4166
      %v4360 = vmul.f32 %v4296, %v4010
      %v4361 = vmul.f32 %v4297, %v4012
      %v4362 = vmul.f32 %v4298, %v4014
      %v4363 = vmul.f32 %v4299, %v4016
      %v4364 = vmul.f32 %v4300, %v4020
      %v4365 = vmul.f32 %v4301, %v4022
      %v4366 = vmul.f32 %v4302, %v4024
      %v4367 = vmul.f32 %v4303, %v4026
      %v4368 = vmul.f32 %v4304, %v4030
      %v4369 = vmul.f32 %v4305, %v4032
      %v4370 = vmul.f32 %v4306, %v4034
      %v4371 = vmul.f32 %v4307, %v4036
      %v4372 = vmul.f32 %v4308, %v4040
      %v4373 = vmul.f32 %v4309, %v4042
      %v4374 = vmul.f32 %v4310, %v4044
      %v4375 = vmul.f32 %v4311, %v4046
      %v4376 = vmul.f32 %v4312, %v4050
      %v4377 = vmul.f32 %v4313, %v4052
      %v4378 = vmul.f32 %v4314, %v4054
      %v4379 = vmul.f32 %v4315, %v4056
      %v4380 = vmul.f32 %v4316, %v4060
      %v4381 = vmul.f32 %v4317, %v4062
      %v4382 = vmul.f32 %v4318, %v4064
      %v4383 = vmul.f32 %v4319, %v4066
      %v4384 = vmul.f32 %v4320, %v4070
      %v4385 = vmul.f32 %v4321, %v4072
      %v4386 = vmul.f32 %v4322, %v4074
      %v4387 = vmul.f32 %v4323, %v4076
      %v4388 = vmul.f32 %v4324, %v4080
      %v4389 = vmul.f32 %v4325, %v4082
      %v4390 = vmul.f32 %v4326, %v4084
      %v4391 = vmul.f32 %v4327, %v4086
      %v4392 = vmul.f32 %v4328, %v4090
      %v4393 = vmul.f32 %v4329, %v4092
      %v4394 = vmul.f32 %v4330, %v4094
      %v4395 = vmul.f32 %v4331, %v4096
      %v4396 = vmul.f32 %v4332, %v4100
      %v4397 = vmul.f32 %v4333, %v4102
      %v4398 = vmul.f32 %v4334, %v4104
      %v4399 = vmul.f32 %v4335, %v4106
      %v4400 = vmul.f32 %v4336, %v4110
      %v4401 = vmul.f32 %v4337, %v4112
      %v4402 = vmul.f32 %v4338, %v4114
      %v4403 = vmul.f32 %v4339, %v4116
      %v4404 = vmul.f32 %v4340, %v4120
      %v4405 = vmul.f32 %v4341, %v4122
      %v4406 = vmul.f32 %v4342, %v4124
      %v4407 = vmul.f32 %v4343, %v4126
      %v4408 = vmul.f32 %v4344, %v4130
      %v4409 = vmul.f32 %v4345, %v4132
      %v4410 = vmul.f32 %v4346, %v4134
      %v4411 = vmul.f32 %v4347, %v4136
      %v4412 = vmul.f32 %v4348, %v4140
      %v4413 = vmul.f32 %v4349, %v4142
      %v4414 = vmul.f32 %v4350, %v4144
      %v4415 = vmul.f32 %v4351, %v4146
      %v4416 = vmul.f32 %v4352, %v4150
      %v4417 = vmul.f32 %v4353, %v4152
      %v4418 = vmul.f32 %v4354, %v4154
      %v4419 = vmul.f32 %v4355, %v4156
      %v4420 = vmul.f32 %v4356, %v4160
      %v4421 = vmul.f32 %v4357, %v4162
      %v4422 = vmul.f32 %v4358, %v4164
      %v4423 = vmul.f32 %v4359, %v4166
      %v4424 = vadd.f32 %v4010, %v4360
      %v4425 = vadd.f32 %v4012, %v4361
      %v4426 = vadd.f32 %v4014, %v4362
      %v4427 = vadd.f32 %v4016, %v4363
      %v4428 = vadd.f32 %v4020, %v4364
      %v4429 = vadd.f32 %v4022, %v4365
      %v4430 = vadd.f32 %v4024, %v4366
      %v4431 = vadd.f32 %v4026, %v4367
      %v4432 = vadd.f32 %v4030, %v4368
      %v4433 = vadd.f32 %v4032, %v4369
      %v4434 = vadd.f32 %v4034, %v4370
      %v4435 = vadd.f32 %v4036, %v4371
      %v4436 = vadd.f32 %v4040, %v4372
      %v4437 = vadd.f32 %v4042, %v4373
      %v4438 = vadd.f32 %v4044, %v4374
      %v4439 = vadd.f32 %v4046, %v4375
      %v4440 = vadd.f32 %v4050, %v4376
      %v4441 = vadd.f32 %v4052, %v4377
      %v4442 = vadd.f32 %v4054, %v4378
      %v4443 = vadd.f32 %v4056, %v4379
      %v4444 = vadd.f32 %v4060, %v4380
      %v4445 = vadd.f32 %v4062, %v4381
      %v4446 = vadd.f32 %v4064, %v4382
      %v4447 = vadd.f32 %v4066, %v4383
      %v4448 = vadd.f32 %v4070, %v4384
      %v4449 = vadd.f32 %v4072, %v4385
      %v4450 = vadd.f32 %v4074, %v4386
      %v4451 = vadd.f32 %v4076, %v4387
      %v4452 = vadd.f32 %v4080, %v4388
      %v4453 = vadd.f32 %v4082, %v4389
      %v4454 = vadd.f32 %v4084, %v4390
      %v4455 = vadd.f32 %v4086, %v4391
      %v4456 = vadd.f32 %v4090, %v4392
      %v4457 = vadd.f32 %v4092, %v4393
      %v4458 = vadd.f32 %v4094, %v4394
      %v4459 = vadd.f32 %v4096, %v4395
      %v4460 = vadd.f32 %v4100, %v4396
      %v4461 = vadd.f32 %v4102, %v4397
      %v4462 = vadd.f32 %v4104, %v4398
      %v4463 = vadd.f32 %v4106, %v4399
      %v4464 = vadd.f32 %v4110, %v4400
      %v4465 = vadd.f32 %v4112, %v4401
      %v4466 = vadd.f32 %v4114, %v4402
      %v4467 = vadd.f32 %v4116, %v4403
      %v4468 = vadd.f32 %v4120, %v4404
      %v4469 = vadd.f32 %v4122, %v4405
      %v4470 = vadd.f32 %v4124, %v4406
      %v4471 = vadd.f32 %v4126, %v4407
      %v4472 = vadd.f32 %v4130, %v4408
      %v4473 = vadd.f32 %v4132, %v4409
      %v4474 = vadd.f32 %v4134, %v4410
      %v4475 = vadd.f32 %v4136, %v4411
      %v4476 = vadd.f32 %v4140, %v4412
      %v4477 = vadd.f32 %v4142, %v4413
      %v4478 = vadd.f32 %v4144, %v4414
      %v4479 = vadd.f32 %v4146, %v4415
      %v4480 = vadd.f32 %v4150, %v4416
      %v4481 = vadd.f32 %v4152, %v4417
      %v4482 = vadd.f32 %v4154, %v4418
      %v4483 = vadd.f32 %v4156, %v4419
      %v4484 = vadd.f32 %v4160, %v4420
      %v4485 = vadd.f32 %v4162, %v4421
      %v4486 = vadd.f32 %v4164, %v4422
      %v4487 = vadd.f32 %v4166, %v4423
      %v4488 = vmul.f32 %v4424, 0.7978846
      %v4489 = vmul.f32 %v4425, 0.7978846
      %v4490 = vmul.f32 %v4426, 0.7978846
      %v4491 = vmul.f32 %v4427, 0.7978846
      %v4492 = vmul.f32 %v4428, 0.7978846
      %v4493 = vmul.f32 %v4429, 0.7978846
      %v4494 = vmul.f32 %v4430, 0.7978846
      %v4495 = vmul.f32 %v4431, 0.7978846
      %v4496 = vmul.f32 %v4432, 0.7978846
      %v4497 = vmul.f32 %v4433, 0.7978846
      %v4498 = vmul.f32 %v4434, 0.7978846
      %v4499 = vmul.f32 %v4435, 0.7978846
      %v4500 = vmul.f32 %v4436, 0.7978846
      %v4501 = vmul.f32 %v4437, 0.7978846
      %v4502 = vmul.f32 %v4438, 0.7978846
      %v4503 = vmul.f32 %v4439, 0.7978846
      %v4504 = vmul.f32 %v4440, 0.7978846
      %v4505 = vmul.f32 %v4441, 0.7978846
      %v4506 = vmul.f32 %v4442, 0.7978846
      %v4507 = vmul.f32 %v4443, 0.7978846
      %v4508 = vmul.f32 %v4444, 0.7978846
      %v4509 = vmul.f32 %v4445, 0.7978846
      %v4510 = vmul.f32 %v4446, 0.7978846
      %v4511 = vmul.f32 %v4447, 0.7978846
      %v4512 = vmul.f32 %v4448, 0.7978846
      %v4513 = vmul.f32 %v4449, 0.7978846
      %v4514 = vmul.f32 %v4450, 0.7978846
      %v4515 = vmul.f32 %v4451, 0.7978846
      %v4516 = vmul.f32 %v4452, 0.7978846
      %v4517 = vmul.f32 %v4453, 0.7978846
      %v4518 = vmul.f32 %v4454, 0.7978846
      %v4519 = vmul.f32 %v4455, 0.7978846
      %v4520 = vmul.f32 %v4456, 0.7978846
      %v4521 = vmul.f32 %v4457, 0.7978846
      %v4522 = vmul.f32 %v4458, 0.7978846
      %v4523 = vmul.f32 %v4459, 0.7978846
      %v4524 = vmul.f32 %v4460, 0.7978846
      %v4525 = vmul.f32 %v4461, 0.7978846
      %v4526 = vmul.f32 %v4462, 0.7978846
      %v4527 = vmul.f32 %v4463, 0.7978846
      %v4528 = vmul.f32 %v4464, 0.7978846
      %v4529 = vmul.f32 %v4465, 0.7978846
      %v4530 = vmul.f32 %v4466, 0.7978846
      %v4531 = vmul.f32 %v4467, 0.7978846
      %v4532 = vmul.f32 %v4468, 0.7978846
      %v4533 = vmul.f32 %v4469, 0.7978846
      %v4534 = vmul.f32 %v4470, 0.7978846
      %v4535 = vmul.f32 %v4471, 0.7978846
      %v4536 = vmul.f32 %v4472, 0.7978846
      %v4537 = vmul.f32 %v4473, 0.7978846
      %v4538 = vmul.f32 %v4474, 0.7978846
      %v4539 = vmul.f32 %v4475, 0.7978846
      %v4540 = vmul.f32 %v4476, 0.7978846
      %v4541 = vmul.f32 %v4477, 0.7978846
      %v4542 = vmul.f32 %v4478, 0.7978846
      %v4543 = vmul.f32 %v4479, 0.7978846
      %v4544 = vmul.f32 %v4480, 0.7978846
      %v4545 = vmul.f32 %v4481, 0.7978846
      %v4546 = vmul.f32 %v4482, 0.7978846
      %v4547 = vmul.f32 %v4483, 0.7978846
      %v4548 = vmul.f32 %v4484, 0.7978846
      %v4549 = vmul.f32 %v4485, 0.7978846
      %v4550 = vmul.f32 %v4486, 0.7978846
      %v4551 = vmul.f32 %v4487, 0.7978846
      %v4552 = vtanh.pop %v4488
      %v4553 = vtanh.pop %v4489
      %v4554 = vtanh.pop %v4490
      %v4555 = vtanh.pop %v4491
      %v4556 = vtanh.pop %v4492
      %v4557 = vtanh.pop %v4493
      %v4558 = vtanh.pop %v4494
      %v4559 = vtanh.pop %v4495
      %v4560 = vtanh.pop %v4496
      %v4561 = vtanh.pop %v4497
      %v4562 = vtanh.pop %v4498
      %v4563 = vtanh.pop %v4499
      %v4564 = vtanh.pop %v4500
      %v4565 = vtanh.pop %v4501
      %v4566 = vtanh.pop %v4502
      %v4567 = vtanh.pop %v4503
      %v4568 = vtanh.pop %v4504
      %v4569 = vtanh.pop %v4505
      %v4570 = vtanh.pop %v4506
      %v4571 = vtanh.pop %v4507
      %v4572 = vtanh.pop %v4508
      %v4573 = vtanh.pop %v4509
      %v4574 = vtanh.pop %v4510
      %v4575 = vtanh.pop %v4511
      %v4576 = vtanh.pop %v4512
      %v4577 = vtanh.pop %v4513
      %v4578 = vtanh.pop %v4514
      %v4579 = vtanh.pop %v4515
      %v4580 = vtanh.pop %v4516
      %v4581 = vtanh.pop %v4517
      %v4582 = vtanh.pop %v4518
      %v4583 = vtanh.pop %v4519
      %v4584 = vtanh.pop %v4520
      %v4585 = vtanh.pop %v4521
      %v4586 = vtanh.pop %v4522
      %v4587 = vtanh.pop %v4523
      %v4588 = vtanh.pop %v4524
      %v4589 = vtanh.pop %v4525
      %v4590 = vtanh.pop %v4526
      %v4591 = vtanh.pop %v4527
      %v4592 = vtanh.pop %v4528
      %v4593 = vtanh.pop %v4529
      %v4594 = vtanh.pop %v4530
      %v4595 = vtanh.pop %v4531
      %v4596 = vtanh.pop %v4532
      %v4597 = vtanh.pop %v4533
      %v4598 = vtanh.pop %v4534
      %v4599 = vtanh.pop %v4535
      %v4600 = vtanh.pop %v4536
      %v4601 = vtanh.pop %v4537
      %v4602 = vtanh.pop %v4538
      %v4603 = vtanh.pop %v4539
      %v4604 = vtanh.pop %v4540
      %v4605 = vtanh.pop %v4541
      %v4606 = vtanh.pop %v4542
      %v4607 = vtanh.pop %v4543
      %v4608 = vtanh.pop %v4544
      %v4609 = vtanh.pop %v4545
      %v4610 = vtanh.pop %v4546
      %v4611 = vtanh.pop %v4547
      %v4612 = vtanh.pop %v4548
      %v4613 = vtanh.pop %v4549
      %v4614 = vtanh.pop %v4550
      %v4615 = vtanh.pop %v4551
      %v4616 = vadd.f32 %v4552, 1.0
      %v4617 = vadd.f32 %v4553, 1.0
      %v4618 = vadd.f32 %v4554, 1.0
      %v4619 = vadd.f32 %v4555, 1.0
      %v4620 = vadd.f32 %v4556, 1.0
      %v4621 = vadd.f32 %v4557, 1.0
      %v4622 = vadd.f32 %v4558, 1.0
      %v4623 = vadd.f32 %v4559, 1.0
      %v4624 = vadd.f32 %v4560, 1.0
      %v4625 = vadd.f32 %v4561, 1.0
      %v4626 = vadd.f32 %v4562, 1.0
      %v4627 = vadd.f32 %v4563, 1.0
      %v4628 = vadd.f32 %v4564, 1.0
      %v4629 = vadd.f32 %v4565, 1.0
      %v4630 = vadd.f32 %v4566, 1.0
      %v4631 = vadd.f32 %v4567, 1.0
      %v4632 = vadd.f32 %v4568, 1.0
      %v4633 = vadd.f32 %v4569, 1.0
      %v4634 = vadd.f32 %v4570, 1.0
      %v4635 = vadd.f32 %v4571, 1.0
      %v4636 = vadd.f32 %v4572, 1.0
      %v4637 = vadd.f32 %v4573, 1.0
      %v4638 = vadd.f32 %v4574, 1.0
      %v4639 = vadd.f32 %v4575, 1.0
      %v4640 = vadd.f32 %v4576, 1.0
      %v4641 = vadd.f32 %v4577, 1.0
      %v4642 = vadd.f32 %v4578, 1.0
      %v4643 = vadd.f32 %v4579, 1.0
      %v4644 = vadd.f32 %v4580, 1.0
      %v4645 = vadd.f32 %v4581, 1.0
      %v4646 = vadd.f32 %v4582, 1.0
      %v4647 = vadd.f32 %v4583, 1.0
      %v4648 = vadd.f32 %v4584, 1.0
      %v4649 = vadd.f32 %v4585, 1.0
      %v4650 = vadd.f32 %v4586, 1.0
      %v4651 = vadd.f32 %v4587, 1.0
      %v4652 = vadd.f32 %v4588, 1.0
      %v4653 = vadd.f32 %v4589, 1.0
      %v4654 = vadd.f32 %v4590, 1.0
      %v4655 = vadd.f32 %v4591, 1.0
      %v4656 = vadd.f32 %v4592, 1.0
      %v4657 = vadd.f32 %v4593, 1.0
      %v4658 = vadd.f32 %v4594, 1.0
      %v4659 = vadd.f32 %v4595, 1.0
      %v4660 = vadd.f32 %v4596, 1.0
      %v4661 = vadd.f32 %v4597, 1.0
      %v4662 = vadd.f32 %v4598, 1.0
      %v4663 = vadd.f32 %v4599, 1.0
      %v4664 = vadd.f32 %v4600, 1.0
      %v4665 = vadd.f32 %v4601, 1.0
      %v4666 = vadd.f32 %v4602, 1.0
      %v4667 = vadd.f32 %v4603, 1.0
      %v4668 = vadd.f32 %v4604, 1.0
      %v4669 = vadd.f32 %v4605, 1.0
      %v4670 = vadd.f32 %v4606, 1.0
      %v4671 = vadd.f32 %v4607, 1.0
      %v4672 = vadd.f32 %v4608, 1.0
      %v4673 = vadd.f32 %v4609, 1.0
      %v4674 = vadd.f32 %v4610, 1.0
      %v4675 = vadd.f32 %v4611, 1.0
      %v4676 = vadd.f32 %v4612, 1.0
      %v4677 = vadd.f32 %v4613, 1.0
      %v4678 = vadd.f32 %v4614, 1.0
      %v4679 = vadd.f32 %v4615, 1.0
      %v4680 = vmul.f32 %v4168, %v4616
      %v4681 = vmul.f32 %v4169, %v4617
      %v4682 = vmul.f32 %v4170, %v4618
      %v4683 = vmul.f32 %v4171, %v4619
      %v4684 = vmul.f32 %v4172, %v4620
      %v4685 = vmul.f32 %v4173, %v4621
      %v4686 = vmul.f32 %v4174, %v4622
      %v4687 = vmul.f32 %v4175, %v4623
      %v4688 = vmul.f32 %v4176, %v4624
      %v4689 = vmul.f32 %v4177, %v4625
      %v4690 = vmul.f32 %v4178, %v4626
      %v4691 = vmul.f32 %v4179, %v4627
      %v4692 = vmul.f32 %v4180, %v4628
      %v4693 = vmul.f32 %v4181, %v4629
      %v4694 = vmul.f32 %v4182, %v4630
      %v4695 = vmul.f32 %v4183, %v4631
      %v4696 = vmul.f32 %v4184, %v4632
      %v4697 = vmul.f32 %v4185, %v4633
      %v4698 = vmul.f32 %v4186, %v4634
      %v4699 = vmul.f32 %v4187, %v4635
      %v4700 = vmul.f32 %v4188, %v4636
      %v4701 = vmul.f32 %v4189, %v4637
      %v4702 = vmul.f32 %v4190, %v4638
      %v4703 = vmul.f32 %v4191, %v4639
      %v4704 = vmul.f32 %v4192, %v4640
      %v4705 = vmul.f32 %v4193, %v4641
      %v4706 = vmul.f32 %v4194, %v4642
      %v4707 = vmul.f32 %v4195, %v4643
      %v4708 = vmul.f32 %v4196, %v4644
      %v4709 = vmul.f32 %v4197, %v4645
      %v4710 = vmul.f32 %v4198, %v4646
      %v4711 = vmul.f32 %v4199, %v4647
      %v4712 = vmul.f32 %v4200, %v4648
      %v4713 = vmul.f32 %v4201, %v4649
      %v4714 = vmul.f32 %v4202, %v4650
      %v4715 = vmul.f32 %v4203, %v4651
      %v4716 = vmul.f32 %v4204, %v4652
      %v4717 = vmul.f32 %v4205, %v4653
      %v4718 = vmul.f32 %v4206, %v4654
      %v4719 = vmul.f32 %v4207, %v4655
      %v4720 = vmul.f32 %v4208, %v4656
      %v4721 = vmul.f32 %v4209, %v4657
      %v4722 = vmul.f32 %v4210, %v4658
      %v4723 = vmul.f32 %v4211, %v4659
      %v4724 = vmul.f32 %v4212, %v4660
      %v4725 = vmul.f32 %v4213, %v4661
      %v4726 = vmul.f32 %v4214, %v4662
      %v4727 = vmul.f32 %v4215, %v4663
      %v4728 = vmul.f32 %v4216, %v4664
      %v4729 = vmul.f32 %v4217, %v4665
      %v4730 = vmul.f32 %v4218, %v4666
      %v4731 = vmul.f32 %v4219, %v4667
      %v4732 = vmul.f32 %v4220, %v4668
      %v4733 = vmul.f32 %v4221, %v4669
      %v4734 = vmul.f32 %v4222, %v4670
      %v4735 = vmul.f32 %v4223, %v4671
      %v4736 = vmul.f32 %v4224, %v4672
      %v4737 = vmul.f32 %v4225, %v4673
      %v4738 = vmul.f32 %v4226, %v4674
      %v4739 = vmul.f32 %v4227, %v4675
      %v4740 = vmul.f32 %v4228, %v4676
      %v4741 = vmul.f32 %v4229, %v4677
      %v4742 = vmul.f32 %v4230, %v4678
      %v4743 = vmul.f32 %v4231, %v4679
      %v4744 = vpack.c.bf16 %v4682, %v4680
      %v4745 = vpack.c.bf16 %v4683, %v4681
      %v4746 = vpack.c.bf16 %v4686, %v4684
      %v4747 = vpack.c.bf16 %v4687, %v4685
      %v4748 = vpack.c.bf16 %v4690, %v4688
      %v4749 = vpack.c.bf16 %v4691, %v4689
      %v4750 = vpack.c.bf16 %v4694, %v4692
      %v4751 = vpack.c.bf16 %v4695, %v4693
      %v4752 = vpack.c.bf16 %v4698, %v4696
      %v4753 = vpack.c.bf16 %v4699, %v4697
      %v4754 = vpack.c.bf16 %v4702, %v4700
      %v4755 = vpack.c.bf16 %v4703, %v4701
      %v4756 = vpack.c.bf16 %v4706, %v4704
      %v4757 = vpack.c.bf16 %v4707, %v4705
      %v4758 = vpack.c.bf16 %v4710, %v4708
      %v4759 = vpack.c.bf16 %v4711, %v4709
      %v4760 = vpack.c.bf16 %v4714, %v4712
      %v4761 = vpack.c.bf16 %v4715, %v4713
      %v4762 = vpack.c.bf16 %v4718, %v4716
      %v4763 = vpack.c.bf16 %v4719, %v4717
      %v4764 = vpack.c.bf16 %v4722, %v4720
      %v4765 = vpack.c.bf16 %v4723, %v4721
      %v4766 = vpack.c.bf16 %v4726, %v4724
      %v4767 = vpack.c.bf16 %v4727, %v4725
      %v4768 = vpack.c.bf16 %v4730, %v4728
      %v4769 = vpack.c.bf16 %v4731, %v4729
      %v4770 = vpack.c.bf16 %v4734, %v4732
      %v4771 = vpack.c.bf16 %v4735, %v4733
      %v4772 = vpack.c.bf16 %v4738, %v4736
      %v4773 = vpack.c.bf16 %v4739, %v4737
      %v4774 = vpack.c.bf16 %v4742, %v4740
      %v4775 = vpack.c.bf16 %v4743, %v4741
      %v4776 = vld [vmem:[%s15] sm:$0xf]
      %v4777 = vld [vmem:[%s15 + $0x4] sm:$0xf]
      %v4778 = vld [vmem:[%s15 + $0x8] sm:$0xf]
      %v4779 = vld [vmem:[%s15 + $0xc] sm:$0xf]
      %v4780 = vld [vmem:[%s15 + $0x10] sm:$0xf]
      %v4781 = vld [vmem:[%s15 + $0x14] sm:$0xf]
      %v4782 = vld [vmem:[%s15 + $0x18] sm:$0xf]
      %v4783 = vld [vmem:[%s15 + $0x1c] sm:$0xf]
      %v4784 = vld [vmem:[%s15 + $0x20] sm:$0xf]
      %v4785 = vld [vmem:[%s15 + $0x24] sm:$0xf]
      %v4786 = vld [vmem:[%s15 + $0x28] sm:$0xf]
      %v4787 = vld [vmem:[%s15 + $0x2c] sm:$0xf]
      %v4788 = vld [vmem:[%s15 + $0x30] sm:$0xf]
      %v4789 = vld [vmem:[%s15 + $0x34] sm:$0xf]
      %v4790 = vld [vmem:[%s15 + $0x38] sm:$0xf]
      %v4791 = vld [vmem:[%s15 + $0x3c] sm:$0xf]
      %v4792 = vld [vmem:[%s15 + $0x40] sm:$0xf]
      %v4793 = vld [vmem:[%s15 + $0x44] sm:$0xf]
      %v4794 = vld [vmem:[%s15 + $0x48] sm:$0xf]
      %v4795 = vld [vmem:[%s15 + $0x4c] sm:$0xf]
      %v4796 = vld [vmem:[%s15 + $0x50] sm:$0xf]
      %v4797 = vld [vmem:[%s15 + $0x54] sm:$0xf]
      %v4798 = vld [vmem:[%s15 + $0x58] sm:$0xf]
      %v4799 = vld [vmem:[%s15 + $0x5c] sm:$0xf]
      %v4800 = vld [vmem:[%s15 + $0x60] sm:$0xf]
      %v4801 = vld [vmem:[%s15 + $0x64] sm:$0xf]
      %v4802 = vld [vmem:[%s15 + $0x68] sm:$0xf]
      %v4803 = vld [vmem:[%s15 + $0x6c] sm:$0xf]
      %v4804 = vld [vmem:[%s15 + $0x70] sm:$0xf]
      %v4805 = vld [vmem:[%s15 + $0x74] sm:$0xf]
      %v4806 = vld [vmem:[%s15 + $0x78] sm:$0xf]
      %v4807 = vld [vmem:[%s15 + $0x7c] sm:$0xf]
      %v4808 = vld [vmem:[%s16] sm:$0x1]
      %v4810 = vlaneseq
      %v4811 = vshrl.u32 %v4810, 7
      %v4812 = vsub.s32 0, %v4811
      %v4813 = vrot.slane %v4808, %v4812
      %v4847 = vunpack.c.l.b16 %v4776
      %v4848 = vunpack.c.l.b16 %v4777
      %v4849 = vunpack.c.l.b16 %v4778
      %v4850 = vunpack.c.l.b16 %v4779
      %v4851 = vunpack.c.l.b16 %v4780
      %v4852 = vunpack.c.l.b16 %v4781
      %v4853 = vunpack.c.l.b16 %v4782
      %v4854 = vunpack.c.l.b16 %v4783
      %v4855 = vunpack.c.l.b16 %v4784
      %v4856 = vunpack.c.l.b16 %v4785
      %v4857 = vunpack.c.l.b16 %v4786
      %v4858 = vunpack.c.l.b16 %v4787
      %v4859 = vunpack.c.l.b16 %v4788
      %v4860 = vunpack.c.l.b16 %v4789
      %v4861 = vunpack.c.l.b16 %v4790
      %v4862 = vunpack.c.l.b16 %v4791
      %v4863 = vunpack.c.l.b16 %v4792
      %v4864 = vunpack.c.l.b16 %v4793
      %v4865 = vunpack.c.l.b16 %v4794
      %v4866 = vunpack.c.l.b16 %v4795
      %v4867 = vunpack.c.l.b16 %v4796
      %v4868 = vunpack.c.l.b16 %v4797
      %v4869 = vunpack.c.l.b16 %v4798
      %v4870 = vunpack.c.l.b16 %v4799
      %v4871 = vunpack.c.l.b16 %v4800
      %v4872 = vunpack.c.l.b16 %v4801
      %v4873 = vunpack.c.l.b16 %v4802
      %v4874 = vunpack.c.l.b16 %v4803
      %v4875 = vunpack.c.l.b16 %v4804
      %v4876 = vunpack.c.l.b16 %v4805
      %v4877 = vunpack.c.l.b16 %v4806
      %v4878 = vunpack.c.l.b16 %v4807
      %v4879 = vpack.c.b16 %v4848, %v4847
      %v4880 = vpack.c.b16 %v4850, %v4849
      %v4881 = vpack.c.b16 %v4852, %v4851
      %v4882 = vpack.c.b16 %v4854, %v4853
      %v4883 = vpack.c.b16 %v4856, %v4855
      %v4884 = vpack.c.b16 %v4858, %v4857
      %v4885 = vpack.c.b16 %v4860, %v4859
      %v4886 = vpack.c.b16 %v4862, %v4861
      %v4887 = vpack.c.b16 %v4864, %v4863
      %v4888 = vpack.c.b16 %v4866, %v4865
      %v4889 = vpack.c.b16 %v4868, %v4867
      %v4890 = vpack.c.b16 %v4870, %v4869
      %v4891 = vpack.c.b16 %v4872, %v4871
      %v4892 = vpack.c.b16 %v4874, %v4873
      %v4893 = vpack.c.b16 %v4876, %v4875
      %v4894 = vpack.c.b16 %v4878, %v4877
      %4911 = vmatprep.subr.bf16.mxu0 0
      %4912 = vmatpush1.bf16.msra.mxu0 %v4886
      %4913 = vmatprep.subr.bf16.mxu0 0
      %4914 = vmatpush1.bf16.msra.mxu0 %v4885
      %4915 = vmatprep.subr.bf16.mxu0 0
      %4916 = vmatpush1.bf16.msra.mxu0 %v4884
      %4917 = vmatprep.subr.bf16.mxu0 0
      %4918 = vmatpush1.bf16.msra.mxu0 %v4883
      %4919 = vmatprep.subr.bf16.mxu0 0
      %4920 = vmatpush1.bf16.msra.mxu0 %v4882
      %4921 = vmatprep.subr.bf16.mxu0 0
      %4922 = vmatpush1.bf16.msra.mxu0 %v4881
      %4923 = vmatprep.subr.bf16.mxu0 0
      %4924 = vmatpush1.bf16.msra.mxu0 %v4880
      %4925 = vmatprep.subr.bf16.mxu0 0
      %4926 = vmatpush1.bf16.msra.mxu0 %v4879
      %4927 = vmatprep.subr.bf16.mxu0 0
      %4928 = vmatpush2.bf16.msra.mxu0 %v4894
      %4929 = vmatprep.subr.bf16.mxu0 0
      %4930 = vmatpush2.bf16.msra.mxu0 %v4893
      %4931 = vmatprep.subr.bf16.mxu0 0
      %4932 = vmatpush2.bf16.msra.mxu0 %v4892
      %4933 = vmatprep.subr.bf16.mxu0 0
      %4934 = vmatpush2.bf16.msra.mxu0 %v4891
      %4935 = vmatprep.subr.bf16.mxu0 0
      %4936 = vmatpush2.bf16.msra.mxu0 %v4890
      %4937 = vmatprep.subr.bf16.mxu0 0
      %4938 = vmatpush2.bf16.msra.mxu0 %v4889
      %4939 = vmatprep.subr.bf16.mxu0 0
      %4940 = vmatpush2.bf16.msra.mxu0 %v4888
      %4941 = vmatprep.subr.bf16.mxu0 0
      %4942 = vmatpush2.bf16.msra.mxu0 %v4887
      %4943 = vmatprep.mubr.bf16.mxu0 %v4745
      %4944 = vmatmul.mubr.bf16.gmra.mxu0 %v4744
      %v4945 = vpop.f32.mrf.mxu0
      %v4946 = vadd.f32 %v4813, %v4945
      %v4947 = vpop.f32.mrf.mxu0
      %v4948 = vpop.f32.mrf.mxu0
      %v4949 = vadd.f32 %v4813, %v4948
      %v4950 = vpop.f32.mrf.mxu0
      %4951 = vmatprep.mubr.bf16.mxu0 %v4747
      %4952 = vmatmul.mubr.bf16.gmra.mxu0 %v4746
      %v4953 = vpop.f32.mrf.mxu0
      %v4954 = vadd.f32 %v4813, %v4953
      %v4955 = vpop.f32.mrf.mxu0
      %v4956 = vpop.f32.mrf.mxu0
      %v4957 = vadd.f32 %v4813, %v4956
      %v4958 = vpop.f32.mrf.mxu0
      %4959 = vmatprep.mubr.bf16.mxu0 %v4749
      %4960 = vmatmul.mubr.bf16.gmra.mxu0 %v4748
      %v4961 = vpop.f32.mrf.mxu0
      %v4962 = vadd.f32 %v4813, %v4961
      %v4963 = vpop.f32.mrf.mxu0
      %v4964 = vpop.f32.mrf.mxu0
      %v4965 = vadd.f32 %v4813, %v4964
      %v4966 = vpop.f32.mrf.mxu0
      %4967 = vmatprep.mubr.bf16.mxu0 %v4751
      %4968 = vmatmul.mubr.bf16.gmra.mxu0 %v4750
      %v4969 = vpop.f32.mrf.mxu0
      %v4970 = vadd.f32 %v4813, %v4969
      %v4971 = vpop.f32.mrf.mxu0
      %v4972 = vpop.f32.mrf.mxu0
      %v4973 = vadd.f32 %v4813, %v4972
      %v4974 = vpop.f32.mrf.mxu0
      %4975 = vmatprep.mubr.bf16.mxu0 %v4753
      %4976 = vmatmul.mubr.bf16.gmra.mxu0 %v4752
      %v4977 = vpop.f32.mrf.mxu0
      %v4978 = vadd.f32 %v4813, %v4977
      %v4979 = vpop.f32.mrf.mxu0
      %v4980 = vpop.f32.mrf.mxu0
      %v4981 = vadd.f32 %v4813, %v4980
      %v4982 = vpop.f32.mrf.mxu0
      %4983 = vmatprep.mubr.bf16.mxu0 %v4755
      %4984 = vmatmul.mubr.bf16.gmra.mxu0 %v4754
      %v4985 = vpop.f32.mrf.mxu0
      %v4986 = vadd.f32 %v4813, %v4985
      %v4987 = vpop.f32.mrf.mxu0
      %v4988 = vpop.f32.mrf.mxu0
      %v4989 = vadd.f32 %v4813, %v4988
      %v4990 = vpop.f32.mrf.mxu0
      %4991 = vmatprep.mubr.bf16.mxu0 %v4757
      %4992 = vmatmul.mubr.bf16.gmra.mxu0 %v4756
      %v4993 = vpop.f32.mrf.mxu0
      %v4994 = vadd.f32 %v4813, %v4993
      %v4995 = vpop.f32.mrf.mxu0
      %v4996 = vpop.f32.mrf.mxu0
      %v4997 = vadd.f32 %v4813, %v4996
      %v4998 = vpop.f32.mrf.mxu0
      %4999 = vmatprep.mubr.bf16.mxu0 %v4759
      %5000 = vmatmul.mubr.bf16.gmra.mxu0 %v4758
      %v5001 = vpop.f32.mrf.mxu0
      %v5002 = vadd.f32 %v4813, %v5001
      %v5003 = vpop.f32.mrf.mxu0
      %v5004 = vpop.f32.mrf.mxu0
      %v5005 = vadd.f32 %v4813, %v5004
      %v5006 = vpop.f32.mrf.mxu0
      %5007 = vmatprep.mubr.bf16.mxu0 %v4761
      %5008 = vmatmul.mubr.bf16.gmra.mxu0 %v4760
      %v5009 = vpop.f32.mrf.mxu0
      %v5010 = vadd.f32 %v4813, %v5009
      %v5011 = vpop.f32.mrf.mxu0
      %v5012 = vpop.f32.mrf.mxu0
      %v5013 = vadd.f32 %v4813, %v5012
      %v5014 = vpop.f32.mrf.mxu0
      %5015 = vmatprep.mubr.bf16.mxu0 %v4763
      %5016 = vmatmul.mubr.bf16.gmra.mxu0 %v4762
      %v5017 = vpop.f32.mrf.mxu0
      %v5018 = vadd.f32 %v4813, %v5017
      %v5019 = vpop.f32.mrf.mxu0
      %v5020 = vpop.f32.mrf.mxu0
      %v5021 = vadd.f32 %v4813, %v5020
      %v5022 = vpop.f32.mrf.mxu0
      %5023 = vmatprep.mubr.bf16.mxu0 %v4765
      %5024 = vmatmul.mubr.bf16.gmra.mxu0 %v4764
      %v5025 = vpop.f32.mrf.mxu0
      %v5026 = vadd.f32 %v4813, %v5025
      %v5027 = vpop.f32.mrf.mxu0
      %v5028 = vpop.f32.mrf.mxu0
      %v5029 = vadd.f32 %v4813, %v5028
      %v5030 = vpop.f32.mrf.mxu0
      %5031 = vmatprep.mubr.bf16.mxu0 %v4767
      %5032 = vmatmul.mubr.bf16.gmra.mxu0 %v4766
      %v5033 = vpop.f32.mrf.mxu0
      %v5034 = vadd.f32 %v4813, %v5033
      %v5035 = vpop.f32.mrf.mxu0
      %v5036 = vpop.f32.mrf.mxu0
      %v5037 = vadd.f32 %v4813, %v5036
      %v5038 = vpop.f32.mrf.mxu0
      %5039 = vmatprep.mubr.bf16.mxu0 %v4769
      %5040 = vmatmul.mubr.bf16.gmra.mxu0 %v4768
      %v5041 = vpop.f32.mrf.mxu0
      %v5042 = vadd.f32 %v4813, %v5041
      %v5043 = vpop.f32.mrf.mxu0
      %v5044 = vpop.f32.mrf.mxu0
      %v5045 = vadd.f32 %v4813, %v5044
      %v5046 = vpop.f32.mrf.mxu0
      %5047 = vmatprep.mubr.bf16.mxu0 %v4771
      %5048 = vmatmul.mubr.bf16.gmra.mxu0 %v4770
      %v5049 = vpop.f32.mrf.mxu0
      %v5050 = vadd.f32 %v4813, %v5049
      %v5051 = vpop.f32.mrf.mxu0
      %v5052 = vpop.f32.mrf.mxu0
      %v5053 = vadd.f32 %v4813, %v5052
      %v5054 = vpop.f32.mrf.mxu0
      %5055 = vmatprep.mubr.bf16.mxu0 %v4773
      %5056 = vmatmul.mubr.bf16.gmra.mxu0 %v4772
      %v5057 = vpop.f32.mrf.mxu0
      %v5058 = vadd.f32 %v4813, %v5057
      %v5059 = vpop.f32.mrf.mxu0
      %v5060 = vpop.f32.mrf.mxu0
      %v5061 = vadd.f32 %v4813, %v5060
      %v5062 = vpop.f32.mrf.mxu0
      %5063 = vmatprep.mubr.bf16.mxu0 %v4775
      %5064 = vmatmul.mubr.bf16.gmra.mxu0 %v4774
      %v5065 = vpop.f32.mrf.mxu0
      %v5066 = vadd.f32 %v4813, %v5065
      %v5067 = vpop.f32.mrf.mxu0
      %v5068 = vpop.f32.mrf.mxu0
      %v5069 = vadd.f32 %v4813, %v5068
      %v5070 = vpop.f32.mrf.mxu0
      %5071 = vdwg.mxu0
      %v5072 = vadd.f32 %v4946, %v3389
      %v5073 = vadd.f32 %v4949, %v3390
      %v5074 = vadd.f32 %v4954, %v3391
      %v5075 = vadd.f32 %v4957, %v3392
      %v5076 = vadd.f32 %v4962, %v3393
      %v5077 = vadd.f32 %v4965, %v3394
      %v5078 = vadd.f32 %v4970, %v3395
      %v5079 = vadd.f32 %v4973, %v3396
      %v5080 = vadd.f32 %v4978, %v3397
      %v5081 = vadd.f32 %v4981, %v3398
      %v5082 = vadd.f32 %v4986, %v3399
      %v5083 = vadd.f32 %v4989, %v3400
      %v5084 = vadd.f32 %v4994, %v3401
      %v5085 = vadd.f32 %v4997, %v3402
      %v5086 = vadd.f32 %v5002, %v3403
      %v5087 = vadd.f32 %v5005, %v3404
      %v5088 = vadd.f32 %v5010, %v3405
      %v5089 = vadd.f32 %v5013, %v3406
      %v5090 = vadd.f32 %v5018, %v3407
      %v5091 = vadd.f32 %v5021, %v3408
      %v5092 = vadd.f32 %v5026, %v3409
      %v5093 = vadd.f32 %v5029, %v3410
      %v5094 = vadd.f32 %v5034, %v3411
      %v5095 = vadd.f32 %v5037, %v3412
      %v5096 = vadd.f32 %v5042, %v3413
      %v5097 = vadd.f32 %v5045, %v3414
      %v5098 = vadd.f32 %v5050, %v3415
      %v5099 = vadd.f32 %v5053, %v3416
      %v5100 = vadd.f32 %v5058, %v3417
      %v5101 = vadd.f32 %v5061, %v3418
      %v5102 = vadd.f32 %v5066, %v3419
      %v5103 = vadd.f32 %v5069, %v3420
      %v5104 = vpack.c.bf16 %v5073, %v5072
      %v5105 = vpack.c.bf16 %v5075, %v5074
      %v5106 = vpack.c.bf16 %v5077, %v5076
      %v5107 = vpack.c.bf16 %v5079, %v5078
      %v5108 = vpack.c.bf16 %v5081, %v5080
      %v5109 = vpack.c.bf16 %v5083, %v5082
      %v5110 = vpack.c.bf16 %v5085, %v5084
      %v5111 = vpack.c.bf16 %v5087, %v5086
      %v5112 = vpack.c.bf16 %v5089, %v5088
      %v5113 = vpack.c.bf16 %v5091, %v5090
      %v5114 = vpack.c.bf16 %v5093, %v5092
      %v5115 = vpack.c.bf16 %v5095, %v5094
      %v5116 = vpack.c.bf16 %v5097, %v5096
      %v5117 = vpack.c.bf16 %v5099, %v5098
      %v5118 = vpack.c.bf16 %v5101, %v5100
      %v5119 = vpack.c.bf16 %v5103, %v5102
      %v5120 = vld [vmem:[%s17] sm:$0xf]
      %v5121 = vld [vmem:[%s17 + $0x4] sm:$0xf]
      %v5122 = vld [vmem:[%s17 + $0x8] sm:$0xf]
      %v5123 = vld [vmem:[%s17 + $0xc] sm:$0xf]
      %v5124 = vld [vmem:[%s17 + $0x10] sm:$0xf]
      %v5125 = vld [vmem:[%s17 + $0x14] sm:$0xf]
      %v5126 = vld [vmem:[%s17 + $0x18] sm:$0xf]
      %v5127 = vld [vmem:[%s17 + $0x1c] sm:$0xf]
      %v5128 = vld [vmem:[%s17 + $0x20] sm:$0xf]
      %v5129 = vld [vmem:[%s17 + $0x24] sm:$0xf]
      %v5130 = vld [vmem:[%s17 + $0x28] sm:$0xf]
      %v5131 = vld [vmem:[%s17 + $0x2c] sm:$0xf]
      %v5132 = vld [vmem:[%s17 + $0x30] sm:$0xf]
      %v5133 = vld [vmem:[%s17 + $0x34] sm:$0xf]
      %v5134 = vld [vmem:[%s17 + $0x38] sm:$0xf]
      %v5135 = vld [vmem:[%s17 + $0x3c] sm:$0xf]
      %v5136 = vld [vmem:[%s18] sm:$0x1]
      %v5138 = vlaneseq
      %v5139 = vshrl.u32 %v5138, 7
      %v5140 = vsub.s32 0, %v5139
      %v5141 = vrot.slane %v5136, %v5140
      %v5159 = vunpack.c.l.b16 %v5120
      %v5160 = vunpack.c.l.b16 %v5121
      %v5161 = vunpack.c.l.b16 %v5122
      %v5162 = vunpack.c.l.b16 %v5123
      %v5163 = vunpack.c.l.b16 %v5124
      %v5164 = vunpack.c.l.b16 %v5125
      %v5165 = vunpack.c.l.b16 %v5126
      %v5166 = vunpack.c.l.b16 %v5127
      %v5167 = vunpack.c.l.b16 %v5128
      %v5168 = vunpack.c.l.b16 %v5129
      %v5169 = vunpack.c.l.b16 %v5130
      %v5170 = vunpack.c.l.b16 %v5131
      %v5171 = vunpack.c.l.b16 %v5132
      %v5172 = vunpack.c.l.b16 %v5133
      %v5173 = vunpack.c.l.b16 %v5134
      %v5174 = vunpack.c.l.b16 %v5135
      %v5175 = vpack.c.b16 %v5160, %v5159
      %v5176 = vpack.c.b16 %v5162, %v5161
      %v5177 = vpack.c.b16 %v5164, %v5163
      %v5178 = vpack.c.b16 %v5166, %v5165
      %v5179 = vpack.c.b16 %v5168, %v5167
      %v5180 = vpack.c.b16 %v5170, %v5169
      %v5181 = vpack.c.b16 %v5172, %v5171
      %v5182 = vpack.c.b16 %v5174, %v5173
      %5191 = vmatprep.subr.bf16.mxu0 0
      %5192 = vmatpush1.bf16.msra.mxu0 %v5182
      %5193 = vmatprep.subr.bf16.mxu0 0
      %5194 = vmatpush1.bf16.msra.mxu0 %v5181
      %5195 = vmatprep.subr.bf16.mxu0 0
      %5196 = vmatpush1.bf16.msra.mxu0 %v5180
      %5197 = vmatprep.subr.bf16.mxu0 0
      %5198 = vmatpush1.bf16.msra.mxu0 %v5179
      %5199 = vmatprep.subr.bf16.mxu0 0
      %5200 = vmatpush1.bf16.msra.mxu0 %v5178
      %5201 = vmatprep.subr.bf16.mxu0 0
      %5202 = vmatpush1.bf16.msra.mxu0 %v5177
      %5203 = vmatprep.subr.bf16.mxu0 0
      %5204 = vmatpush1.bf16.msra.mxu0 %v5176
      %5205 = vmatprep.subr.bf16.mxu0 0
      %5206 = vmatpush1.bf16.msra.mxu0 %v5175
      %5207 = vmatprep.subr.bf16.mxu0 0
      %5208 = vmatpush2.bf16.msra.mxu0 0
      %5209 = vmatprep.subr.bf16.mxu0 0
      %5210 = vmatpush2.bf16.msra.mxu0 0
      %5211 = vmatprep.subr.bf16.mxu0 0
      %5212 = vmatpush2.bf16.msra.mxu0 0
      %5213 = vmatprep.subr.bf16.mxu0 0
      %5214 = vmatpush2.bf16.msra.mxu0 0
      %5215 = vmatprep.subr.bf16.mxu0 0
      %5216 = vmatpush2.bf16.msra.mxu0 0
      %5217 = vmatprep.subr.bf16.mxu0 0
      %5218 = vmatpush2.bf16.msra.mxu0 0
      %5219 = vmatprep.subr.bf16.mxu0 0
      %5220 = vmatpush2.bf16.msra.mxu0 0
      %5221 = vmatprep.subr.bf16.mxu0 0
      %5222 = vmatpush2.bf16.msra.mxu0 0
      %5223 = vmatprep.mubr.bf16.mxu0 0
      %5224 = vmatmul.mubr.bf16.gmra.mxu0 %v5104
      %v5225 = vpop.f32.mrf.mxu0
      %v5226 = vadd.f32 %v5141, %v5225
      %v5227 = vpop.f32.mrf.mxu0
      %v5228 = vpop.f32.mrf.mxu0
      %v5229 = vadd.f32 %v5141, %v5228
      %v5230 = vpop.f32.mrf.mxu0
      %5231 = vmatprep.mubr.bf16.mxu0 0
      %5232 = vmatmul.mubr.bf16.gmra.mxu0 %v5105
      %v5233 = vpop.f32.mrf.mxu0
      %v5234 = vadd.f32 %v5141, %v5233
      %v5235 = vpop.f32.mrf.mxu0
      %v5236 = vpop.f32.mrf.mxu0
      %v5237 = vadd.f32 %v5141, %v5236
      %v5238 = vpop.f32.mrf.mxu0
      %5239 = vmatprep.mubr.bf16.mxu0 0
      %5240 = vmatmul.mubr.bf16.gmra.mxu0 %v5106
      %v5241 = vpop.f32.mrf.mxu0
      %v5242 = vadd.f32 %v5141, %v5241
      %v5243 = vpop.f32.mrf.mxu0
      %v5244 = vpop.f32.mrf.mxu0
      %v5245 = vadd.f32 %v5141, %v5244
      %v5246 = vpop.f32.mrf.mxu0
      %5247 = vmatprep.mubr.bf16.mxu0 0
      %5248 = vmatmul.mubr.bf16.gmra.mxu0 %v5107
      %v5249 = vpop.f32.mrf.mxu0
      %v5250 = vadd.f32 %v5141, %v5249
      %v5251 = vpop.f32.mrf.mxu0
      %v5252 = vpop.f32.mrf.mxu0
      %v5253 = vadd.f32 %v5141, %v5252
      %v5254 = vpop.f32.mrf.mxu0
      %5255 = vmatprep.mubr.bf16.mxu0 0
      %5256 = vmatmul.mubr.bf16.gmra.mxu0 %v5108
      %v5257 = vpop.f32.mrf.mxu0
      %v5258 = vadd.f32 %v5141, %v5257
      %v5259 = vpop.f32.mrf.mxu0
      %v5260 = vpop.f32.mrf.mxu0
      %v5261 = vadd.f32 %v5141, %v5260
      %v5262 = vpop.f32.mrf.mxu0
      %5263 = vmatprep.mubr.bf16.mxu0 0
      %5264 = vmatmul.mubr.bf16.gmra.mxu0 %v5109
      %v5265 = vpop.f32.mrf.mxu0
      %v5266 = vadd.f32 %v5141, %v5265
      %v5267 = vpop.f32.mrf.mxu0
      %v5268 = vpop.f32.mrf.mxu0
      %v5269 = vadd.f32 %v5141, %v5268
      %v5270 = vpop.f32.mrf.mxu0
      %5271 = vmatprep.mubr.bf16.mxu0 0
      %5272 = vmatmul.mubr.bf16.gmra.mxu0 %v5110
      %v5273 = vpop.f32.mrf.mxu0
      %v5274 = vadd.f32 %v5141, %v5273
      %v5275 = vpop.f32.mrf.mxu0
      %v5276 = vpop.f32.mrf.mxu0
      %v5277 = vadd.f32 %v5141, %v5276
      %v5278 = vpop.f32.mrf.mxu0
      %5279 = vmatprep.mubr.bf16.mxu0 0
      %5280 = vmatmul.mubr.bf16.gmra.mxu0 %v5111
      %v5281 = vpop.f32.mrf.mxu0
      %v5282 = vadd.f32 %v5141, %v5281
      %v5283 = vpop.f32.mrf.mxu0
      %v5284 = vpop.f32.mrf.mxu0
      %v5285 = vadd.f32 %v5141, %v5284
      %v5286 = vpop.f32.mrf.mxu0
      %5287 = vmatprep.mubr.bf16.mxu0 0
      %5288 = vmatmul.mubr.bf16.gmra.mxu0 %v5112
      %v5289 = vpop.f32.mrf.mxu0
      %v5290 = vadd.f32 %v5141, %v5289
      %v5291 = vpop.f32.mrf.mxu0
      %v5292 = vpop.f32.mrf.mxu0
      %v5293 = vadd.f32 %v5141, %v5292
      %v5294 = vpop.f32.mrf.mxu0
      %5295 = vmatprep.mubr.bf16.mxu0 0
      %5296 = vmatmul.mubr.bf16.gmra.mxu0 %v5113
      %v5297 = vpop.f32.mrf.mxu0
      %v5298 = vadd.f32 %v5141, %v5297
      %v5299 = vpop.f32.mrf.mxu0
      %v5300 = vpop.f32.mrf.mxu0
      %v5301 = vadd.f32 %v5141, %v5300
      %v5302 = vpop.f32.mrf.mxu0
      %5303 = vmatprep.mubr.bf16.mxu0 0
      %5304 = vmatmul.mubr.bf16.gmra.mxu0 %v5114
      %v5305 = vpop.f32.mrf.mxu0
      %v5306 = vadd.f32 %v5141, %v5305
      %v5307 = vpop.f32.mrf.mxu0
      %v5308 = vpop.f32.mrf.mxu0
      %v5309 = vadd.f32 %v5141, %v5308
      %v5310 = vpop.f32.mrf.mxu0
      %5311 = vmatprep.mubr.bf16.mxu0 0
      %5312 = vmatmul.mubr.bf16.gmra.mxu0 %v5115
      %v5313 = vpop.f32.mrf.mxu0
      %v5314 = vadd.f32 %v5141, %v5313
      %v5315 = vpop.f32.mrf.mxu0
      %v5316 = vpop.f32.mrf.mxu0
      %v5317 = vadd.f32 %v5141, %v5316
      %v5318 = vpop.f32.mrf.mxu0
      %5319 = vmatprep.mubr.bf16.mxu0 0
      %5320 = vmatmul.mubr.bf16.gmra.mxu0 %v5116
      %v5321 = vpop.f32.mrf.mxu0
      %v5322 = vadd.f32 %v5141, %v5321
      %v5323 = vpop.f32.mrf.mxu0
      %v5324 = vpop.f32.mrf.mxu0
      %v5325 = vadd.f32 %v5141, %v5324
      %v5326 = vpop.f32.mrf.mxu0
      %5327 = vmatprep.mubr.bf16.mxu0 0
      %5328 = vmatmul.mubr.bf16.gmra.mxu0 %v5117
      %v5329 = vpop.f32.mrf.mxu0
      %v5330 = vadd.f32 %v5141, %v5329
      %v5331 = vpop.f32.mrf.mxu0
      %v5332 = vpop.f32.mrf.mxu0
      %v5333 = vadd.f32 %v5141, %v5332
      %v5334 = vpop.f32.mrf.mxu0
      %5335 = vmatprep.mubr.bf16.mxu0 0
      %5336 = vmatmul.mubr.bf16.gmra.mxu0 %v5118
      %v5337 = vpop.f32.mrf.mxu0
      %v5338 = vadd.f32 %v5141, %v5337
      %v5339 = vpop.f32.mrf.mxu0
      %v5340 = vpop.f32.mrf.mxu0
      %v5341 = vadd.f32 %v5141, %v5340
      %v5342 = vpop.f32.mrf.mxu0
      %5343 = vmatprep.mubr.bf16.mxu0 0
      %5344 = vmatmul.mubr.bf16.gmra.mxu0 %v5119
      %v5345 = vpop.f32.mrf.mxu0
      %v5346 = vadd.f32 %v5141, %v5345
      %v5347 = vpop.f32.mrf.mxu0
      %v5348 = vpop.f32.mrf.mxu0
      %v5349 = vadd.f32 %v5141, %v5348
      %v5350 = vpop.f32.mrf.mxu0
      %5351 = vdwg.mxu0
      %5352 = vst [vmem:[%s609] sm:$0xff] %v5226
      %5353 = vst [vmem:[%s609 + $0x8] sm:$0xff] %v5229
      %5354 = vst [vmem:[%s609 + $0x10] sm:$0xff] %v5234
      %5355 = vst [vmem:[%s609 + $0x18] sm:$0xff] %v5237
      %5356 = vst [vmem:[%s609 + $0x20] sm:$0xff] %v5242
      %5357 = vst [vmem:[%s609 + $0x28] sm:$0xff] %v5245
      %5358 = vst [vmem:[%s609 + $0x30] sm:$0xff] %v5250
      %5359 = vst [vmem:[%s609 + $0x38] sm:$0xff] %v5253
      %5360 = vst [vmem:[%s609 + $0x40] sm:$0xff] %v5258
      %5361 = vst [vmem:[%s609 + $0x48] sm:$0xff] %v5261
      %5362 = vst [vmem:[%s609 + $0x50] sm:$0xff] %v5266
      %5363 = vst [vmem:[%s609 + $0x58] sm:$0xff] %v5269
      %5364 = vst [vmem:[%s609 + $0x60] sm:$0xff] %v5274
      %5365 = vst [vmem:[%s609 + $0x68] sm:$0xff] %v5277
      %5366 = vst [vmem:[%s609 + $0x70] sm:$0xff] %v5282
      %5367 = vst [vmem:[%s609 + $0x78] sm:$0xff] %v5285
      %5368 = vst [vmem:[%s609 + $0x80] sm:$0xff] %v5290
      %5369 = vst [vmem:[%s609 + $0x88] sm:$0xff] %v5293
      %5370 = vst [vmem:[%s609 + $0x90] sm:$0xff] %v5298
      %5371 = vst [vmem:[%s609 + $0x98] sm:$0xff] %v5301
      %5372 = vst [vmem:[%s609 + $0xa0] sm:$0xff] %v5306
      %5373 = vst [vmem:[%s609 + $0xa8] sm:$0xff] %v5309
      %5374 = vst [vmem:[%s609 + $0xb0] sm:$0xff] %v5314
      %5375 = vst [vmem:[%s609 + $0xb8] sm:$0xff] %v5317
      %5376 = vst [vmem:[%s609 + $0xc0] sm:$0xff] %v5322
      %5377 = vst [vmem:[%s609 + $0xc8] sm:$0xff] %v5325
      %5378 = vst [vmem:[%s609 + $0xd0] sm:$0xff] %v5330
      %5379 = vst [vmem:[%s609 + $0xd8] sm:$0xff] %v5333
      %5380 = vst [vmem:[%s609 + $0xe0] sm:$0xff] %v5338
      %5381 = vst [vmem:[%s609 + $0xe8] sm:$0xff] %v5341
      %5382 = vst [vmem:[%s609 + $0xf0] sm:$0xff] %v5346
      %5383 = vst [vmem:[%s609 + $0xf8] sm:$0xff] %v5349
      %s5384 = smul.u32 16, %s30
      %p5385 = scmp.lt.s32.totalorder %s5384, 31
      %s5386 = scalar_select %p5385, %s5384, 31
      %s5387 = smul.addr %s5386, 2
      %s5388 = smul.addr %s5387, 8
      %s5389 = scalar_lea.vmem %s19, %s5388
      // Predicated region
      $region97: #{model_parallel_hyena_glt_forward.1} parent=95 // pred_check
        %p5390 = pneg %p452
      $region98: #{model_parallel_hyena_glt_forward.1} parent=95 // pred_check_branch
        %5392 = sbr.rel (%p5390) target = $region100
      $region99: #{model_parallel_hyena_glt_forward.1} parent=95 // pred_region
        %s5393 = smul.u32 16, %s30
      $region100: #{model_parallel_hyena_glt_forward.1} parent=95 // pred_fallthru
        _
    $region96: #{model_parallel_hyena_glt_forward.1} parent=5 // pred_fallthru
      _
    %p5394 = scmp.le.s32.totalorder 2, %s25
    // Predicated region
    $region101: #{model_parallel_hyena_glt_forward.1} parent=5 // pred_check
      %p5395 = pneg %p5394
    $region102: #{model_parallel_hyena_glt_forward.1} parent=5 // pred_check_branch
      %5397 = sbr.rel (%p5395) target = $region104
    $region103: #{model_parallel_hyena_glt_forward.1} parent=5 // pred_region
      %s5398 = ssub.s32 %s25, 2
      // Predicated region
      $region105: #{model_parallel_hyena_glt_forward.1} parent=103 // pred_check
        %p5399 = pneg %p458
      $region106: #{model_parallel_hyena_glt_forward.1} parent=103 // pred_check_branch
        %5401 = sbr.rel (%p5399) target = $region108
      $region107: #{model_parallel_hyena_glt_forward.1} parent=103 // pred_region
        %s5402 = smul.u32 16, %s31
        %p5403 = scmp.lt.s32.totalorder %s5402, 31
        %s5404 = scalar_select %p5403, %s5402, 31
        %s5405 = smul.addr %s5404, 2
        %s5406 = smul.addr %s5405, 8
        %s5407 = scalar_lea.vmem %s19, %s5406
      $region108: #{model_parallel_hyena_glt_forward.1} parent=103 // pred_fallthru
        _
    $region104: #{model_parallel_hyena_glt_forward.1} parent=5 // pred_fallthru
      _
  $region6: #{model_parallel_hyena_glt_forward.1} parent=0 // loop_footer
    %s29 = sadd.s32 1, %s25
  $region7: #{model_parallel_hyena_glt_forward.1} parent=0 // loop_footer_branch
    %24 = sbr.rel target = $region3
  $region8: #{model_parallel_hyena_glt_forward.1} parent=0 // loop_exit
    _

</llo_original>
